<compile_context>
chip_gen: v6e
topology: v6e:2x2x1
jax: 0.10.0
libtpu: 0.0.40
codegen_flags: <defaults>
</compile_context>

<pallas_src>
import math

import jax
import jax.numpy as jnp
from jax.experimental import pallas as pl
from jax.experimental.pallas import tpu as pltpu

# ----------------------- synthetic BERT config --------------------------------
VOCAB = 128       # bert.config.vocab_size
HIDDEN = 32       # bert.config.hidden_size
LAYERS = 2
HEADS = 2
HEAD_DIM = HIDDEN // HEADS
INTER = 64        # intermediate (FFN) size
MAX_POS = 32
LN_EPS = 1e-12

PARAM_KEYS = (
    "word_emb", "pos_emb", "type_emb", "emb_ln_g", "emb_ln_b",
    "wqkv", "bqkv", "wo", "bo", "ln1_g", "ln1_b",
    "w1", "b1", "w2", "b2", "ln2_g", "ln2_b",
    "cls_w", "cls_b",
)


# ----------------------------- in-kernel helpers -------------------------------
def _mm(a, b):
    # bf16 MXU inputs, f32 accumulation (native bf16 path on v6e/v7x).
    return jnp.dot(a.astype(jnp.bfloat16), b.astype(jnp.bfloat16),
                   preferred_element_type=jnp.float32)


def _layer_norm(x, g, b):
    mu = jnp.mean(x, axis=-1, keepdims=True)
    var = jnp.mean(jnp.square(x - mu), axis=-1, keepdims=True)
    return (x - mu) * jax.lax.rsqrt(var + LN_EPS) * g + b


def _gelu(x):
    # TODO(synk): PyTorch nn.GELU() defaults to the exact erf form; tanh
    # approximation used here (EUP tanh), deviation ~1e-3.
    c = math.sqrt(2.0 / math.pi)
    return 0.5 * x * (1.0 + jnp.tanh(c * (x + 0.044715 * x * x * x)))


def _encode(ids_ref, mask_ref, p):
    """Fused BERT encoder; returns (T, HIDDEN) f32 activations (a value)."""
    B, S = mask_ref.shape
    T = B * S

    # ---- embeddings: one-hot gather on the MXU ----
    ids = ids_ref[...]                                           # (T, 1) int32
    vocab_iota = jax.lax.broadcasted_iota(jnp.int32, (T, VOCAB), 1)
    onehot = (ids == vocab_iota).astype(jnp.float32)             # (T, V)
    x = _mm(onehot, p["word_emb"][...])                          # (T, H)
    pos = p["pos_emb"][0:S, :]                                   # (S, H)
    x = (x.reshape(B, S, HIDDEN) + pos[None, :, :]).reshape(T, HIDDEN)
    # TODO(synk): token_type_ids hard-coded to 0 (matches reference usage).
    x = x + p["type_emb"][0:1, :]
    x = _layer_norm(x, p["emb_ln_g"][...], p["emb_ln_b"][...])

    add_mask = (1.0 - mask_ref[...].astype(jnp.float32)) * -1e9  # (B, S)
    scale = 1.0 / math.sqrt(HEAD_DIM)

    for l in range(LAYERS):
        # fused QKV projection: (T, H) @ (H, 3H)
        qkv = _mm(x, p["wqkv"][l]) + p["bqkv"][l]                # (T, 3H)
        ctx_heads = []
        for h in range(HEADS):
            o = h * HEAD_DIM
            qh = qkv[:, o:o + HEAD_DIM].reshape(B, S, HEAD_DIM)
            kh = qkv[:, HIDDEN + o:HIDDEN + o + HEAD_DIM].reshape(B, S, HEAD_DIM)
            vh = qkv[:, 2 * HIDDEN + o:2 * HIDDEN + o + HEAD_DIM].reshape(
                B, S, HEAD_DIM)
            s = jnp.einsum("bqd,bkd->bqk", qh, kh,
                           preferred_element_type=jnp.float32) * scale
            s = s + add_mask[:, None, :]                         # (B, S, S)
            m = jnp.max(s, axis=-1, keepdims=True)
            e = jnp.exp(s - m)
            attn = e / jnp.sum(e, axis=-1, keepdims=True)
            ctx_heads.append(
                jnp.einsum("bqk,bkd->bqd", attn, vh,
                           preferred_element_type=jnp.float32))
        ctx = jnp.concatenate(ctx_heads, axis=-1).reshape(T, HIDDEN)

        attn_out = _mm(ctx, p["wo"][l]) + p["bo"][l]
        x = _layer_norm(attn_out + x, p["ln1_g"][l], p["ln1_b"][l])

        hmid = _gelu(_mm(x, p["w1"][l]) + p["b1"][l])
        ffn_out = _mm(hmid, p["w2"][l]) + p["b2"][l]
        x = _layer_norm(ffn_out + x, p["ln2_g"][l], p["ln2_b"][l])
    return x


# ------------------------------ fused kernels ----------------------------------
def _train_kernel(*refs):
    ids_ref, mask_ref, y_ref, lmi_ref = refs[0:4]
    p = dict(zip(PARAM_KEYS, refs[4:4 + len(PARAM_KEYS)]))
    loss_ref = refs[-1]                                          # (1,1) SMEM

    B, S = mask_ref.shape
    T = B * S

    x = _encode(ids_ref, mask_ref, p)                            # (T, H)
    # TODO(synk): nn.Dropout(p=0.1) treated as identity (eval-mode semantics).
    logits = _mm(x, p["cls_w"][...]) + p["cls_b"][...]           # (T, V)

    # per-token NLL: logsumexp(z) - z[label] (label gather via lane iota)
    m = jnp.max(logits, axis=-1, keepdims=True)
    lse = jnp.log(jnp.sum(jnp.exp(logits - m), axis=-1, keepdims=True)) + m
    col = jax.lax.broadcasted_iota(jnp.int32, (T, VOCAB), 1)
    tgt = jnp.sum(jnp.where(col == y_ref[...], logits, 0.0),
                  axis=-1, keepdims=True)                        # (T, 1)
    nll = lse - tgt                                              # (T, 1)

    # loss-mask weights from loss_mask_index (SMEM scalars)
    pos = jax.lax.broadcasted_iota(jnp.int32, (S, 1), 0)
    w = jnp.concatenate(
        [(pos >= lmi_ref[b]).astype(jnp.float32) for b in range(B)], axis=0)

    loss_ref[0, 0] = jnp.sum(nll * w) / jnp.sum(w)


def _infer_kernel(*refs):
    ids_ref, mask_ref = refs[0:2]
    p = dict(zip(PARAM_KEYS, refs[2:2 + len(PARAM_KEYS)]))
    probs_ref = refs[-1]                                         # (1, V)

    B, S = mask_ref.shape
    x = _encode(ids_ref, mask_ref, p)                            # (T, H)
    # TODO(synk): nn.Dropout(p=0.1) treated as identity (eval-mode semantics).
    last = x[S - 1:S, :]                                         # batch 0, last pos
    logits = _mm(last, p["cls_w"][...]) + p["cls_b"][...]        # (1, V)
    m = jnp.max(logits, axis=-1, keepdims=True)
    e = jnp.exp(logits - m)
    probs_ref[...] = e / jnp.sum(e, axis=-1, keepdims=True)


# ------------------------------ wrappers ----------------------------------------
def _vmem_spec():
    return pl.BlockSpec(memory_space=pltpu.MemorySpace.VMEM)


def _smem_spec():
    return pl.BlockSpec(memory_space=pltpu.MemorySpace.SMEM)


def language_model_forward(params, ids, y=None, mask=None, loss_mask_index=None):
    B, S = ids.shape
    if mask is None:
        mask = jnp.ones((B, S), jnp.int32)
    ids2 = ids.reshape(B * S, 1).astype(jnp.int32)
    mask2 = mask.astype(jnp.int32)
    param_list = [params[k] for k in PARAM_KEYS]

    if y is not None:
        y2 = y.reshape(B * S, 1).astype(jnp.int32)
        lmi = loss_mask_index.reshape(B).astype(jnp.int32)
        loss = pl.pallas_call(
            _train_kernel,
            out_shape=jax.ShapeDtypeStruct((1, 1), jnp.float32),
            in_specs=([_vmem_spec(), _vmem_spec(), _vmem_spec(), _smem_spec()]
                      + [_vmem_spec()] * len(PARAM_KEYS)),
            out_specs=_smem_spec(),
        )(ids2, mask2, y2, lmi, *param_list)
        return loss[0, 0]
    else:
        probs = pl.pallas_call(
            _infer_kernel,
            out_shape=jax.ShapeDtypeStruct((1, VOCAB), jnp.float32),
            in_specs=[_vmem_spec(), _vmem_spec()]
                     + [_vmem_spec()] * len(PARAM_KEYS),
            out_specs=_vmem_spec(),
        )(ids2, mask2, *param_list)
        return probs[0]


# ------------------------------ parameters --------------------------------------
def init_params(key):
    keys = iter(jax.random.split(key, 16))

    def nrm(shape):
        return (0.02 * jax.random.normal(next(keys), shape)).astype(jnp.float32)

    ones_lh = jnp.ones((LAYERS, 1, HIDDEN), jnp.float32)
    zeros_lh = jnp.zeros((LAYERS, 1, HIDDEN), jnp.float32)
    return {
        "word_emb": nrm((VOCAB, HIDDEN)),
        "pos_emb": nrm((MAX_POS, HIDDEN)),
        "type_emb": nrm((2, HIDDEN)),
        "emb_ln_g": jnp.ones((1, HIDDEN), jnp.float32),
        "emb_ln_b": jnp.zeros((1, HIDDEN), jnp.float32),
        "wqkv": nrm((LAYERS, HIDDEN, 3 * HIDDEN)),    # concatenated Q/K/V
        "bqkv": jnp.zeros((LAYERS, 1, 3 * HIDDEN), jnp.float32),
        "wo": nrm((LAYERS, HIDDEN, HIDDEN)),
        "bo": zeros_lh,
        "ln1_g": ones_lh, "ln1_b": zeros_lh,
        "w1": nrm((LAYERS, HIDDEN, INTER)),
        "b1": jnp.zeros((LAYERS, 1, INTER), jnp.float32),
        "w2": nrm((LAYERS, INTER, HIDDEN)),
        "b2": zeros_lh,
        "ln2_g": ones_lh, "ln2_b": zeros_lh,
        "cls_w": nrm((HIDDEN, VOCAB)),
        "cls_b": jnp.zeros((1, VOCAB), jnp.float32),
    }


# ----------------------------------- main ----------------------------------------
if __name__ == "__main__":
    key = jax.random.PRNGKey(0)
    pkey, ikey, ykey = jax.random.split(key, 3)

    params = init_params(pkey)

    B, S = 2, 8
    ids = jax.random.randint(ikey, (B, S), 0, VOCAB, dtype=jnp.int32)
    attn_mask = jnp.ones((B, S), jnp.int32)
    y = jax.random.randint(ykey, (B, S), 0, VOCAB, dtype=jnp.int32)
    loss_mask_index = jnp.array([[3], [2]], jnp.int32)

    probs = language_model_forward(params, ids, mask=attn_mask)            # inference path
    loss = language_model_forward(
        params, ids, y=y, mask=attn_mask, loss_mask_index=loss_mask_index
    )                                                                      # training-loss path

    jax.block_until_ready((probs, loss))
    assert probs.shape == (VOCAB,)
    assert bool(jnp.isfinite(loss)) and abs(float(jnp.sum(probs)) - 1.0) < 1e-3
    print("KERNEL_OK")
</pallas_src>

<mosaic_0001>
module attributes {stable_mosaic.version = 11 : i64} {
  func.func @_infer_kernel(%arg0: memref<16x1xi32, #tpu.memory_space<vmem>>, %arg1: memref<2x8xi32, #tpu.memory_space<vmem>>, %arg2: memref<128x32xf32, #tpu.memory_space<vmem>>, %arg3: memref<32x32xf32, #tpu.memory_space<vmem>>, %arg4: memref<2x32xf32, #tpu.memory_space<vmem>>, %arg5: memref<1x32xf32, #tpu.memory_space<vmem>>, %arg6: memref<1x32xf32, #tpu.memory_space<vmem>>, %arg7: memref<2x32x96xf32, #tpu.memory_space<vmem>>, %arg8: memref<2x1x96xf32, #tpu.memory_space<vmem>>, %arg9: memref<2x32x32xf32, #tpu.memory_space<vmem>>, %arg10: memref<2x1x32xf32, #tpu.memory_space<vmem>>, %arg11: memref<2x1x32xf32, #tpu.memory_space<vmem>>, %arg12: memref<2x1x32xf32, #tpu.memory_space<vmem>>, %arg13: memref<2x32x64xf32, #tpu.memory_space<vmem>>, %arg14: memref<2x1x64xf32, #tpu.memory_space<vmem>>, %arg15: memref<2x64x32xf32, #tpu.memory_space<vmem>>, %arg16: memref<2x1x32xf32, #tpu.memory_space<vmem>>, %arg17: memref<2x1x32xf32, #tpu.memory_space<vmem>>, %arg18: memref<2x1x32xf32, #tpu.memory_space<vmem>>, %arg19: memref<32x128xf32, #tpu.memory_space<vmem>>, %arg20: memref<1x128xf32, #tpu.memory_space<vmem>>, %arg21: memref<1x128xf32, #tpu.memory_space<vmem>>) attributes {dimension_semantics = [], scalar_prefetch = 0 : i64, scratch_operands = 0 : i64, tpu.core_type = #tpu.core_type<tc>} {
    %c0 = arith.constant 0 : index
    %c0_0 = arith.constant 0 : index
    %0 = vector.load %arg0[%c0, %c0_0] : memref<16x1xi32, #tpu.memory_space<vmem>>, vector<16x1xi32>
    %1 = tpu.iota {dimensions = array<i32: 1>} : vector<16x128xi32>
    %2 = vector.broadcast %0 : vector<16x1xi32> to vector<16x128xi32>
    %3 = arith.cmpi eq, %2, %1 : vector<16x128xi32>
    %4 = arith.extui %3 : vector<16x128xi1> to vector<16x128xi32>
    %5 = arith.sitofp %4 : vector<16x128xi32> to vector<16x128xf32>
    %c0_1 = arith.constant 0 : index
    %c0_2 = arith.constant 0 : index
    %6 = vector.load %arg2[%c0_1, %c0_2] : memref<128x32xf32, #tpu.memory_space<vmem>>, vector<128x32xf32>
    %7 = arith.truncf %5 : vector<16x128xf32> to vector<16x128xbf16>
    %8 = arith.truncf %6 : vector<128x32xf32> to vector<128x32xbf16>
    %cst = arith.constant dense<0.000000e+00> : vector<16x32xf32>
    %9 = tpu.matmul %7, %8, %cst {dimension_numbers = #tpu.dot_dimension_numbers<[1], [0], [0], [1], [0, 0, 1, 1], [], []>} : vector<16x128xbf16>, vector<128x32xbf16>, vector<16x32xf32> -> vector<16x32xf32>
    %c0_3 = arith.constant 0 : index
    %c0_4 = arith.constant 0 : index
    %10 = vector.load %arg3[%c0_3, %c0_4] : memref<32x32xf32, #tpu.memory_space<vmem>>, vector<8x32xf32>
    %11 = vector.shape_cast %9 : vector<16x32xf32> to vector<2x8x32xf32>
    %12 = vector.shape_cast %10 : vector<8x32xf32> to vector<1x8x32xf32>
    %13 = vector.broadcast %12 : vector<1x8x32xf32> to vector<2x8x32xf32>
    %14 = arith.addf %11, %13 : vector<2x8x32xf32>
    %15 = vector.shape_cast %14 : vector<2x8x32xf32> to vector<16x32xf32>
    %c0_5 = arith.constant 0 : index
    %c0_6 = arith.constant 0 : index
    %16 = vector.load %arg4[%c0_5, %c0_6] : memref<2x32xf32, #tpu.memory_space<vmem>>, vector<1x32xf32>
    %17 = vector.broadcast %16 : vector<1x32xf32> to vector<16x32xf32>
    %18 = arith.addf %15, %17 : vector<16x32xf32>
    %c0_7 = arith.constant 0 : index
    %c0_8 = arith.constant 0 : index
    %19 = vector.load %arg5[%c0_7, %c0_8] : memref<1x32xf32, #tpu.memory_space<vmem>>, vector<1x32xf32>
    %c0_9 = arith.constant 0 : index
    %c0_10 = arith.constant 0 : index
    %20 = vector.load %arg6[%c0_9, %c0_10] : memref<1x32xf32, #tpu.memory_space<vmem>>, vector<1x32xf32>
    %cst_11 = arith.constant dense<0.000000e+00> : vector<16xf32>
    %21 = vector.multi_reduction <add>, %18, %cst_11 [1] : vector<16x32xf32> to vector<16xf32>
    %22 = vector.shape_cast %21 : vector<16xf32> to vector<16x1xf32>
    %cst_12 = arith.constant 3.200000e+01 : f32
    %23 = vector.broadcast %cst_12 : f32 to vector<16x1xf32>
    %24 = arith.divf %22, %23 : vector<16x1xf32>
    %25 = vector.broadcast %24 : vector<16x1xf32> to vector<16x32xf32>
    %26 = arith.subf %18, %25 : vector<16x32xf32>
    %27 = arith.mulf %26, %26 : vector<16x32xf32>
    %cst_13 = arith.constant dense<0.000000e+00> : vector<16xf32>
    %28 = vector.multi_reduction <add>, %27, %cst_13 [1] : vector<16x32xf32> to vector<16xf32>
    %29 = vector.shape_cast %28 : vector<16xf32> to vector<16x1xf32>
    %cst_14 = arith.constant 3.200000e+01 : f32
    %30 = vector.broadcast %cst_14 : f32 to vector<16x1xf32>
    %31 = arith.divf %29, %30 : vector<16x1xf32>
    %32 = vector.broadcast %24 : vector<16x1xf32> to vector<16x32xf32>
    %33 = arith.subf %18, %32 : vector<16x32xf32>
    %cst_15 = arith.constant 9.99999996E-13 : f32
    %34 = vector.broadcast %cst_15 : f32 to vector<16x1xf32>
    %35 = arith.addf %31, %34 : vector<16x1xf32>
    %36 = math.rsqrt %35 : vector<16x1xf32>
    %37 = vector.broadcast %36 : vector<16x1xf32> to vector<16x32xf32>
    %38 = arith.mulf %33, %37 : vector<16x32xf32>
    %39 = vector.broadcast %19 : vector<1x32xf32> to vector<16x32xf32>
    %40 = arith.mulf %38, %39 : vector<16x32xf32>
    %41 = vector.broadcast %20 : vector<1x32xf32> to vector<16x32xf32>
    %42 = arith.addf %40, %41 : vector<16x32xf32>
    %c0_16 = arith.constant 0 : index
    %c0_17 = arith.constant 0 : index
    %43 = vector.load %arg1[%c0_16, %c0_17] : memref<2x8xi32, #tpu.memory_space<vmem>>, vector<2x8xi32>
    %44 = arith.sitofp %43 : vector<2x8xi32> to vector<2x8xf32>
    %cst_18 = arith.constant 1.000000e+00 : f32
    %45 = vector.broadcast %cst_18 : f32 to vector<2x8xf32>
    %46 = arith.subf %45, %44 : vector<2x8xf32>
    %cst_19 = arith.constant -1.000000e+09 : f32
    %47 = vector.broadcast %cst_19 : f32 to vector<2x8xf32>
    %48 = arith.mulf %46, %47 : vector<2x8xf32>
    %c0_20 = arith.constant 0 : index
    %c0_21 = arith.constant 0 : index
    %c0_22 = arith.constant 0 : index
    %49 = vector.load %arg7[%c0_20, %c0_21, %c0_22] : memref<2x32x96xf32, #tpu.memory_space<vmem>>, vector<1x32x96xf32>
    %50 = vector.shape_cast %49 : vector<1x32x96xf32> to vector<32x96xf32>
    %51 = arith.truncf %42 : vector<16x32xf32> to vector<16x32xbf16>
    %52 = arith.truncf %50 : vector<32x96xf32> to vector<32x96xbf16>
    %cst_23 = arith.constant dense<0.000000e+00> : vector<16x96xf32>
    %53 = tpu.matmul %51, %52, %cst_23 {dimension_numbers = #tpu.dot_dimension_numbers<[1], [0], [0], [1], [0, 0, 1, 1], [], []>} : vector<16x32xbf16>, vector<32x96xbf16>, vector<16x96xf32> -> vector<16x96xf32>
    %c0_24 = arith.constant 0 : index
    %c0_25 = arith.constant 0 : index
    %c0_26 = arith.constant 0 : index
    %54 = vector.load %arg8[%c0_24, %c0_25, %c0_26] : memref<2x1x96xf32, #tpu.memory_space<vmem>>, vector<1x1x96xf32>
    %55 = vector.shape_cast %54 : vector<1x1x96xf32> to vector<1x96xf32>
    %56 = vector.broadcast %55 : vector<1x96xf32> to vector<16x96xf32>
    %57 = arith.addf %53, %56 : vector<16x96xf32>
    %58 = vector.extract_strided_slice %57 {offsets = [0, 0], sizes = [16, 16], strides = [1, 1]} : vector<16x96xf32> to vector<16x16xf32>
    %59 = vector.shape_cast %58 : vector<16x16xf32> to vector<2x8x16xf32>
    %60 = vector.extract_strided_slice %57 {offsets = [0, 32], sizes = [16, 16], strides = [1, 1]} : vector<16x96xf32> to vector<16x16xf32>
    %61 = vector.shape_cast %60 : vector<16x16xf32> to vector<2x8x16xf32>
    %62 = vector.extract_strided_slice %57 {offsets = [0, 64], sizes = [16, 16], strides = [1, 1]} : vector<16x96xf32> to vector<16x16xf32>
    %63 = vector.shape_cast %62 : vector<16x16xf32> to vector<2x8x16xf32>
    "tpu.trace_start"() <{level = 10 : i32, message = "bqd,bkd->bqk"}> : () -> ()
    %cst_27 = arith.constant dense<0.000000e+00> : vector<2x8x8xf32>
    %64 = tpu.matmul %59, %61, %cst_27 {dimension_numbers = #tpu.dot_dimension_numbers<[2], [2], [1], [1], [0, 0, 0, 1, 1, 1], [0], [0]>} : vector<2x8x16xf32>, vector<2x8x16xf32>, vector<2x8x8xf32> -> vector<2x8x8xf32>
    "tpu.trace_stop"() : () -> ()
    %cst_28 = arith.constant 2.500000e-01 : f32
    %65 = vector.broadcast %cst_28 : f32 to vector<2x8x8xf32>
    %66 = arith.mulf %64, %65 : vector<2x8x8xf32>
    %67 = vector.shape_cast %48 : vector<2x8xf32> to vector<2x1x8xf32>
    %68 = vector.broadcast %67 : vector<2x1x8xf32> to vector<2x8x8xf32>
    %69 = arith.addf %66, %68 : vector<2x8x8xf32>
    %cst_29 = arith.constant dense<0xFF800000> : vector<2x8xf32>
    %70 = vector.multi_reduction <maximumf>, %69, %cst_29 [2] : vector<2x8x8xf32> to vector<2x8xf32>
    %71 = vector.shape_cast %70 : vector<2x8xf32> to vector<2x8x1xf32>
    %72 = vector.broadcast %71 : vector<2x8x1xf32> to vector<2x8x8xf32>
    %73 = arith.subf %69, %72 : vector<2x8x8xf32>
    %74 = math.exp %73 : vector<2x8x8xf32>
    %cst_30 = arith.constant dense<0.000000e+00> : vector<2x8xf32>
    %75 = vector.multi_reduction <add>, %74, %cst_30 [2] : vector<2x8x8xf32> to vector<2x8xf32>
    %76 = vector.shape_cast %75 : vector<2x8xf32> to vector<2x8x1xf32>
    %77 = vector.broadcast %76 : vector<2x8x1xf32> to vector<2x8x8xf32>
    %78 = arith.divf %74, %77 : vector<2x8x8xf32>
    "tpu.trace_start"() <{level = 10 : i32, message = "bqk,bkd->bqd"}> : () -> ()
    %cst_31 = arith.constant dense<0.000000e+00> : vector<2x8x16xf32>
    %79 = tpu.matmul %78, %63, %cst_31 {dimension_numbers = #tpu.dot_dimension_numbers<[2], [1], [1], [2], [0, 0, 0, 1, 1, 2], [0], [0]>} : vector<2x8x8xf32>, vector<2x8x16xf32>, vector<2x8x16xf32> -> vector<2x8x16xf32>
    "tpu.trace_stop"() : () -> ()
    %80 = vector.extract_strided_slice %57 {offsets = [0, 16], sizes = [16, 16], strides = [1, 1]} : vector<16x96xf32> to vector<16x16xf32>
    %81 = vector.shape_cast %80 : vector<16x16xf32> to vector<2x8x16xf32>
    %82 = vector.extract_strided_slice %57 {offsets = [0, 48], sizes = [16, 16], strides = [1, 1]} : vector<16x96xf32> to vector<16x16xf32>
    %83 = vector.shape_cast %82 : vector<16x16xf32> to vector<2x8x16xf32>
    %84 = vector.extract_strided_slice %57 {offsets = [0, 80], sizes = [16, 16], strides = [1, 1]} : vector<16x96xf32> to vector<16x16xf32>
    %85 = vector.shape_cast %84 : vector<16x16xf32> to vector<2x8x16xf32>
    "tpu.trace_start"() <{level = 10 : i32, message = "bqd,bkd->bqk"}> : () -> ()
    %cst_32 = arith.constant dense<0.000000e+00> : vector<2x8x8xf32>
    %86 = tpu.matmul %81, %83, %cst_32 {dimension_numbers = #tpu.dot_dimension_numbers<[2], [2], [1], [1], [0, 0, 0, 1, 1, 1], [0], [0]>} : vector<2x8x16xf32>, vector<2x8x16xf32>, vector<2x8x8xf32> -> vector<2x8x8xf32>
    "tpu.trace_stop"() : () -> ()
    %cst_33 = arith.constant 2.500000e-01 : f32
    %87 = vector.broadcast %cst_33 : f32 to vector<2x8x8xf32>
    %88 = arith.mulf %86, %87 : vector<2x8x8xf32>
    %89 = vector.shape_cast %48 : vector<2x8xf32> to vector<2x1x8xf32>
    %90 = vector.broadcast %89 : vector<2x1x8xf32> to vector<2x8x8xf32>
    %91 = arith.addf %88, %90 : vector<2x8x8xf32>
    %cst_34 = arith.constant dense<0xFF800000> : vector<2x8xf32>
    %92 = vector.multi_reduction <maximumf>, %91, %cst_34 [2] : vector<2x8x8xf32> to vector<2x8xf32>
    %93 = vector.shape_cast %92 : vector<2x8xf32> to vector<2x8x1xf32>
    %94 = vector.broadcast %93 : vector<2x8x1xf32> to vector<2x8x8xf32>
    %95 = arith.subf %91, %94 : vector<2x8x8xf32>
    %96 = math.exp %95 : vector<2x8x8xf32>
    %cst_35 = arith.constant dense<0.000000e+00> : vector<2x8xf32>
    %97 = vector.multi_reduction <add>, %96, %cst_35 [2] : vector<2x8x8xf32> to vector<2x8xf32>
    %98 = vector.shape_cast %97 : vector<2x8xf32> to vector<2x8x1xf32>
    %99 = vector.broadcast %98 : vector<2x8x1xf32> to vector<2x8x8xf32>
    %100 = arith.divf %96, %99 : vector<2x8x8xf32>
    "tpu.trace_start"() <{level = 10 : i32, message = "bqk,bkd->bqd"}> : () -> ()
    %cst_36 = arith.constant dense<0.000000e+00> : vector<2x8x16xf32>
    %101 = tpu.matmul %100, %85, %cst_36 {dimension_numbers = #tpu.dot_dimension_numbers<[2], [1], [1], [2], [0, 0, 0, 1, 1, 2], [0], [0]>} : vector<2x8x8xf32>, vector<2x8x16xf32>, vector<2x8x16xf32> -> vector<2x8x16xf32>
    "tpu.trace_stop"() : () -> ()
    %102 = tpu.concatenate %79, %101 in 2 : vector<2x8x16xf32>, vector<2x8x16xf32> -> vector<2x8x32xf32>
    %103 = vector.shape_cast %102 : vector<2x8x32xf32> to vector<16x32xf32>
    %c0_37 = arith.constant 0 : index
    %c0_38 = arith.constant 0 : index
    %c0_39 = arith.constant 0 : index
    %104 = vector.load %arg9[%c0_37, %c0_38, %c0_39] : memref<2x32x32xf32, #tpu.memory_space<vmem>>, vector<1x32x32xf32>
    %105 = vector.shape_cast %104 : vector<1x32x32xf32> to vector<32x32xf32>
    %106 = arith.truncf %103 : vector<16x32xf32> to vector<16x32xbf16>
    %107 = arith.truncf %105 : vector<32x32xf32> to vector<32x32xbf16>
    %cst_40 = arith.constant dense<0.000000e+00> : vector<16x32xf32>
    %108 = tpu.matmul %106, %107, %cst_40 {dimension_numbers = #tpu.dot_dimension_numbers<[1], [0], [0], [1], [0, 0, 1, 1], [], []>} : vector<16x32xbf16>, vector<32x32xbf16>, vector<16x32xf32> -> vector<16x32xf32>
    %c0_41 = arith.constant 0 : index
    %c0_42 = arith.constant 0 : index
    %c0_43 = arith.constant 0 : index
    %109 = vector.load %arg10[%c0_41, %c0_42, %c0_43] : memref<2x1x32xf32, #tpu.memory_space<vmem>>, vector<1x1x32xf32>
    %110 = vector.shape_cast %109 : vector<1x1x32xf32> to vector<1x32xf32>
    %111 = vector.broadcast %110 : vector<1x32xf32> to vector<16x32xf32>
    %112 = arith.addf %108, %111 : vector<16x32xf32>
    %113 = arith.addf %112, %42 : vector<16x32xf32>
    %c0_44 = arith.constant 0 : index
    %c0_45 = arith.constant 0 : index
    %c0_46 = arith.constant 0 : index
    %114 = vector.load %arg11[%c0_44, %c0_45, %c0_46] : memref<2x1x32xf32, #tpu.memory_space<vmem>>, vector<1x1x32xf32>
    %115 = vector.shape_cast %114 : vector<1x1x32xf32> to vector<1x32xf32>
    %c0_47 = arith.constant 0 : index
    %c0_48 = arith.constant 0 : index
    %c0_49 = arith.constant 0 : index
    %116 = vector.load %arg12[%c0_47, %c0_48, %c0_49] : memref<2x1x32xf32, #tpu.memory_space<vmem>>, vector<1x1x32xf32>
    %117 = vector.shape_cast %116 : vector<1x1x32xf32> to vector<1x32xf32>
    %cst_50 = arith.constant dense<0.000000e+00> : vector<16xf32>
    %118 = vector.multi_reduction <add>, %113, %cst_50 [1] : vector<16x32xf32> to vector<16xf32>
    %119 = vector.shape_cast %118 : vector<16xf32> to vector<16x1xf32>
    %cst_51 = arith.constant 3.200000e+01 : f32
    %120 = vector.broadcast %cst_51 : f32 to vector<16x1xf32>
    %121 = arith.divf %119, %120 : vector<16x1xf32>
    %122 = vector.broadcast %121 : vector<16x1xf32> to vector<16x32xf32>
    %123 = arith.subf %113, %122 : vector<16x32xf32>
    %124 = arith.mulf %123, %123 : vector<16x32xf32>
    %cst_52 = arith.constant dense<0.000000e+00> : vector<16xf32>
    %125 = vector.multi_reduction <add>, %124, %cst_52 [1] : vector<16x32xf32> to vector<16xf32>
    %126 = vector.shape_cast %125 : vector<16xf32> to vector<16x1xf32>
    %cst_53 = arith.constant 3.200000e+01 : f32
    %127 = vector.broadcast %cst_53 : f32 to vector<16x1xf32>
    %128 = arith.divf %126, %127 : vector<16x1xf32>
    %129 = vector.broadcast %121 : vector<16x1xf32> to vector<16x32xf32>
    %130 = arith.subf %113, %129 : vector<16x32xf32>
    %cst_54 = arith.constant 9.99999996E-13 : f32
    %131 = vector.broadcast %cst_54 : f32 to vector<16x1xf32>
    %132 = arith.addf %128, %131 : vector<16x1xf32>
    %133 = math.rsqrt %132 : vector<16x1xf32>
    %134 = vector.broadcast %133 : vector<16x1xf32> to vector<16x32xf32>
    %135 = arith.mulf %130, %134 : vector<16x32xf32>
    %136 = vector.broadcast %115 : vector<1x32xf32> to vector<16x32xf32>
    %137 = arith.mulf %135, %136 : vector<16x32xf32>
    %138 = vector.broadcast %117 : vector<1x32xf32> to vector<16x32xf32>
    %139 = arith.addf %137, %138 : vector<16x32xf32>
    %c0_55 = arith.constant 0 : index
    %c0_56 = arith.constant 0 : index
    %c0_57 = arith.constant 0 : index
    %140 = vector.load %arg13[%c0_55, %c0_56, %c0_57] : memref<2x32x64xf32, #tpu.memory_space<vmem>>, vector<1x32x64xf32>
    %141 = vector.shape_cast %140 : vector<1x32x64xf32> to vector<32x64xf32>
    %142 = arith.truncf %139 : vector<16x32xf32> to vector<16x32xbf16>
    %143 = arith.truncf %141 : vector<32x64xf32> to vector<32x64xbf16>
    %cst_58 = arith.constant dense<0.000000e+00> : vector<16x64xf32>
    %144 = tpu.matmul %142, %143, %cst_58 {dimension_numbers = #tpu.dot_dimension_numbers<[1], [0], [0], [1], [0, 0, 1, 1], [], []>} : vector<16x32xbf16>, vector<32x64xbf16>, vector<16x64xf32> -> vector<16x64xf32>
    %c0_59 = arith.constant 0 : index
    %c0_60 = arith.constant 0 : index
    %c0_61 = arith.constant 0 : index
    %145 = vector.load %arg14[%c0_59, %c0_60, %c0_61] : memref<2x1x64xf32, #tpu.memory_space<vmem>>, vector<1x1x64xf32>
    %146 = vector.shape_cast %145 : vector<1x1x64xf32> to vector<1x64xf32>
    %147 = vector.broadcast %146 : vector<1x64xf32> to vector<16x64xf32>
    %148 = arith.addf %144, %147 : vector<16x64xf32>
    %cst_62 = arith.constant 5.000000e-01 : f32
    %149 = vector.broadcast %cst_62 : f32 to vector<16x64xf32>
    %150 = arith.mulf %149, %148 : vector<16x64xf32>
    %cst_63 = arith.constant 4.471500e-02 : f32
    %151 = vector.broadcast %cst_63 : f32 to vector<16x64xf32>
    %152 = arith.mulf %151, %148 : vector<16x64xf32>
    %153 = arith.mulf %152, %148 : vector<16x64xf32>
    %154 = arith.mulf %153, %148 : vector<16x64xf32>
    %155 = arith.addf %148, %154 : vector<16x64xf32>
    %cst_64 = arith.constant 0.797884583 : f32
    %156 = vector.broadcast %cst_64 : f32 to vector<16x64xf32>
    %157 = arith.mulf %156, %155 : vector<16x64xf32>
    %158 = math.tanh %157 : vector<16x64xf32>
    %cst_65 = arith.constant 1.000000e+00 : f32
    %159 = vector.broadcast %cst_65 : f32 to vector<16x64xf32>
    %160 = arith.addf %159, %158 : vector<16x64xf32>
    %161 = arith.mulf %150, %160 : vector<16x64xf32>
    %c0_66 = arith.constant 0 : index
    %c0_67 = arith.constant 0 : index
    %c0_68 = arith.constant 0 : index
    %162 = vector.load %arg15[%c0_66, %c0_67, %c0_68] : memref<2x64x32xf32, #tpu.memory_space<vmem>>, vector<1x64x32xf32>
    %163 = vector.shape_cast %162 : vector<1x64x32xf32> to vector<64x32xf32>
    %164 = arith.truncf %161 : vector<16x64xf32> to vector<16x64xbf16>
    %165 = arith.truncf %163 : vector<64x32xf32> to vector<64x32xbf16>
    %cst_69 = arith.constant dense<0.000000e+00> : vector<16x32xf32>
    %166 = tpu.matmul %164, %165, %cst_69 {dimension_numbers = #tpu.dot_dimension_numbers<[1], [0], [0], [1], [0, 0, 1, 1], [], []>} : vector<16x64xbf16>, vector<64x32xbf16>, vector<16x32xf32> -> vector<16x32xf32>
    %c0_70 = arith.constant 0 : index
    %c0_71 = arith.constant 0 : index
    %c0_72 = arith.constant 0 : index
    %167 = vector.load %arg16[%c0_70, %c0_71, %c0_72] : memref<2x1x32xf32, #tpu.memory_space<vmem>>, vector<1x1x32xf32>
    %168 = vector.shape_cast %167 : vector<1x1x32xf32> to vector<1x32xf32>
    %169 = vector.broadcast %168 : vector<1x32xf32> to vector<16x32xf32>
    %170 = arith.addf %166, %169 : vector<16x32xf32>
    %171 = arith.addf %170, %139 : vector<16x32xf32>
    %c0_73 = arith.constant 0 : index
    %c0_74 = arith.constant 0 : index
    %c0_75 = arith.constant 0 : index
    %172 = vector.load %arg17[%c0_73, %c0_74, %c0_75] : memref<2x1x32xf32, #tpu.memory_space<vmem>>, vector<1x1x32xf32>
    %173 = vector.shape_cast %172 : vector<1x1x32xf32> to vector<1x32xf32>
    %c0_76 = arith.constant 0 : index
    %c0_77 = arith.constant 0 : index
    %c0_78 = arith.constant 0 : index
    %174 = vector.load %arg18[%c0_76, %c0_77, %c0_78] : memref<2x1x32xf32, #tpu.memory_space<vmem>>, vector<1x1x32xf32>
    %175 = vector.shape_cast %174 : vector<1x1x32xf32> to vector<1x32xf32>
    %cst_79 = arith.constant dense<0.000000e+00> : vector<16xf32>
    %176 = vector.multi_reduction <add>, %171, %cst_79 [1] : vector<16x32xf32> to vector<16xf32>
    %177 = vector.shape_cast %176 : vector<16xf32> to vector<16x1xf32>
    %cst_80 = arith.constant 3.200000e+01 : f32
    %178 = vector.broadcast %cst_80 : f32 to vector<16x1xf32>
    %179 = arith.divf %177, %178 : vector<16x1xf32>
    %180 = vector.broadcast %179 : vector<16x1xf32> to vector<16x32xf32>
    %181 = arith.subf %171, %180 : vector<16x32xf32>
    %182 = arith.mulf %181, %181 : vector<16x32xf32>
    %cst_81 = arith.constant dense<0.000000e+00> : vector<16xf32>
    %183 = vector.multi_reduction <add>, %182, %cst_81 [1] : vector<16x32xf32> to vector<16xf32>
    %184 = vector.shape_cast %183 : vector<16xf32> to vector<16x1xf32>
    %cst_82 = arith.constant 3.200000e+01 : f32
    %185 = vector.broadcast %cst_82 : f32 to vector<16x1xf32>
    %186 = arith.divf %184, %185 : vector<16x1xf32>
    %187 = vector.broadcast %179 : vector<16x1xf32> to vector<16x32xf32>
    %188 = arith.subf %171, %187 : vector<16x32xf32>
    %cst_83 = arith.constant 9.99999996E-13 : f32
    %189 = vector.broadcast %cst_83 : f32 to vector<16x1xf32>
    %190 = arith.addf %186, %189 : vector<16x1xf32>
    %191 = math.rsqrt %190 : vector<16x1xf32>
    %192 = vector.broadcast %191 : vector<16x1xf32> to vector<16x32xf32>
    %193 = arith.mulf %188, %192 : vector<16x32xf32>
    %194 = vector.broadcast %173 : vector<1x32xf32> to vector<16x32xf32>
    %195 = arith.mulf %193, %194 : vector<16x32xf32>
    %196 = vector.broadcast %175 : vector<1x32xf32> to vector<16x32xf32>
    %197 = arith.addf %195, %196 : vector<16x32xf32>
    %c1 = arith.constant 1 : index
    %c0_84 = arith.constant 0 : index
    %c0_85 = arith.constant 0 : index
    %198 = vector.load %arg7[%c1, %c0_84, %c0_85] : memref<2x32x96xf32, #tpu.memory_space<vmem>>, vector<1x32x96xf32>
    %199 = vector.shape_cast %198 : vector<1x32x96xf32> to vector<32x96xf32>
    %200 = arith.truncf %197 : vector<16x32xf32> to vector<16x32xbf16>
    %201 = arith.truncf %199 : vector<32x96xf32> to vector<32x96xbf16>
    %cst_86 = arith.constant dense<0.000000e+00> : vector<16x96xf32>
    %202 = tpu.matmul %200, %201, %cst_86 {dimension_numbers = #tpu.dot_dimension_numbers<[1], [0], [0], [1], [0, 0, 1, 1], [], []>} : vector<16x32xbf16>, vector<32x96xbf16>, vector<16x96xf32> -> vector<16x96xf32>
    %c1_87 = arith.constant 1 : index
    %c0_88 = arith.constant 0 : index
    %c0_89 = arith.constant 0 : index
    %203 = vector.load %arg8[%c1_87, %c0_88, %c0_89] : memref<2x1x96xf32, #tpu.memory_space<vmem>>, vector<1x1x96xf32>
    %204 = vector.shape_cast %203 : vector<1x1x96xf32> to vector<1x96xf32>
    %205 = vector.broadcast %204 : vector<1x96xf32> to vector<16x96xf32>
    %206 = arith.addf %202, %205 : vector<16x96xf32>
    %207 = vector.extract_strided_slice %206 {offsets = [0, 0], sizes = [16, 16], strides = [1, 1]} : vector<16x96xf32> to vector<16x16xf32>
    %208 = vector.shape_cast %207 : vector<16x16xf32> to vector<2x8x16xf32>
    %209 = vector.extract_strided_slice %206 {offsets = [0, 32], sizes = [16, 16], strides = [1, 1]} : vector<16x96xf32> to vector<16x16xf32>
    %210 = vector.shape_cast %209 : vector<16x16xf32> to vector<2x8x16xf32>
    %211 = vector.extract_strided_slice %206 {offsets = [0, 64], sizes = [16, 16], strides = [1, 1]} : vector<16x96xf32> to vector<16x16xf32>
    %212 = vector.shape_cast %211 : vector<16x16xf32> to vector<2x8x16xf32>
    "tpu.trace_start"() <{level = 10 : i32, message = "bqd,bkd->bqk"}> : () -> ()
    %cst_90 = arith.constant dense<0.000000e+00> : vector<2x8x8xf32>
    %213 = tpu.matmul %208, %210, %cst_90 {dimension_numbers = #tpu.dot_dimension_numbers<[2], [2], [1], [1], [0, 0, 0, 1, 1, 1], [0], [0]>} : vector<2x8x16xf32>, vector<2x8x16xf32>, vector<2x8x8xf32> -> vector<2x8x8xf32>
    "tpu.trace_stop"() : () -> ()
    %cst_91 = arith.constant 2.500000e-01 : f32
    %214 = vector.broadcast %cst_91 : f32 to vector<2x8x8xf32>
    %215 = arith.mulf %213, %214 : vector<2x8x8xf32>
    %216 = vector.shape_cast %48 : vector<2x8xf32> to vector<2x1x8xf32>
    %217 = vector.broadcast %216 : vector<2x1x8xf32> to vector<2x8x8xf32>
    %218 = arith.addf %215, %217 : vector<2x8x8xf32>
    %cst_92 = arith.constant dense<0xFF800000> : vector<2x8xf32>
    %219 = vector.multi_reduction <maximumf>, %218, %cst_92 [2] : vector<2x8x8xf32> to vector<2x8xf32>
    %220 = vector.shape_cast %219 : vector<2x8xf32> to vector<2x8x1xf32>
    %221 = vector.broadcast %220 : vector<2x8x1xf32> to vector<2x8x8xf32>
    %222 = arith.subf %218, %221 : vector<2x8x8xf32>
    %223 = math.exp %222 : vector<2x8x8xf32>
    %cst_93 = arith.constant dense<0.000000e+00> : vector<2x8xf32>
    %224 = vector.multi_reduction <add>, %223, %cst_93 [2] : vector<2x8x8xf32> to vector<2x8xf32>
    %225 = vector.shape_cast %224 : vector<2x8xf32> to vector<2x8x1xf32>
    %226 = vector.broadcast %225 : vector<2x8x1xf32> to vector<2x8x8xf32>
    %227 = arith.divf %223, %226 : vector<2x8x8xf32>
    "tpu.trace_start"() <{level = 10 : i32, message = "bqk,bkd->bqd"}> : () -> ()
    %cst_94 = arith.constant dense<0.000000e+00> : vector<2x8x16xf32>
    %228 = tpu.matmul %227, %212, %cst_94 {dimension_numbers = #tpu.dot_dimension_numbers<[2], [1], [1], [2], [0, 0, 0, 1, 1, 2], [0], [0]>} : vector<2x8x8xf32>, vector<2x8x16xf32>, vector<2x8x16xf32> -> vector<2x8x16xf32>
    "tpu.trace_stop"() : () -> ()
    %229 = vector.extract_strided_slice %206 {offsets = [0, 16], sizes = [16, 16], strides = [1, 1]} : vector<16x96xf32> to vector<16x16xf32>
    %230 = vector.shape_cast %229 : vector<16x16xf32> to vector<2x8x16xf32>
    %231 = vector.extract_strided_slice %206 {offsets = [0, 48], sizes = [16, 16], strides = [1, 1]} : vector<16x96xf32> to vector<16x16xf32>
    %232 = vector.shape_cast %231 : vector<16x16xf32> to vector<2x8x16xf32>
    %233 = vector.extract_strided_slice %206 {offsets = [0, 80], sizes = [16, 16], strides = [1, 1]} : vector<16x96xf32> to vector<16x16xf32>
    %234 = vector.shape_cast %233 : vector<16x16xf32> to vector<2x8x16xf32>
    "tpu.trace_start"() <{level = 10 : i32, message = "bqd,bkd->bqk"}> : () -> ()
    %cst_95 = arith.constant dense<0.000000e+00> : vector<2x8x8xf32>
    %235 = tpu.matmul %230, %232, %cst_95 {dimension_numbers = #tpu.dot_dimension_numbers<[2], [2], [1], [1], [0, 0, 0, 1, 1, 1], [0], [0]>} : vector<2x8x16xf32>, vector<2x8x16xf32>, vector<2x8x8xf32> -> vector<2x8x8xf32>
    "tpu.trace_stop"() : () -> ()
    %cst_96 = arith.constant 2.500000e-01 : f32
    %236 = vector.broadcast %cst_96 : f32 to vector<2x8x8xf32>
    %237 = arith.mulf %235, %236 : vector<2x8x8xf32>
    %238 = vector.shape_cast %48 : vector<2x8xf32> to vector<2x1x8xf32>
    %239 = vector.broadcast %238 : vector<2x1x8xf32> to vector<2x8x8xf32>
    %240 = arith.addf %237, %239 : vector<2x8x8xf32>
    %cst_97 = arith.constant dense<0xFF800000> : vector<2x8xf32>
    %241 = vector.multi_reduction <maximumf>, %240, %cst_97 [2] : vector<2x8x8xf32> to vector<2x8xf32>
    %242 = vector.shape_cast %241 : vector<2x8xf32> to vector<2x8x1xf32>
    %243 = vector.broadcast %242 : vector<2x8x1xf32> to vector<2x8x8xf32>
    %244 = arith.subf %240, %243 : vector<2x8x8xf32>
    %245 = math.exp %244 : vector<2x8x8xf32>
    %cst_98 = arith.constant dense<0.000000e+00> : vector<2x8xf32>
    %246 = vector.multi_reduction <add>, %245, %cst_98 [2] : vector<2x8x8xf32> to vector<2x8xf32>
    %247 = vector.shape_cast %246 : vector<2x8xf32> to vector<2x8x1xf32>
    %248 = vector.broadcast %247 : vector<2x8x1xf32> to vector<2x8x8xf32>
    %249 = arith.divf %245, %248 : vector<2x8x8xf32>
    "tpu.trace_start"() <{level = 10 : i32, message = "bqk,bkd->bqd"}> : () -> ()
    %cst_99 = arith.constant dense<0.000000e+00> : vector<2x8x16xf32>
    %250 = tpu.matmul %249, %234, %cst_99 {dimension_numbers = #tpu.dot_dimension_numbers<[2], [1], [1], [2], [0, 0, 0, 1, 1, 2], [0], [0]>} : vector<2x8x8xf32>, vector<2x8x16xf32>, vector<2x8x16xf32> -> vector<2x8x16xf32>
    "tpu.trace_stop"() : () -> ()
    %251 = tpu.concatenate %228, %250 in 2 : vector<2x8x16xf32>, vector<2x8x16xf32> -> vector<2x8x32xf32>
    %252 = vector.shape_cast %251 : vector<2x8x32xf32> to vector<16x32xf32>
    %c1_100 = arith.constant 1 : index
    %c0_101 = arith.constant 0 : index
    %c0_102 = arith.constant 0 : index
    %253 = vector.load %arg9[%c1_100, %c0_101, %c0_102] : memref<2x32x32xf32, #tpu.memory_space<vmem>>, vector<1x32x32xf32>
    %254 = vector.shape_cast %253 : vector<1x32x32xf32> to vector<32x32xf32>
    %255 = arith.truncf %252 : vector<16x32xf32> to vector<16x32xbf16>
    %256 = arith.truncf %254 : vector<32x32xf32> to vector<32x32xbf16>
    %cst_103 = arith.constant dense<0.000000e+00> : vector<16x32xf32>
    %257 = tpu.matmul %255, %256, %cst_103 {dimension_numbers = #tpu.dot_dimension_numbers<[1], [0], [0], [1], [0, 0, 1, 1], [], []>} : vector<16x32xbf16>, vector<32x32xbf16>, vector<16x32xf32> -> vector<16x32xf32>
    %c1_104 = arith.constant 1 : index
    %c0_105 = arith.constant 0 : index
    %c0_106 = arith.constant 0 : index
    %258 = vector.load %arg10[%c1_104, %c0_105, %c0_106] : memref<2x1x32xf32, #tpu.memory_space<vmem>>, vector<1x1x32xf32>
    %259 = vector.shape_cast %258 : vector<1x1x32xf32> to vector<1x32xf32>
    %260 = vector.broadcast %259 : vector<1x32xf32> to vector<16x32xf32>
    %261 = arith.addf %257, %260 : vector<16x32xf32>
    %262 = arith.addf %261, %197 : vector<16x32xf32>
    %c1_107 = arith.constant 1 : index
    %c0_108 = arith.constant 0 : index
    %c0_109 = arith.constant 0 : index
    %263 = vector.load %arg11[%c1_107, %c0_108, %c0_109] : memref<2x1x32xf32, #tpu.memory_space<vmem>>, vector<1x1x32xf32>
    %264 = vector.shape_cast %263 : vector<1x1x32xf32> to vector<1x32xf32>
    %c1_110 = arith.constant 1 : index
    %c0_111 = arith.constant 0 : index
    %c0_112 = arith.constant 0 : index
    %265 = vector.load %arg12[%c1_110, %c0_111, %c0_112] : memref<2x1x32xf32, #tpu.memory_space<vmem>>, vector<1x1x32xf32>
    %266 = vector.shape_cast %265 : vector<1x1x32xf32> to vector<1x32xf32>
    %cst_113 = arith.constant dense<0.000000e+00> : vector<16xf32>
    %267 = vector.multi_reduction <add>, %262, %cst_113 [1] : vector<16x32xf32> to vector<16xf32>
    %268 = vector.shape_cast %267 : vector<16xf32> to vector<16x1xf32>
    %cst_114 = arith.constant 3.200000e+01 : f32
    %269 = vector.broadcast %cst_114 : f32 to vector<16x1xf32>
    %270 = arith.divf %268, %269 : vector<16x1xf32>
    %271 = vector.broadcast %270 : vector<16x1xf32> to vector<16x32xf32>
    %272 = arith.subf %262, %271 : vector<16x32xf32>
    %273 = arith.mulf %272, %272 : vector<16x32xf32>
    %cst_115 = arith.constant dense<0.000000e+00> : vector<16xf32>
    %274 = vector.multi_reduction <add>, %273, %cst_115 [1] : vector<16x32xf32> to vector<16xf32>
    %275 = vector.shape_cast %274 : vector<16xf32> to vector<16x1xf32>
    %cst_116 = arith.constant 3.200000e+01 : f32
    %276 = vector.broadcast %cst_116 : f32 to vector<16x1xf32>
    %277 = arith.divf %275, %276 : vector<16x1xf32>
    %278 = vector.broadcast %270 : vector<16x1xf32> to vector<16x32xf32>
    %279 = arith.subf %262, %278 : vector<16x32xf32>
    %cst_117 = arith.constant 9.99999996E-13 : f32
    %280 = vector.broadcast %cst_117 : f32 to vector<16x1xf32>
    %281 = arith.addf %277, %280 : vector<16x1xf32>
    %282 = math.rsqrt %281 : vector<16x1xf32>
    %283 = vector.broadcast %282 : vector<16x1xf32> to vector<16x32xf32>
    %284 = arith.mulf %279, %283 : vector<16x32xf32>
    %285 = vector.broadcast %264 : vector<1x32xf32> to vector<16x32xf32>
    %286 = arith.mulf %284, %285 : vector<16x32xf32>
    %287 = vector.broadcast %266 : vector<1x32xf32> to vector<16x32xf32>
    %288 = arith.addf %286, %287 : vector<16x32xf32>
    %c1_118 = arith.constant 1 : index
    %c0_119 = arith.constant 0 : index
    %c0_120 = arith.constant 0 : index
    %289 = vector.load %arg13[%c1_118, %c0_119, %c0_120] : memref<2x32x64xf32, #tpu.memory_space<vmem>>, vector<1x32x64xf32>
    %290 = vector.shape_cast %289 : vector<1x32x64xf32> to vector<32x64xf32>
    %291 = arith.truncf %288 : vector<16x32xf32> to vector<16x32xbf16>
    %292 = arith.truncf %290 : vector<32x64xf32> to vector<32x64xbf16>
    %cst_121 = arith.constant dense<0.000000e+00> : vector<16x64xf32>
    %293 = tpu.matmul %291, %292, %cst_121 {dimension_numbers = #tpu.dot_dimension_numbers<[1], [0], [0], [1], [0, 0, 1, 1], [], []>} : vector<16x32xbf16>, vector<32x64xbf16>, vector<16x64xf32> -> vector<16x64xf32>
    %c1_122 = arith.constant 1 : index
    %c0_123 = arith.constant 0 : index
    %c0_124 = arith.constant 0 : index
    %294 = vector.load %arg14[%c1_122, %c0_123, %c0_124] : memref<2x1x64xf32, #tpu.memory_space<vmem>>, vector<1x1x64xf32>
    %295 = vector.shape_cast %294 : vector<1x1x64xf32> to vector<1x64xf32>
    %296 = vector.broadcast %295 : vector<1x64xf32> to vector<16x64xf32>
    %297 = arith.addf %293, %296 : vector<16x64xf32>
    %cst_125 = arith.constant 5.000000e-01 : f32
    %298 = vector.broadcast %cst_125 : f32 to vector<16x64xf32>
    %299 = arith.mulf %298, %297 : vector<16x64xf32>
    %cst_126 = arith.constant 4.471500e-02 : f32
    %300 = vector.broadcast %cst_126 : f32 to vector<16x64xf32>
    %301 = arith.mulf %300, %297 : vector<16x64xf32>
    %302 = arith.mulf %301, %297 : vector<16x64xf32>
    %303 = arith.mulf %302, %297 : vector<16x64xf32>
    %304 = arith.addf %297, %303 : vector<16x64xf32>
    %cst_127 = arith.constant 0.797884583 : f32
    %305 = vector.broadcast %cst_127 : f32 to vector<16x64xf32>
    %306 = arith.mulf %305, %304 : vector<16x64xf32>
    %307 = math.tanh %306 : vector<16x64xf32>
    %cst_128 = arith.constant 1.000000e+00 : f32
    %308 = vector.broadcast %cst_128 : f32 to vector<16x64xf32>
    %309 = arith.addf %308, %307 : vector<16x64xf32>
    %310 = arith.mulf %299, %309 : vector<16x64xf32>
    %c1_129 = arith.constant 1 : index
    %c0_130 = arith.constant 0 : index
    %c0_131 = arith.constant 0 : index
    %311 = vector.load %arg15[%c1_129, %c0_130, %c0_131] : memref<2x64x32xf32, #tpu.memory_space<vmem>>, vector<1x64x32xf32>
    %312 = vector.shape_cast %311 : vector<1x64x32xf32> to vector<64x32xf32>
    %313 = arith.truncf %310 : vector<16x64xf32> to vector<16x64xbf16>
    %314 = arith.truncf %312 : vector<64x32xf32> to vector<64x32xbf16>
    %cst_132 = arith.constant dense<0.000000e+00> : vector<16x32xf32>
    %315 = tpu.matmul %313, %314, %cst_132 {dimension_numbers = #tpu.dot_dimension_numbers<[1], [0], [0], [1], [0, 0, 1, 1], [], []>} : vector<16x64xbf16>, vector<64x32xbf16>, vector<16x32xf32> -> vector<16x32xf32>
    %c1_133 = arith.constant 1 : index
    %c0_134 = arith.constant 0 : index
    %c0_135 = arith.constant 0 : index
    %316 = vector.load %arg16[%c1_133, %c0_134, %c0_135] : memref<2x1x32xf32, #tpu.memory_space<vmem>>, vector<1x1x32xf32>
    %317 = vector.shape_cast %316 : vector<1x1x32xf32> to vector<1x32xf32>
    %318 = vector.broadcast %317 : vector<1x32xf32> to vector<16x32xf32>
    %319 = arith.addf %315, %318 : vector<16x32xf32>
    %320 = arith.addf %319, %288 : vector<16x32xf32>
    %c1_136 = arith.constant 1 : index
    %c0_137 = arith.constant 0 : index
    %c0_138 = arith.constant 0 : index
    %321 = vector.load %arg17[%c1_136, %c0_137, %c0_138] : memref<2x1x32xf32, #tpu.memory_space<vmem>>, vector<1x1x32xf32>
    %322 = vector.shape_cast %321 : vector<1x1x32xf32> to vector<1x32xf32>
    %c1_139 = arith.constant 1 : index
    %c0_140 = arith.constant 0 : index
    %c0_141 = arith.constant 0 : index
    %323 = vector.load %arg18[%c1_139, %c0_140, %c0_141] : memref<2x1x32xf32, #tpu.memory_space<vmem>>, vector<1x1x32xf32>
    %324 = vector.shape_cast %323 : vector<1x1x32xf32> to vector<1x32xf32>
    %cst_142 = arith.constant dense<0.000000e+00> : vector<16xf32>
    %325 = vector.multi_reduction <add>, %320, %cst_142 [1] : vector<16x32xf32> to vector<16xf32>
    %326 = vector.shape_cast %325 : vector<16xf32> to vector<16x1xf32>
    %cst_143 = arith.constant 3.200000e+01 : f32
    %327 = vector.broadcast %cst_143 : f32 to vector<16x1xf32>
    %328 = arith.divf %326, %327 : vector<16x1xf32>
    %329 = vector.broadcast %328 : vector<16x1xf32> to vector<16x32xf32>
    %330 = arith.subf %320, %329 : vector<16x32xf32>
    %331 = arith.mulf %330, %330 : vector<16x32xf32>
    %cst_144 = arith.constant dense<0.000000e+00> : vector<16xf32>
    %332 = vector.multi_reduction <add>, %331, %cst_144 [1] : vector<16x32xf32> to vector<16xf32>
    %333 = vector.shape_cast %332 : vector<16xf32> to vector<16x1xf32>
    %cst_145 = arith.constant 3.200000e+01 : f32
    %334 = vector.broadcast %cst_145 : f32 to vector<16x1xf32>
    %335 = arith.divf %333, %334 : vector<16x1xf32>
    %336 = vector.broadcast %328 : vector<16x1xf32> to vector<16x32xf32>
    %337 = arith.subf %320, %336 : vector<16x32xf32>
    %cst_146 = arith.constant 9.99999996E-13 : f32
    %338 = vector.broadcast %cst_146 : f32 to vector<16x1xf32>
    %339 = arith.addf %335, %338 : vector<16x1xf32>
    %340 = math.rsqrt %339 : vector<16x1xf32>
    %341 = vector.broadcast %340 : vector<16x1xf32> to vector<16x32xf32>
    %342 = arith.mulf %337, %341 : vector<16x32xf32>
    %343 = vector.broadcast %322 : vector<1x32xf32> to vector<16x32xf32>
    %344 = arith.mulf %342, %343 : vector<16x32xf32>
    %345 = vector.broadcast %324 : vector<1x32xf32> to vector<16x32xf32>
    %346 = arith.addf %344, %345 : vector<16x32xf32>
    %347 = vector.extract_strided_slice %346 {offsets = [7, 0], sizes = [1, 32], strides = [1, 1]} : vector<16x32xf32> to vector<1x32xf32>
    %c0_147 = arith.constant 0 : index
    %c0_148 = arith.constant 0 : index
    %348 = vector.load %arg19[%c0_147, %c0_148] : memref<32x128xf32, #tpu.memory_space<vmem>>, vector<32x128xf32>
    %349 = arith.truncf %347 : vector<1x32xf32> to vector<1x32xbf16>
    %350 = arith.truncf %348 : vector<32x128xf32> to vector<32x128xbf16>
    %cst_149 = arith.constant dense<0.000000e+00> : vector<1x128xf32>
    %351 = tpu.matmul %349, %350, %cst_149 {dimension_numbers = #tpu.dot_dimension_numbers<[1], [0], [0], [1], [0, 0, 1, 1], [], []>} : vector<1x32xbf16>, vector<32x128xbf16>, vector<1x128xf32> -> vector<1x128xf32>
    %c0_150 = arith.constant 0 : index
    %c0_151 = arith.constant 0 : index
    %352 = vector.load %arg20[%c0_150, %c0_151] : memref<1x128xf32, #tpu.memory_space<vmem>>, vector<1x128xf32>
    %353 = arith.addf %351, %352 : vector<1x128xf32>
    %cst_152 = arith.constant dense<0xFF800000> : vector<1xf32>
    %354 = vector.multi_reduction <maximumf>, %353, %cst_152 [1] : vector<1x128xf32> to vector<1xf32>
    %355 = vector.shape_cast %354 : vector<1xf32> to vector<1x1xf32>
    %356 = vector.broadcast %355 : vector<1x1xf32> to vector<1x128xf32>
    %357 = arith.subf %353, %356 : vector<1x128xf32>
    %358 = math.exp %357 : vector<1x128xf32>
    %cst_153 = arith.constant dense<0.000000e+00> : vector<1xf32>
    %359 = vector.multi_reduction <add>, %358, %cst_153 [1] : vector<1x128xf32> to vector<1xf32>
    %360 = vector.shape_cast %359 : vector<1xf32> to vector<1x1xf32>
    %361 = vector.broadcast %360 : vector<1x1xf32> to vector<1x128xf32>
    %362 = arith.divf %358, %361 : vector<1x128xf32>
    %c0_154 = arith.constant 0 : index
    %c0_155 = arith.constant 0 : index
    %363 = vector.load %arg21[%c0_154, %c0_155] : memref<1x128xf32, #tpu.memory_space<vmem>>, vector<1x128xf32>
    tpu.vector_store %arg21[%c0_154, %c0_155], %362 {strides = array<i32>} : memref<1x128xf32, #tpu.memory_space<vmem>>, vector<1x128xf32>,
    return
  }
}

</mosaic_0001>

<llo_original>
// kernel: tpu_custom_call.1
$region0: #{tpu_custom_call.1}
  #allocation0 [shape = 'u32[]', space=smem, size = 0x4, offset = 0x4, fixed_abs, tag = 'smem constant byte address 0x4 - core index']
  #allocation1 [shape = 'u32[144,128]{1,0:T(1,128)}', space=vmem, size = 0x12000, scoped, tag = 'internal scratch']
  %s0 = inlined_call_operand.vmem [shape: s32[16,1], index: 0, kind: input, shape index: {}]
  %s1 = inlined_call_operand.vmem [shape: s32[2,8], index: 1, kind: input, shape index: {}]
  %s2 = inlined_call_operand.vmem [shape: f32[128,32], index: 2, kind: input, shape index: {}]
  %s3 = inlined_call_operand.vmem [shape: f32[32,32], index: 3, kind: input, shape index: {}]
  %s4 = inlined_call_operand.vmem [shape: f32[2,32], index: 4, kind: input, shape index: {}]
  %s5 = inlined_call_operand.vmem [shape: f32[1,32], index: 5, kind: input, shape index: {}]
  %s6 = inlined_call_operand.vmem [shape: f32[1,32], index: 6, kind: input, shape index: {}]
  %s7 = inlined_call_operand.vmem [shape: f32[2,32,96], index: 7, kind: input, shape index: {}]
  %s8 = inlined_call_operand.vmem [shape: f32[2,1,96], index: 8, kind: input, shape index: {}]
  %s9 = inlined_call_operand.vmem [shape: f32[2,32,32], index: 9, kind: input, shape index: {}]
  %s10 = inlined_call_operand.vmem [shape: f32[2,1,32], index: 10, kind: input, shape index: {}]
  %s11 = inlined_call_operand.vmem [shape: f32[2,1,32], index: 11, kind: input, shape index: {}]
  %s12 = inlined_call_operand.vmem [shape: f32[2,1,32], index: 12, kind: input, shape index: {}]
  %s13 = inlined_call_operand.vmem [shape: f32[2,32,64], index: 13, kind: input, shape index: {}]
  %s14 = inlined_call_operand.vmem [shape: f32[2,1,64], index: 14, kind: input, shape index: {}]
  %s15 = inlined_call_operand.vmem [shape: f32[2,64,32], index: 15, kind: input, shape index: {}]
  %s16 = inlined_call_operand.vmem [shape: f32[2,1,32], index: 16, kind: input, shape index: {}]
  %s17 = inlined_call_operand.vmem [shape: f32[2,1,32], index: 17, kind: input, shape index: {}]
  %s18 = inlined_call_operand.vmem [shape: f32[2,1,32], index: 18, kind: input, shape index: {}]
  %s19 = inlined_call_operand.vmem [shape: f32[32,128], index: 19, kind: input, shape index: {}]
  %s20 = inlined_call_operand.vmem [shape: f32[1,128], index: 20, kind: input, shape index: {}]
  %s21 = inlined_call_operand.hbm [shape: f32[1,128], index: 21, kind: output, shape index: {}]
  %s22 = sld [smem:[#allocation0]]
  $region94: #{tpu_custom_call.1} parent=0
    _
  %s24 = ssub.s32 1, %s22
  %s25 = scalar_select 0, %s24, %s22
  $region1: #{tpu_custom_call.1} parent=0
    #allocation2 [shape = 'u8[512]{0}', space=vmem, size = 0x400, scoped, tag = 'output window, operand 0, single buffered']
    #allocation3 [shape = 's32[1]{0}', space=sflag, size = 0x4, scoped, tag = 'scoped memory for tpu_custom_call.1']
    %26 = vsyncpa [#allocation3], 0
    // Predicated region
    $region2: #{tpu_custom_call.1} parent=1 // pred_check
      _
    $region3: #{tpu_custom_call.1} parent=1 // pred_check_branch
      %28 = sbr.rel (0) target = $region5
    $region4: #{tpu_custom_call.1} parent=1 // pred_region
      _
    $region5: #{tpu_custom_call.1} parent=1 // pred_fallthru
      _
    // Predicated region
    $region6: #{tpu_custom_call.1} parent=1 // pred_check
      _
    $region7: #{tpu_custom_call.1} parent=1 // pred_check_branch
      %30 = sbr.rel (0) target = $region9
    $region8: #{tpu_custom_call.1} parent=1 // pred_region
      _
    $region9: #{tpu_custom_call.1} parent=1 // pred_fallthru
      _
    // Predicated region
    $region10: #{tpu_custom_call.1} parent=1 // pred_check
      _
    $region11: #{tpu_custom_call.1} parent=1 // pred_check_branch
      %32 = sbr.rel (0) target = $region13
    $region12: #{tpu_custom_call.1} parent=1 // pred_region
      _
    $region13: #{tpu_custom_call.1} parent=1 // pred_fallthru
      _
    // Predicated region
    $region14: #{tpu_custom_call.1} parent=1 // pred_check
      _
    $region15: #{tpu_custom_call.1} parent=1 // pred_check_branch
      %34 = sbr.rel (0) target = $region17
    $region16: #{tpu_custom_call.1} parent=1 // pred_region
      _
    $region17: #{tpu_custom_call.1} parent=1 // pred_fallthru
      _
    // Predicated region
    $region18: #{tpu_custom_call.1} parent=1 // pred_check
      _
    $region19: #{tpu_custom_call.1} parent=1 // pred_check_branch
      %36 = sbr.rel (0) target = $region21
    $region20: #{tpu_custom_call.1} parent=1 // pred_region
      _
    $region21: #{tpu_custom_call.1} parent=1 // pred_fallthru
      _
    // Predicated region
    $region22: #{tpu_custom_call.1} parent=1 // pred_check
      _
    $region23: #{tpu_custom_call.1} parent=1 // pred_check_branch
      %38 = sbr.rel (0) target = $region25
    $region24: #{tpu_custom_call.1} parent=1 // pred_region
      _
    $region25: #{tpu_custom_call.1} parent=1 // pred_fallthru
      _
    // Predicated region
    $region26: #{tpu_custom_call.1} parent=1 // pred_check
      _
    $region27: #{tpu_custom_call.1} parent=1 // pred_check_branch
      %40 = sbr.rel (0) target = $region29
    $region28: #{tpu_custom_call.1} parent=1 // pred_region
      _
    $region29: #{tpu_custom_call.1} parent=1 // pred_fallthru
      _
    // Predicated region
    $region30: #{tpu_custom_call.1} parent=1 // pred_check
      _
    $region31: #{tpu_custom_call.1} parent=1 // pred_check_branch
      %42 = sbr.rel (0) target = $region33
    $region32: #{tpu_custom_call.1} parent=1 // pred_region
      _
    $region33: #{tpu_custom_call.1} parent=1 // pred_fallthru
      _
    // Predicated region
    $region34: #{tpu_custom_call.1} parent=1 // pred_check
      _
    $region35: #{tpu_custom_call.1} parent=1 // pred_check_branch
      %44 = sbr.rel (0) target = $region37
    $region36: #{tpu_custom_call.1} parent=1 // pred_region
      _
    $region37: #{tpu_custom_call.1} parent=1 // pred_fallthru
      _
    // Predicated region
    $region38: #{tpu_custom_call.1} parent=1 // pred_check
      _
    $region39: #{tpu_custom_call.1} parent=1 // pred_check_branch
      %46 = sbr.rel (0) target = $region41
    $region40: #{tpu_custom_call.1} parent=1 // pred_region
      _
    $region41: #{tpu_custom_call.1} parent=1 // pred_fallthru
      _
    // Predicated region
    $region42: #{tpu_custom_call.1} parent=1 // pred_check
      _
    $region43: #{tpu_custom_call.1} parent=1 // pred_check_branch
      %48 = sbr.rel (0) target = $region45
    $region44: #{tpu_custom_call.1} parent=1 // pred_region
      _
    $region45: #{tpu_custom_call.1} parent=1 // pred_fallthru
      _
    // Predicated region
    $region46: #{tpu_custom_call.1} parent=1 // pred_check
      _
    $region47: #{tpu_custom_call.1} parent=1 // pred_check_branch
      %50 = sbr.rel (0) target = $region49
    $region48: #{tpu_custom_call.1} parent=1 // pred_region
      _
    $region49: #{tpu_custom_call.1} parent=1 // pred_fallthru
      _
    // Predicated region
    $region50: #{tpu_custom_call.1} parent=1 // pred_check
      _
    $region51: #{tpu_custom_call.1} parent=1 // pred_check_branch
      %52 = sbr.rel (0) target = $region53
    $region52: #{tpu_custom_call.1} parent=1 // pred_region
      _
    $region53: #{tpu_custom_call.1} parent=1 // pred_fallthru
      _
    // Predicated region
    $region54: #{tpu_custom_call.1} parent=1 // pred_check
      _
    $region55: #{tpu_custom_call.1} parent=1 // pred_check_branch
      %54 = sbr.rel (0) target = $region57
    $region56: #{tpu_custom_call.1} parent=1 // pred_region
      _
    $region57: #{tpu_custom_call.1} parent=1 // pred_fallthru
      _
    // Predicated region
    $region58: #{tpu_custom_call.1} parent=1 // pred_check
      _
    $region59: #{tpu_custom_call.1} parent=1 // pred_check_branch
      %56 = sbr.rel (0) target = $region61
    $region60: #{tpu_custom_call.1} parent=1 // pred_region
      _
    $region61: #{tpu_custom_call.1} parent=1 // pred_fallthru
      _
    // Predicated region
    $region62: #{tpu_custom_call.1} parent=1 // pred_check
      _
    $region63: #{tpu_custom_call.1} parent=1 // pred_check_branch
      %58 = sbr.rel (0) target = $region65
    $region64: #{tpu_custom_call.1} parent=1 // pred_region
      _
    $region65: #{tpu_custom_call.1} parent=1 // pred_fallthru
      _
    // Predicated region
    $region66: #{tpu_custom_call.1} parent=1 // pred_check
      _
    $region67: #{tpu_custom_call.1} parent=1 // pred_check_branch
      %60 = sbr.rel (0) target = $region69
    $region68: #{tpu_custom_call.1} parent=1 // pred_region
      _
    $region69: #{tpu_custom_call.1} parent=1 // pred_fallthru
      _
    // Predicated region
    $region70: #{tpu_custom_call.1} parent=1 // pred_check
      _
    $region71: #{tpu_custom_call.1} parent=1 // pred_check_branch
      %62 = sbr.rel (0) target = $region73
    $region72: #{tpu_custom_call.1} parent=1 // pred_region
      _
    $region73: #{tpu_custom_call.1} parent=1 // pred_fallthru
      _
    // Predicated region
    $region74: #{tpu_custom_call.1} parent=1 // pred_check
      _
    $region75: #{tpu_custom_call.1} parent=1 // pred_check_branch
      %64 = sbr.rel (0) target = $region77
    $region76: #{tpu_custom_call.1} parent=1 // pred_region
      _
    $region77: #{tpu_custom_call.1} parent=1 // pred_fallthru
      _
    // Predicated region
    $region78: #{tpu_custom_call.1} parent=1 // pred_check
      _
    $region79: #{tpu_custom_call.1} parent=1 // pred_check_branch
      %66 = sbr.rel (0) target = $region81
    $region80: #{tpu_custom_call.1} parent=1 // pred_region
      _
    $region81: #{tpu_custom_call.1} parent=1 // pred_fallthru
      _
    // Predicated region
    $region82: #{tpu_custom_call.1} parent=1 // pred_check
      _
    $region83: #{tpu_custom_call.1} parent=1 // pred_check_branch
      %68 = sbr.rel (0) target = $region85
    $region84: #{tpu_custom_call.1} parent=1 // pred_region
      _
    $region85: #{tpu_custom_call.1} parent=1 // pred_fallthru
      _
    %v70 = vld [vmem:[%s0] sm:$0xff]
    %v71 = vld [vmem:[%s0 + $0x8] sm:$0xff]
    %v72 = vlaneseq
    %v73 = vand.u32 %v72, 127
    %74 = vset.pattern.permute.xlu0 0
    %75 = vperm.xlu0 %74, %v70
    %v76 = vpop.permute.xlu0 %75
    %77 = vset.pattern.permute.xlu0 0
    %78 = vperm.xlu0 %77, %v71
    %v79 = vpop.permute.xlu0 %78
    %vm80 = vcmp.eq.s32.totalorder %v76, %v73
    %vm81 = vcmp.eq.s32.totalorder %v79, %v73
    %v82 = vld [vmem:[%s2] sm:$0xff]
    %v83 = vld [vmem:[%s2 + $0x8] sm:$0xff]
    %v84 = vld [vmem:[%s2 + $0x10] sm:$0xff]
    %v85 = vld [vmem:[%s2 + $0x18] sm:$0xff]
    %v86 = vld [vmem:[%s2 + $0x20] sm:$0xff]
    %v87 = vld [vmem:[%s2 + $0x28] sm:$0xff]
    %v88 = vld [vmem:[%s2 + $0x30] sm:$0xff]
    %v89 = vld [vmem:[%s2 + $0x38] sm:$0xff]
    %v90 = vld [vmem:[%s2 + $0x40] sm:$0xff]
    %v91 = vld [vmem:[%s2 + $0x48] sm:$0xff]
    %v92 = vld [vmem:[%s2 + $0x50] sm:$0xff]
    %v93 = vld [vmem:[%s2 + $0x58] sm:$0xff]
    %v94 = vld [vmem:[%s2 + $0x60] sm:$0xff]
    %v95 = vld [vmem:[%s2 + $0x68] sm:$0xff]
    %v96 = vld [vmem:[%s2 + $0x70] sm:$0xff]
    %v97 = vld [vmem:[%s2 + $0x78] sm:$0xff]
    %v98 = vsel %vm80, 1, 0
    %v99 = vsel %vm81, 1, 0
    %v100 = vcvt.s32.f32 %v98
    %v101 = vcvt.s32.f32 %v99
    %v102 = vpack.c.bf16 %v101, %v100
    %v103 = vpack.c.bf16 %v83, %v82
    %v104 = vpack.c.bf16 %v85, %v84
    %v105 = vpack.c.bf16 %v87, %v86
    %v106 = vpack.c.bf16 %v89, %v88
    %v107 = vpack.c.bf16 %v91, %v90
    %v108 = vpack.c.bf16 %v93, %v92
    %v109 = vpack.c.bf16 %v95, %v94
    %v110 = vpack.c.bf16 %v97, %v96
    %111 = vmatprep.subr.bf16.mxu0 0
    %112 = vmatpush1.bf16.msra.mxu0 %v110
    %113 = vmatprep.subr.bf16.mxu0 0
    %114 = vmatpush1.bf16.msra.mxu0 %v109
    %115 = vmatprep.subr.bf16.mxu0 0
    %116 = vmatpush1.bf16.msra.mxu0 %v108
    %117 = vmatprep.subr.bf16.mxu0 0
    %118 = vmatpush1.bf16.msra.mxu0 %v107
    %119 = vmatprep.subr.bf16.mxu0 0
    %120 = vmatpush1.bf16.msra.mxu0 %v106
    %121 = vmatprep.subr.bf16.mxu0 0
    %122 = vmatpush1.bf16.msra.mxu0 %v105
    %123 = vmatprep.subr.bf16.mxu0 0
    %124 = vmatpush1.bf16.msra.mxu0 %v104
    %125 = vmatprep.subr.bf16.mxu0 0
    %126 = vmatpush1.bf16.msra.mxu0 %v103
    %127 = vmatprep.subr.bf16.mxu0 0
    %128 = vmatpush2.bf16.msra.mxu0 0
    %129 = vmatprep.subr.bf16.mxu0 0
    %130 = vmatpush2.bf16.msra.mxu0 0
    %131 = vmatprep.subr.bf16.mxu0 0
    %132 = vmatpush2.bf16.msra.mxu0 0
    %133 = vmatprep.subr.bf16.mxu0 0
    %134 = vmatpush2.bf16.msra.mxu0 0
    %135 = vmatprep.subr.bf16.mxu0 0
    %136 = vmatpush2.bf16.msra.mxu0 0
    %137 = vmatprep.subr.bf16.mxu0 0
    %138 = vmatpush2.bf16.msra.mxu0 0
    %139 = vmatprep.subr.bf16.mxu0 0
    %140 = vmatpush2.bf16.msra.mxu0 0
    %141 = vmatprep.subr.bf16.mxu0 0
    %142 = vmatpush2.bf16.msra.mxu0 0
    %143 = vmatprep.mubr.bf16.mxu0 0
    %144 = vmatmul.mubr.bf16.gmra.mxu0 %v102
    %v145 = vpop.f32.mrf.mxu0
    %v146 = vadd.f32 0.0, %v145
    %v147 = vpop.f32.mrf.mxu0
    %v148 = vpop.f32.mrf.mxu0
    %v149 = vadd.f32 0.0, %v148
    %v150 = vpop.f32.mrf.mxu0
    %151 = vdwg.mxu0
    %v152 = vld [vmem:[%s3] sm:$0xff]
    %v153 = vadd.f32 %v146, %v152
    %v154 = vadd.f32 %v149, %v152
    %v155 = vld [vmem:[%s4] sm:$0x1]
    %v156 = vlaneseq
    %v157 = vshrl.u32 %v156, 7
    %v158 = vsub.s32 0, %v157
    %v159 = vrot.slane %v155, %v158
    %v160 = vadd.f32 %v153, %v159
    %v161 = vadd.f32 %v154, %v159
    %v162 = vld [vmem:[%s5] sm:$0x1]
    %v163 = vld [vmem:[%s6] sm:$0x1]
    %vm164 = vcmask 261120
    %v165 = vsel %vm164, %v160, 0.0
    %166 = vadd.xlane.f32.xlu0 %v165
    %v167 = vpop.xlane.xlu0 %166
    %v168 = vsel %vm164, %v161, 0.0
    %169 = vadd.xlane.f32.xlu0 %v168
    %v170 = vpop.xlane.xlu0 %169
    %v171 = vrcp.pop 32.0
    %v172 = vmul.f32 %v167, %v171
    %v173 = vmul.f32 %v170, %v171
    %v174 = vsub.f32 %v160, %v172
    %v175 = vsub.f32 %v161, %v173
    %v176 = vmul.f32 %v174, %v174
    %v177 = vmul.f32 %v175, %v175
    %v178 = vsel %vm164, %v176, 0.0
    %179 = vadd.xlane.f32.xlu0 %v178
    %v180 = vpop.xlane.xlu0 %179
    %v181 = vsel %vm164, %v177, 0.0
    %182 = vadd.xlane.f32.xlu0 %v181
    %v183 = vpop.xlane.xlu0 %182
    %v184 = vmul.f32 %v180, %v171
    %v185 = vmul.f32 %v183, %v171
    %v186 = vadd.f32 %v184, 1e-12
    %v187 = vadd.f32 %v185, 1e-12
    %v188 = vrsqrt.pop %v186
    %v189 = vrsqrt.pop %v187
    %v190 = vmul.f32 %v174, %v188
    %v191 = vmul.f32 %v175, %v189
    %v193 = vlaneseq
    %v194 = vshrl.u32 %v193, 7
    %v195 = vsub.s32 0, %v194
    %v196 = vrot.slane %v162, %v195
    %v198 = vmul.f32 %v190, %v196
    %v199 = vmul.f32 %v191, %v196
    %v201 = vlaneseq
    %v202 = vshrl.u32 %v201, 7
    %v203 = vsub.s32 0, %v202
    %v204 = vrot.slane %v163, %v203
    %v206 = vadd.f32 %v198, %v204
    %v207 = vadd.f32 %v199, %v204
    %v208 = vld [vmem:[%s1] sm:$0x3]
    %v209 = vcvt.s32.f32 %v208
    %v210 = vsub.f32 1.0, %v209
    %v211 = vmul.f32 %v210, -1e+09
    %v212 = vld [vmem:[%s7] sm:$0xff]
    %v213 = vld [vmem:[%s7 + $0x8] sm:$0xff]
    %v214 = vld [vmem:[%s7 + $0x10] sm:$0xff]
    %v215 = vld [vmem:[%s7 + $0x18] sm:$0xff]
    %v216 = vpack.c.bf16 %v207, %v206
    %v217 = vpack.c.bf16 %v213, %v212
    %v218 = vpack.c.bf16 %v215, %v214
    %v219 = vld [vmem:[%s8] sm:$0x1]
    %v221 = vlaneseq
    %v222 = vshrl.u32 %v221, 7
    %v223 = vsub.s32 0, %v222
    %v224 = vrot.slane %v219, %v223
    %v227 = vsel %vm164, %v216, 0
    %229 = vmatprep.subr.bf16.mxu0 0
    %230 = vmatpush1.bf16.msra.mxu0 0
    %231 = vmatprep.subr.bf16.mxu0 0
    %232 = vmatpush1.bf16.msra.mxu0 0
    %233 = vmatprep.subr.bf16.mxu0 0
    %234 = vmatpush1.bf16.msra.mxu0 0
    %235 = vmatprep.subr.bf16.mxu0 0
    %236 = vmatpush1.bf16.msra.mxu0 0
    %237 = vmatprep.subr.bf16.mxu0 0
    %238 = vmatpush1.bf16.msra.mxu0 0
    %239 = vmatprep.subr.bf16.mxu0 0
    %240 = vmatpush1.bf16.msra.mxu0 0
    %241 = vmatprep.subr.bf16.mxu0 0
    %242 = vmatpush1.bf16.msra.mxu0 %v218
    %243 = vmatprep.subr.bf16.mxu0 0
    %244 = vmatpush1.bf16.msra.mxu0 %v217
    %245 = vmatprep.subr.bf16.mxu0 0
    %246 = vmatpush2.bf16.msra.mxu0 0
    %247 = vmatprep.subr.bf16.mxu0 0
    %248 = vmatpush2.bf16.msra.mxu0 0
    %249 = vmatprep.subr.bf16.mxu0 0
    %250 = vmatpush2.bf16.msra.mxu0 0
    %251 = vmatprep.subr.bf16.mxu0 0
    %252 = vmatpush2.bf16.msra.mxu0 0
    %253 = vmatprep.subr.bf16.mxu0 0
    %254 = vmatpush2.bf16.msra.mxu0 0
    %255 = vmatprep.subr.bf16.mxu0 0
    %256 = vmatpush2.bf16.msra.mxu0 0
    %257 = vmatprep.subr.bf16.mxu0 0
    %258 = vmatpush2.bf16.msra.mxu0 0
    %259 = vmatprep.subr.bf16.mxu0 0
    %260 = vmatpush2.bf16.msra.mxu0 0
    %261 = vmatprep.mubr.bf16.mxu0 0
    %262 = vmatmul.mubr.bf16.gmra.mxu0 %v227
    %v263 = vpop.f32.mrf.mxu0
    %v264 = vadd.f32 %v224, %v263
    %v265 = vpop.f32.mrf.mxu0
    %v266 = vpop.f32.mrf.mxu0
    %v267 = vadd.f32 %v224, %v266
    %v268 = vpop.f32.mrf.mxu0
    %269 = vdwg.mxu0
    %271 = vrot.lane.b32.xlu0 %v264, 96
    %v272 = vpop.permute.xlu0 %271
    %vm273 = vcmask 130048
    %v274 = vsel %vm273, %v264, 0
    %v276 = vsel %vm273, %v272, 0
    %278 = vmatprep.subr.mxu0 0.0
    %279 = vmatpush1.xpose.msra.mxu0 0.0
    %280 = vmatprep.subr.mxu0 0.0
    %281 = vmatpush1.xpose.msra.mxu0 0.0
    %282 = vmatprep.subr.mxu0 0.0
    %283 = vmatpush1.xpose.msra.mxu0 0.0
    %284 = vmatprep.subr.mxu0 0.0
    %285 = vmatpush1.xpose.msra.mxu0 0.0
    %286 = vmatprep.subr.mxu0 0.0
    %287 = vmatpush1.xpose.msra.mxu0 0.0
    %288 = vmatprep.subr.mxu0 0.0
    %289 = vmatpush1.xpose.msra.mxu0 0.0
    %290 = vmatprep.subr.mxu0 0.0
    %291 = vmatpush1.xpose.msra.mxu0 0.0
    %292 = vmatprep.subr.mxu0 0.0
    %293 = vmatpush1.xpose.msra.mxu0 0.0
    %294 = vmatprep.subr.mxu0 0.0
    %295 = vmatpush1.xpose.msra.mxu0 0.0
    %296 = vmatprep.subr.mxu0 0.0
    %297 = vmatpush1.xpose.msra.mxu0 0.0
    %298 = vmatprep.subr.mxu0 0.0
    %299 = vmatpush1.xpose.msra.mxu0 0.0
    %300 = vmatprep.subr.mxu0 0.0
    %301 = vmatpush1.xpose.msra.mxu0 0.0
    %302 = vmatprep.subr.mxu0 0.0
    %303 = vmatpush1.xpose.msra.mxu0 0.0
    %304 = vmatprep.subr.mxu0 0.0
    %305 = vmatpush1.xpose.msra.mxu0 0.0
    %306 = vmatprep.subr.mxu0 0.0
    %307 = vmatpush1.xpose.msra.mxu0 0.0
    %308 = vmatprep.subr.mxu0 0.0
    %309 = vmatpush1.xpose.msra.mxu0 %v276
    %310 = vmatprep.subr.mxu0 0.0
    %311 = vmatpush2.xpose.msra.mxu0 0.0
    %312 = vmatprep.subr.mxu0 0.0
    %313 = vmatpush2.xpose.msra.mxu0 0.0
    %314 = vmatprep.subr.mxu0 0.0
    %315 = vmatpush2.xpose.msra.mxu0 0.0
    %316 = vmatprep.subr.mxu0 0.0
    %317 = vmatpush2.xpose.msra.mxu0 0.0
    %318 = vmatprep.subr.mxu0 0.0
    %319 = vmatpush2.xpose.msra.mxu0 0.0
    %320 = vmatprep.subr.mxu0 0.0
    %321 = vmatpush2.xpose.msra.mxu0 0.0
    %322 = vmatprep.subr.mxu0 0.0
    %323 = vmatpush2.xpose.msra.mxu0 0.0
    %324 = vmatprep.subr.mxu0 0.0
    %325 = vmatpush2.xpose.msra.mxu0 0.0
    %326 = vmatprep.subr.mxu0 0.0
    %327 = vmatpush2.xpose.msra.mxu0 0.0
    %328 = vmatprep.subr.mxu0 0.0
    %329 = vmatpush2.xpose.msra.mxu0 0.0
    %330 = vmatprep.subr.mxu0 0.0
    %331 = vmatpush2.xpose.msra.mxu0 0.0
    %332 = vmatprep.subr.mxu0 0.0
    %333 = vmatpush2.xpose.msra.mxu0 0.0
    %334 = vmatprep.subr.mxu0 0.0
    %335 = vmatpush2.xpose.msra.mxu0 0.0
    %336 = vmatprep.subr.mxu0 0.0
    %337 = vmatpush2.xpose.msra.mxu0 0.0
    %338 = vmatprep.subr.mxu0 0.0
    %339 = vmatpush2.xpose.msra.mxu0 0.0
    %340 = vmatprep.subr.mxu0 0.0
    %341 = vmatpush2.xpose.msra.mxu0 0.0
    %342 = vmatprep.mubr.f32.mxu0 0.0
    %343 = vmatmul.mubr.f32.gmra.mxu0 %v274
    %v344 = vpop.f32.mrf.mxu0
    %v345 = vadd.f32 0.0, %v344
    %v346 = vpop.f32.mrf.mxu0
    %347 = vdwg.mxu0
    %349 = vrot.lane.b32.xlu0 %v267, 96
    %v350 = vpop.permute.xlu0 %349
    %v351 = vsel %vm273, %v267, 0
    %v353 = vsel %vm273, %v350, 0
    %355 = vmatprep.subr.mxu0 0.0
    %356 = vmatpush1.xpose.msra.mxu0 0.0
    %357 = vmatprep.subr.mxu0 0.0
    %358 = vmatpush1.xpose.msra.mxu0 0.0
    %359 = vmatprep.subr.mxu0 0.0
    %360 = vmatpush1.xpose.msra.mxu0 0.0
    %361 = vmatprep.subr.mxu0 0.0
    %362 = vmatpush1.xpose.msra.mxu0 0.0
    %363 = vmatprep.subr.mxu0 0.0
    %364 = vmatpush1.xpose.msra.mxu0 0.0
    %365 = vmatprep.subr.mxu0 0.0
    %366 = vmatpush1.xpose.msra.mxu0 0.0
    %367 = vmatprep.subr.mxu0 0.0
    %368 = vmatpush1.xpose.msra.mxu0 0.0
    %369 = vmatprep.subr.mxu0 0.0
    %370 = vmatpush1.xpose.msra.mxu0 0.0
    %371 = vmatprep.subr.mxu0 0.0
    %372 = vmatpush1.xpose.msra.mxu0 0.0
    %373 = vmatprep.subr.mxu0 0.0
    %374 = vmatpush1.xpose.msra.mxu0 0.0
    %375 = vmatprep.subr.mxu0 0.0
    %376 = vmatpush1.xpose.msra.mxu0 0.0
    %377 = vmatprep.subr.mxu0 0.0
    %378 = vmatpush1.xpose.msra.mxu0 0.0
    %379 = vmatprep.subr.mxu0 0.0
    %380 = vmatpush1.xpose.msra.mxu0 0.0
    %381 = vmatprep.subr.mxu0 0.0
    %382 = vmatpush1.xpose.msra.mxu0 0.0
    %383 = vmatprep.subr.mxu0 0.0
    %384 = vmatpush1.xpose.msra.mxu0 0.0
    %385 = vmatprep.subr.mxu0 0.0
    %386 = vmatpush1.xpose.msra.mxu0 %v353
    %387 = vmatprep.subr.mxu0 0.0
    %388 = vmatpush2.xpose.msra.mxu0 0.0
    %389 = vmatprep.subr.mxu0 0.0
    %390 = vmatpush2.xpose.msra.mxu0 0.0
    %391 = vmatprep.subr.mxu0 0.0
    %392 = vmatpush2.xpose.msra.mxu0 0.0
    %393 = vmatprep.subr.mxu0 0.0
    %394 = vmatpush2.xpose.msra.mxu0 0.0
    %395 = vmatprep.subr.mxu0 0.0
    %396 = vmatpush2.xpose.msra.mxu0 0.0
    %397 = vmatprep.subr.mxu0 0.0
    %398 = vmatpush2.xpose.msra.mxu0 0.0
    %399 = vmatprep.subr.mxu0 0.0
    %400 = vmatpush2.xpose.msra.mxu0 0.0
    %401 = vmatprep.subr.mxu0 0.0
    %402 = vmatpush2.xpose.msra.mxu0 0.0
    %403 = vmatprep.subr.mxu0 0.0
    %404 = vmatpush2.xpose.msra.mxu0 0.0
    %405 = vmatprep.subr.mxu0 0.0
    %406 = vmatpush2.xpose.msra.mxu0 0.0
    %407 = vmatprep.subr.mxu0 0.0
    %408 = vmatpush2.xpose.msra.mxu0 0.0
    %409 = vmatprep.subr.mxu0 0.0
    %410 = vmatpush2.xpose.msra.mxu0 0.0
    %411 = vmatprep.subr.mxu0 0.0
    %412 = vmatpush2.xpose.msra.mxu0 0.0
    %413 = vmatprep.subr.mxu0 0.0
    %414 = vmatpush2.xpose.msra.mxu0 0.0
    %415 = vmatprep.subr.mxu0 0.0
    %416 = vmatpush2.xpose.msra.mxu0 0.0
    %417 = vmatprep.subr.mxu0 0.0
    %418 = vmatpush2.xpose.msra.mxu0 0.0
    %419 = vmatprep.mubr.f32.mxu0 0.0
    %420 = vmatmul.mubr.f32.gmra.mxu0 %v351
    %v421 = vpop.f32.mrf.mxu0
    %v422 = vadd.f32 0.0, %v421
    %v423 = vpop.f32.mrf.mxu0
    %424 = vdwg.mxu0
    %v425 = vmul.f32 %v345, 0.25
    %v426 = vmul.f32 %v422, 0.25
    %v429 = vunpack.c.l.s4 1966171168
    %v430 = vunpack.c.0.s8 %v429
    %v431 = vlaneseq
    %v432 = vshrl.u32 %v431, 7
    %v433 = vsub.s32 %v430, %v432
    %v434 = vrot.slane %v211, %v433
    %v435 = vcombine.high %v434, %v434
    %v437 = vunpack.c.l.s4 1966171168
    %v438 = vunpack.c.0.s8 %v437
    %v439 = vlaneseq
    %v440 = vshrl.u32 %v439, 7
    %v441 = vsub.s32 %v438, %v440
    %v442 = vrot.slane %v434, %v441
    %v444 = vunpack.c.l.s4 1966171168
    %v445 = vunpack.c.0.s8 %v444
    %v446 = vlaneseq
    %v447 = vshrl.u32 %v446, 7
    %v448 = vsub.s32 %v445, %v447
    %v449 = vrot.slane %v435, %v448
    %v450 = vlaneseq
    %v451 = vshrl.u32 %v450, 7
    %v452 = vsub.s32 0, %v451
    %v453 = vrot.slane %v442, %v452
    %v454 = vlaneseq
    %v455 = vshrl.u32 %v454, 7
    %v456 = vsub.s32 0, %v455
    %v457 = vrot.slane %v449, %v456
    %v460 = vadd.f32 %v425, %v453
    %v461 = vadd.f32 %v426, %v457
    %vm462 = vcmask 64512
    %v463 = vsel %vm462, %v460, -inf
    %464 = vmax.xlane.f32.xlu0 %v463
    %v465 = vpop.xlane.xlu0 %464
    %v466 = vsel %vm462, %v461, -inf
    %467 = vmax.xlane.f32.xlu0 %v466
    %v468 = vpop.xlane.xlu0 %467
    %v469 = vsub.f32 %v460, %v465
    %v470 = vsub.f32 %v461, %v468
    %v471 = vmul.f32 %v469, 1.442695
    %v472 = vpow.pop %v471
    %v473 = vmul.f32 %v470, 1.442695
    %v474 = vpow.pop %v473
    %v475 = vsel %vm462, %v472, 0.0
    %476 = vadd.xlane.f32.xlu0 %v475
    %v477 = vpop.xlane.xlu0 %476
    %v478 = vsel %vm462, %v474, 0.0
    %479 = vadd.xlane.f32.xlu0 %v478
    %v480 = vpop.xlane.xlu0 %479
    %v481 = vrcp.pop %v477
    %v482 = vmul.f32 %v472, %v481
    %v483 = vrcp.pop %v480
    %v484 = vmul.f32 %v474, %v483
    %485 = vrot.lane.b32.xlu0 %v264, 64
    %v486 = vpop.permute.xlu0 %485
    %v489 = vsel %vm462, %v482, 0
    %491 = vmatprep.subr.mxu0 0.0
    %492 = vmatpush1.msra.mxu0 0.0
    %493 = vmatprep.subr.mxu0 0.0
    %494 = vmatpush1.msra.mxu0 0.0
    %495 = vmatprep.subr.mxu0 0.0
    %496 = vmatpush1.msra.mxu0 0.0
    %497 = vmatprep.subr.mxu0 0.0
    %498 = vmatpush1.msra.mxu0 0.0
    %499 = vmatprep.subr.mxu0 0.0
    %500 = vmatpush1.msra.mxu0 0.0
    %501 = vmatprep.subr.mxu0 0.0
    %502 = vmatpush1.msra.mxu0 0.0
    %503 = vmatprep.subr.mxu0 0.0
    %504 = vmatpush1.msra.mxu0 0.0
    %505 = vmatprep.subr.mxu0 0.0
    %506 = vmatpush1.msra.mxu0 0.0
    %507 = vmatprep.subr.mxu0 0.0
    %508 = vmatpush1.msra.mxu0 0.0
    %509 = vmatprep.subr.mxu0 0.0
    %510 = vmatpush1.msra.mxu0 0.0
    %511 = vmatprep.subr.mxu0 0.0
    %512 = vmatpush1.msra.mxu0 0.0
    %513 = vmatprep.subr.mxu0 0.0
    %514 = vmatpush1.msra.mxu0 0.0
    %515 = vmatprep.subr.mxu0 0.0
    %516 = vmatpush1.msra.mxu0 0.0
    %517 = vmatprep.subr.mxu0 0.0
    %518 = vmatpush1.msra.mxu0 0.0
    %519 = vmatprep.subr.mxu0 0.0
    %520 = vmatpush1.msra.mxu0 0.0
    %521 = vmatprep.subr.mxu0 0.0
    %522 = vmatpush1.msra.mxu0 %v486
    %523 = vmatprep.subr.mxu0 0.0
    %524 = vmatpush2.msra.mxu0 0.0
    %525 = vmatprep.subr.mxu0 0.0
    %526 = vmatpush2.msra.mxu0 0.0
    %527 = vmatprep.subr.mxu0 0.0
    %528 = vmatpush2.msra.mxu0 0.0
    %529 = vmatprep.subr.mxu0 0.0
    %530 = vmatpush2.msra.mxu0 0.0
    %531 = vmatprep.subr.mxu0 0.0
    %532 = vmatpush2.msra.mxu0 0.0
    %533 = vmatprep.subr.mxu0 0.0
    %534 = vmatpush2.msra.mxu0 0.0
    %535 = vmatprep.subr.mxu0 0.0
    %536 = vmatpush2.msra.mxu0 0.0
    %537 = vmatprep.subr.mxu0 0.0
    %538 = vmatpush2.msra.mxu0 0.0
    %539 = vmatprep.subr.mxu0 0.0
    %540 = vmatpush2.msra.mxu0 0.0
    %541 = vmatprep.subr.mxu0 0.0
    %542 = vmatpush2.msra.mxu0 0.0
    %543 = vmatprep.subr.mxu0 0.0
    %544 = vmatpush2.msra.mxu0 0.0
    %545 = vmatprep.subr.mxu0 0.0
    %546 = vmatpush2.msra.mxu0 0.0
    %547 = vmatprep.subr.mxu0 0.0
    %548 = vmatpush2.msra.mxu0 0.0
    %549 = vmatprep.subr.mxu0 0.0
    %550 = vmatpush2.msra.mxu0 0.0
    %551 = vmatprep.subr.mxu0 0.0
    %552 = vmatpush2.msra.mxu0 0.0
    %553 = vmatprep.subr.mxu0 0.0
    %554 = vmatpush2.msra.mxu0 0.0
    %555 = vmatprep.mubr.f32.mxu0 0.0
    %556 = vmatmul.mubr.f32.gmra.mxu0 %v489
    %v557 = vpop.f32.mrf.mxu0
    %v558 = vadd.f32 0.0, %v557
    %v559 = vpop.f32.mrf.mxu0
    %560 = vdwg.mxu0
    %561 = vrot.lane.b32.xlu0 %v267, 64
    %v562 = vpop.permute.xlu0 %561
    %v565 = vsel %vm462, %v484, 0
    %567 = vmatprep.subr.mxu0 0.0
    %568 = vmatpush1.msra.mxu0 0.0
    %569 = vmatprep.subr.mxu0 0.0
    %570 = vmatpush1.msra.mxu0 0.0
    %571 = vmatprep.subr.mxu0 0.0
    %572 = vmatpush1.msra.mxu0 0.0
    %573 = vmatprep.subr.mxu0 0.0
    %574 = vmatpush1.msra.mxu0 0.0
    %575 = vmatprep.subr.mxu0 0.0
    %576 = vmatpush1.msra.mxu0 0.0
    %577 = vmatprep.subr.mxu0 0.0
    %578 = vmatpush1.msra.mxu0 0.0
    %579 = vmatprep.subr.mxu0 0.0
    %580 = vmatpush1.msra.mxu0 0.0
    %581 = vmatprep.subr.mxu0 0.0
    %582 = vmatpush1.msra.mxu0 0.0
    %583 = vmatprep.subr.mxu0 0.0
    %584 = vmatpush1.msra.mxu0 0.0
    %585 = vmatprep.subr.mxu0 0.0
    %586 = vmatpush1.msra.mxu0 0.0
    %587 = vmatprep.subr.mxu0 0.0
    %588 = vmatpush1.msra.mxu0 0.0
    %589 = vmatprep.subr.mxu0 0.0
    %590 = vmatpush1.msra.mxu0 0.0
    %591 = vmatprep.subr.mxu0 0.0
    %592 = vmatpush1.msra.mxu0 0.0
    %593 = vmatprep.subr.mxu0 0.0
    %594 = vmatpush1.msra.mxu0 0.0
    %595 = vmatprep.subr.mxu0 0.0
    %596 = vmatpush1.msra.mxu0 0.0
    %597 = vmatprep.subr.mxu0 0.0
    %598 = vmatpush1.msra.mxu0 %v562
    %599 = vmatprep.subr.mxu0 0.0
    %600 = vmatpush2.msra.mxu0 0.0
    %601 = vmatprep.subr.mxu0 0.0
    %602 = vmatpush2.msra.mxu0 0.0
    %603 = vmatprep.subr.mxu0 0.0
    %604 = vmatpush2.msra.mxu0 0.0
    %605 = vmatprep.subr.mxu0 0.0
    %606 = vmatpush2.msra.mxu0 0.0
    %607 = vmatprep.subr.mxu0 0.0
    %608 = vmatpush2.msra.mxu0 0.0
    %609 = vmatprep.subr.mxu0 0.0
    %610 = vmatpush2.msra.mxu0 0.0
    %611 = vmatprep.subr.mxu0 0.0
    %612 = vmatpush2.msra.mxu0 0.0
    %613 = vmatprep.subr.mxu0 0.0
    %614 = vmatpush2.msra.mxu0 0.0
    %615 = vmatprep.subr.mxu0 0.0
    %616 = vmatpush2.msra.mxu0 0.0
    %617 = vmatprep.subr.mxu0 0.0
    %618 = vmatpush2.msra.mxu0 0.0
    %619 = vmatprep.subr.mxu0 0.0
    %620 = vmatpush2.msra.mxu0 0.0
    %621 = vmatprep.subr.mxu0 0.0
    %622 = vmatpush2.msra.mxu0 0.0
    %623 = vmatprep.subr.mxu0 0.0
    %624 = vmatpush2.msra.mxu0 0.0
    %625 = vmatprep.subr.mxu0 0.0
    %626 = vmatpush2.msra.mxu0 0.0
    %627 = vmatprep.subr.mxu0 0.0
    %628 = vmatpush2.msra.mxu0 0.0
    %629 = vmatprep.subr.mxu0 0.0
    %630 = vmatpush2.msra.mxu0 0.0
    %631 = vmatprep.mubr.f32.mxu0 0.0
    %632 = vmatmul.mubr.f32.gmra.mxu0 %v565
    %v633 = vpop.f32.mrf.mxu0
    %v634 = vadd.f32 0.0, %v633
    %v635 = vpop.f32.mrf.mxu0
    %636 = vdwg.mxu0
    %637 = vrot.lane.b32.xlu0 %v264, 112
    %v638 = vpop.permute.xlu0 %637
    %639 = vrot.lane.b32.xlu0 %v264, 80
    %v640 = vpop.permute.xlu0 %639
    %v641 = vsel %vm273, %v638, 0
    %v643 = vsel %vm273, %v640, 0
    %645 = vmatprep.subr.mxu0 0.0
    %646 = vmatpush1.xpose.msra.mxu0 0.0
    %647 = vmatprep.subr.mxu0 0.0
    %648 = vmatpush1.xpose.msra.mxu0 0.0
    %649 = vmatprep.subr.mxu0 0.0
    %650 = vmatpush1.xpose.msra.mxu0 0.0
    %651 = vmatprep.subr.mxu0 0.0
    %652 = vmatpush1.xpose.msra.mxu0 0.0
    %653 = vmatprep.subr.mxu0 0.0
    %654 = vmatpush1.xpose.msra.mxu0 0.0
    %655 = vmatprep.subr.mxu0 0.0
    %656 = vmatpush1.xpose.msra.mxu0 0.0
    %657 = vmatprep.subr.mxu0 0.0
    %658 = vmatpush1.xpose.msra.mxu0 0.0
    %659 = vmatprep.subr.mxu0 0.0
    %660 = vmatpush1.xpose.msra.mxu0 0.0
    %661 = vmatprep.subr.mxu0 0.0
    %662 = vmatpush1.xpose.msra.mxu0 0.0
    %663 = vmatprep.subr.mxu0 0.0
    %664 = vmatpush1.xpose.msra.mxu0 0.0
    %665 = vmatprep.subr.mxu0 0.0
    %666 = vmatpush1.xpose.msra.mxu0 0.0
    %667 = vmatprep.subr.mxu0 0.0
    %668 = vmatpush1.xpose.msra.mxu0 0.0
    %669 = vmatprep.subr.mxu0 0.0
    %670 = vmatpush1.xpose.msra.mxu0 0.0
    %671 = vmatprep.subr.mxu0 0.0
    %672 = vmatpush1.xpose.msra.mxu0 0.0
    %673 = vmatprep.subr.mxu0 0.0
    %674 = vmatpush1.xpose.msra.mxu0 0.0
    %675 = vmatprep.subr.mxu0 0.0
    %676 = vmatpush1.xpose.msra.mxu0 %v643
    %677 = vmatprep.subr.mxu0 0.0
    %678 = vmatpush2.xpose.msra.mxu0 0.0
    %679 = vmatprep.subr.mxu0 0.0
    %680 = vmatpush2.xpose.msra.mxu0 0.0
    %681 = vmatprep.subr.mxu0 0.0
    %682 = vmatpush2.xpose.msra.mxu0 0.0
    %683 = vmatprep.subr.mxu0 0.0
    %684 = vmatpush2.xpose.msra.mxu0 0.0
    %685 = vmatprep.subr.mxu0 0.0
    %686 = vmatpush2.xpose.msra.mxu0 0.0
    %687 = vmatprep.subr.mxu0 0.0
    %688 = vmatpush2.xpose.msra.mxu0 0.0
    %689 = vmatprep.subr.mxu0 0.0
    %690 = vmatpush2.xpose.msra.mxu0 0.0
    %691 = vmatprep.subr.mxu0 0.0
    %692 = vmatpush2.xpose.msra.mxu0 0.0
    %693 = vmatprep.subr.mxu0 0.0
    %694 = vmatpush2.xpose.msra.mxu0 0.0
    %695 = vmatprep.subr.mxu0 0.0
    %696 = vmatpush2.xpose.msra.mxu0 0.0
    %697 = vmatprep.subr.mxu0 0.0
    %698 = vmatpush2.xpose.msra.mxu0 0.0
    %699 = vmatprep.subr.mxu0 0.0
    %700 = vmatpush2.xpose.msra.mxu0 0.0
    %701 = vmatprep.subr.mxu0 0.0
    %702 = vmatpush2.xpose.msra.mxu0 0.0
    %703 = vmatprep.subr.mxu0 0.0
    %704 = vmatpush2.xpose.msra.mxu0 0.0
    %705 = vmatprep.subr.mxu0 0.0
    %706 = vmatpush2.xpose.msra.mxu0 0.0
    %707 = vmatprep.subr.mxu0 0.0
    %708 = vmatpush2.xpose.msra.mxu0 0.0
    %709 = vmatprep.mubr.f32.mxu0 0.0
    %710 = vmatmul.mubr.f32.gmra.mxu0 %v641
    %v711 = vpop.f32.mrf.mxu0
    %v712 = vadd.f32 0.0, %v711
    %v713 = vpop.f32.mrf.mxu0
    %714 = vdwg.mxu0
    %715 = vrot.lane.b32.xlu0 %v267, 112
    %v716 = vpop.permute.xlu0 %715
    %717 = vrot.lane.b32.xlu0 %v267, 80
    %v718 = vpop.permute.xlu0 %717
    %v719 = vsel %vm273, %v716, 0
    %v721 = vsel %vm273, %v718, 0
    %723 = vmatprep.subr.mxu0 0.0
    %724 = vmatpush1.xpose.msra.mxu0 0.0
    %725 = vmatprep.subr.mxu0 0.0
    %726 = vmatpush1.xpose.msra.mxu0 0.0
    %727 = vmatprep.subr.mxu0 0.0
    %728 = vmatpush1.xpose.msra.mxu0 0.0
    %729 = vmatprep.subr.mxu0 0.0
    %730 = vmatpush1.xpose.msra.mxu0 0.0
    %731 = vmatprep.subr.mxu0 0.0
    %732 = vmatpush1.xpose.msra.mxu0 0.0
    %733 = vmatprep.subr.mxu0 0.0
    %734 = vmatpush1.xpose.msra.mxu0 0.0
    %735 = vmatprep.subr.mxu0 0.0
    %736 = vmatpush1.xpose.msra.mxu0 0.0
    %737 = vmatprep.subr.mxu0 0.0
    %738 = vmatpush1.xpose.msra.mxu0 0.0
    %739 = vmatprep.subr.mxu0 0.0
    %740 = vmatpush1.xpose.msra.mxu0 0.0
    %741 = vmatprep.subr.mxu0 0.0
    %742 = vmatpush1.xpose.msra.mxu0 0.0
    %743 = vmatprep.subr.mxu0 0.0
    %744 = vmatpush1.xpose.msra.mxu0 0.0
    %745 = vmatprep.subr.mxu0 0.0
    %746 = vmatpush1.xpose.msra.mxu0 0.0
    %747 = vmatprep.subr.mxu0 0.0
    %748 = vmatpush1.xpose.msra.mxu0 0.0
    %749 = vmatprep.subr.mxu0 0.0
    %750 = vmatpush1.xpose.msra.mxu0 0.0
    %751 = vmatprep.subr.mxu0 0.0
    %752 = vmatpush1.xpose.msra.mxu0 0.0
    %753 = vmatprep.subr.mxu0 0.0
    %754 = vmatpush1.xpose.msra.mxu0 %v721
    %755 = vmatprep.subr.mxu0 0.0
    %756 = vmatpush2.xpose.msra.mxu0 0.0
    %757 = vmatprep.subr.mxu0 0.0
    %758 = vmatpush2.xpose.msra.mxu0 0.0
    %759 = vmatprep.subr.mxu0 0.0
    %760 = vmatpush2.xpose.msra.mxu0 0.0
    %761 = vmatprep.subr.mxu0 0.0
    %762 = vmatpush2.xpose.msra.mxu0 0.0
    %763 = vmatprep.subr.mxu0 0.0
    %764 = vmatpush2.xpose.msra.mxu0 0.0
    %765 = vmatprep.subr.mxu0 0.0
    %766 = vmatpush2.xpose.msra.mxu0 0.0
    %767 = vmatprep.subr.mxu0 0.0
    %768 = vmatpush2.xpose.msra.mxu0 0.0
    %769 = vmatprep.subr.mxu0 0.0
    %770 = vmatpush2.xpose.msra.mxu0 0.0
    %771 = vmatprep.subr.mxu0 0.0
    %772 = vmatpush2.xpose.msra.mxu0 0.0
    %773 = vmatprep.subr.mxu0 0.0
    %774 = vmatpush2.xpose.msra.mxu0 0.0
    %775 = vmatprep.subr.mxu0 0.0
    %776 = vmatpush2.xpose.msra.mxu0 0.0
    %777 = vmatprep.subr.mxu0 0.0
    %778 = vmatpush2.xpose.msra.mxu0 0.0
    %779 = vmatprep.subr.mxu0 0.0
    %780 = vmatpush2.xpose.msra.mxu0 0.0
    %781 = vmatprep.subr.mxu0 0.0
    %782 = vmatpush2.xpose.msra.mxu0 0.0
    %783 = vmatprep.subr.mxu0 0.0
    %784 = vmatpush2.xpose.msra.mxu0 0.0
    %785 = vmatprep.subr.mxu0 0.0
    %786 = vmatpush2.xpose.msra.mxu0 0.0
    %787 = vmatprep.mubr.f32.mxu0 0.0
    %788 = vmatmul.mubr.f32.gmra.mxu0 %v719
    %v789 = vpop.f32.mrf.mxu0
    %v790 = vadd.f32 0.0, %v789
    %v791 = vpop.f32.mrf.mxu0
    %792 = vdwg.mxu0
    %v793 = vmul.f32 %v712, 0.25
    %v794 = vmul.f32 %v790, 0.25
    %v795 = vadd.f32 %v793, %v453
    %v796 = vadd.f32 %v794, %v457
    %v797 = vsel %vm462, %v795, -inf
    %798 = vmax.xlane.f32.xlu0 %v797
    %v799 = vpop.xlane.xlu0 %798
    %v800 = vsel %vm462, %v796, -inf
    %801 = vmax.xlane.f32.xlu0 %v800
    %v802 = vpop.xlane.xlu0 %801
    %v803 = vsub.f32 %v795, %v799
    %v804 = vsub.f32 %v796, %v802
    %v805 = vmul.f32 %v803, 1.442695
    %v806 = vpow.pop %v805
    %v807 = vmul.f32 %v804, 1.442695
    %v808 = vpow.pop %v807
    %v809 = vsel %vm462, %v806, 0.0
    %810 = vadd.xlane.f32.xlu0 %v809
    %v811 = vpop.xlane.xlu0 %810
    %v812 = vsel %vm462, %v808, 0.0
    %813 = vadd.xlane.f32.xlu0 %v812
    %v814 = vpop.xlane.xlu0 %813
    %v815 = vrcp.pop %v811
    %v816 = vmul.f32 %v806, %v815
    %v817 = vrcp.pop %v814
    %v818 = vmul.f32 %v808, %v817
    %819 = vrot.lane.b32.xlu0 %v264, 48
    %v820 = vpop.permute.xlu0 %819
    %v823 = vsel %vm462, %v816, 0
    %825 = vmatprep.subr.mxu0 0.0
    %826 = vmatpush1.msra.mxu0 0.0
    %827 = vmatprep.subr.mxu0 0.0
    %828 = vmatpush1.msra.mxu0 0.0
    %829 = vmatprep.subr.mxu0 0.0
    %830 = vmatpush1.msra.mxu0 0.0
    %831 = vmatprep.subr.mxu0 0.0
    %832 = vmatpush1.msra.mxu0 0.0
    %833 = vmatprep.subr.mxu0 0.0
    %834 = vmatpush1.msra.mxu0 0.0
    %835 = vmatprep.subr.mxu0 0.0
    %836 = vmatpush1.msra.mxu0 0.0
    %837 = vmatprep.subr.mxu0 0.0
    %838 = vmatpush1.msra.mxu0 0.0
    %839 = vmatprep.subr.mxu0 0.0
    %840 = vmatpush1.msra.mxu0 0.0
    %841 = vmatprep.subr.mxu0 0.0
    %842 = vmatpush1.msra.mxu0 0.0
    %843 = vmatprep.subr.mxu0 0.0
    %844 = vmatpush1.msra.mxu0 0.0
    %845 = vmatprep.subr.mxu0 0.0
    %846 = vmatpush1.msra.mxu0 0.0
    %847 = vmatprep.subr.mxu0 0.0
    %848 = vmatpush1.msra.mxu0 0.0
    %849 = vmatprep.subr.mxu0 0.0
    %850 = vmatpush1.msra.mxu0 0.0
    %851 = vmatprep.subr.mxu0 0.0
    %852 = vmatpush1.msra.mxu0 0.0
    %853 = vmatprep.subr.mxu0 0.0
    %854 = vmatpush1.msra.mxu0 0.0
    %855 = vmatprep.subr.mxu0 0.0
    %856 = vmatpush1.msra.mxu0 %v820
    %857 = vmatprep.subr.mxu0 0.0
    %858 = vmatpush2.msra.mxu0 0.0
    %859 = vmatprep.subr.mxu0 0.0
    %860 = vmatpush2.msra.mxu0 0.0
    %861 = vmatprep.subr.mxu0 0.0
    %862 = vmatpush2.msra.mxu0 0.0
    %863 = vmatprep.subr.mxu0 0.0
    %864 = vmatpush2.msra.mxu0 0.0
    %865 = vmatprep.subr.mxu0 0.0
    %866 = vmatpush2.msra.mxu0 0.0
    %867 = vmatprep.subr.mxu0 0.0
    %868 = vmatpush2.msra.mxu0 0.0
    %869 = vmatprep.subr.mxu0 0.0
    %870 = vmatpush2.msra.mxu0 0.0
    %871 = vmatprep.subr.mxu0 0.0
    %872 = vmatpush2.msra.mxu0 0.0
    %873 = vmatprep.subr.mxu0 0.0
    %874 = vmatpush2.msra.mxu0 0.0
    %875 = vmatprep.subr.mxu0 0.0
    %876 = vmatpush2.msra.mxu0 0.0
    %877 = vmatprep.subr.mxu0 0.0
    %878 = vmatpush2.msra.mxu0 0.0
    %879 = vmatprep.subr.mxu0 0.0
    %880 = vmatpush2.msra.mxu0 0.0
    %881 = vmatprep.subr.mxu0 0.0
    %882 = vmatpush2.msra.mxu0 0.0
    %883 = vmatprep.subr.mxu0 0.0
    %884 = vmatpush2.msra.mxu0 0.0
    %885 = vmatprep.subr.mxu0 0.0
    %886 = vmatpush2.msra.mxu0 0.0
    %887 = vmatprep.subr.mxu0 0.0
    %888 = vmatpush2.msra.mxu0 0.0
    %889 = vmatprep.mubr.f32.mxu0 0.0
    %890 = vmatmul.mubr.f32.gmra.mxu0 %v823
    %v891 = vpop.f32.mrf.mxu0
    %v892 = vadd.f32 0.0, %v891
    %v893 = vpop.f32.mrf.mxu0
    %894 = vdwg.mxu0
    %895 = vrot.lane.b32.xlu0 %v267, 48
    %v896 = vpop.permute.xlu0 %895
    %v899 = vsel %vm462, %v818, 0
    %901 = vmatprep.subr.mxu0 0.0
    %902 = vmatpush1.msra.mxu0 0.0
    %903 = vmatprep.subr.mxu0 0.0
    %904 = vmatpush1.msra.mxu0 0.0
    %905 = vmatprep.subr.mxu0 0.0
    %906 = vmatpush1.msra.mxu0 0.0
    %907 = vmatprep.subr.mxu0 0.0
    %908 = vmatpush1.msra.mxu0 0.0
    %909 = vmatprep.subr.mxu0 0.0
    %910 = vmatpush1.msra.mxu0 0.0
    %911 = vmatprep.subr.mxu0 0.0
    %912 = vmatpush1.msra.mxu0 0.0
    %913 = vmatprep.subr.mxu0 0.0
    %914 = vmatpush1.msra.mxu0 0.0
    %915 = vmatprep.subr.mxu0 0.0
    %916 = vmatpush1.msra.mxu0 0.0
    %917 = vmatprep.subr.mxu0 0.0
    %918 = vmatpush1.msra.mxu0 0.0
    %919 = vmatprep.subr.mxu0 0.0
    %920 = vmatpush1.msra.mxu0 0.0
    %921 = vmatprep.subr.mxu0 0.0
    %922 = vmatpush1.msra.mxu0 0.0
    %923 = vmatprep.subr.mxu0 0.0
    %924 = vmatpush1.msra.mxu0 0.0
    %925 = vmatprep.subr.mxu0 0.0
    %926 = vmatpush1.msra.mxu0 0.0
    %927 = vmatprep.subr.mxu0 0.0
    %928 = vmatpush1.msra.mxu0 0.0
    %929 = vmatprep.subr.mxu0 0.0
    %930 = vmatpush1.msra.mxu0 0.0
    %931 = vmatprep.subr.mxu0 0.0
    %932 = vmatpush1.msra.mxu0 %v896
    %933 = vmatprep.subr.mxu0 0.0
    %934 = vmatpush2.msra.mxu0 0.0
    %935 = vmatprep.subr.mxu0 0.0
    %936 = vmatpush2.msra.mxu0 0.0
    %937 = vmatprep.subr.mxu0 0.0
    %938 = vmatpush2.msra.mxu0 0.0
    %939 = vmatprep.subr.mxu0 0.0
    %940 = vmatpush2.msra.mxu0 0.0
    %941 = vmatprep.subr.mxu0 0.0
    %942 = vmatpush2.msra.mxu0 0.0
    %943 = vmatprep.subr.mxu0 0.0
    %944 = vmatpush2.msra.mxu0 0.0
    %945 = vmatprep.subr.mxu0 0.0
    %946 = vmatpush2.msra.mxu0 0.0
    %947 = vmatprep.subr.mxu0 0.0
    %948 = vmatpush2.msra.mxu0 0.0
    %949 = vmatprep.subr.mxu0 0.0
    %950 = vmatpush2.msra.mxu0 0.0
    %951 = vmatprep.subr.mxu0 0.0
    %952 = vmatpush2.msra.mxu0 0.0
    %953 = vmatprep.subr.mxu0 0.0
    %954 = vmatpush2.msra.mxu0 0.0
    %955 = vmatprep.subr.mxu0 0.0
    %956 = vmatpush2.msra.mxu0 0.0
    %957 = vmatprep.subr.mxu0 0.0
    %958 = vmatpush2.msra.mxu0 0.0
    %959 = vmatprep.subr.mxu0 0.0
    %960 = vmatpush2.msra.mxu0 0.0
    %961 = vmatprep.subr.mxu0 0.0
    %962 = vmatpush2.msra.mxu0 0.0
    %963 = vmatprep.subr.mxu0 0.0
    %964 = vmatpush2.msra.mxu0 0.0
    %965 = vmatprep.mubr.f32.mxu0 0.0
    %966 = vmatmul.mubr.f32.gmra.mxu0 %v899
    %v967 = vpop.f32.mrf.mxu0
    %v968 = vadd.f32 0.0, %v967
    %v969 = vpop.f32.mrf.mxu0
    %970 = vdwg.mxu0
    %973 = vrot.lane.b32.xlu0 %v892, 16
    %v974 = vpop.permute.xlu0 %973
    %975 = vrot.lane.b32.xlu0 %v968, 16
    %v976 = vpop.permute.xlu0 %975
    %v979 = vsel %vm273, %v558, %v974
    %v980 = vsel %vm273, %v634, %v976
    %v981 = vld [vmem:[%s9] sm:$0xff]
    %v982 = vld [vmem:[%s9 + $0x8] sm:$0xff]
    %v983 = vld [vmem:[%s9 + $0x10] sm:$0xff]
    %v984 = vld [vmem:[%s9 + $0x18] sm:$0xff]
    %v985 = vpack.c.bf16 %v980, %v979
    %v986 = vpack.c.bf16 %v982, %v981
    %v987 = vpack.c.bf16 %v984, %v983
    %v988 = vld [vmem:[%s10] sm:$0x1]
    %v990 = vlaneseq
    %v991 = vshrl.u32 %v990, 7
    %v992 = vsub.s32 0, %v991
    %v993 = vrot.slane %v988, %v992
    %v996 = vsel %vm164, %v985, 0
    %998 = vmatprep.subr.bf16.mxu0 0
    %999 = vmatpush1.bf16.msra.mxu0 0
    %1000 = vmatprep.subr.bf16.mxu0 0
    %1001 = vmatpush1.bf16.msra.mxu0 0
    %1002 = vmatprep.subr.bf16.mxu0 0
    %1003 = vmatpush1.bf16.msra.mxu0 0
    %1004 = vmatprep.subr.bf16.mxu0 0
    %1005 = vmatpush1.bf16.msra.mxu0 0
    %1006 = vmatprep.subr.bf16.mxu0 0
    %1007 = vmatpush1.bf16.msra.mxu0 0
    %1008 = vmatprep.subr.bf16.mxu0 0
    %1009 = vmatpush1.bf16.msra.mxu0 0
    %1010 = vmatprep.subr.bf16.mxu0 0
    %1011 = vmatpush1.bf16.msra.mxu0 %v987
    %1012 = vmatprep.subr.bf16.mxu0 0
    %1013 = vmatpush1.bf16.msra.mxu0 %v986
    %1014 = vmatprep.subr.bf16.mxu0 0
    %1015 = vmatpush2.bf16.msra.mxu0 0
    %1016 = vmatprep.subr.bf16.mxu0 0
    %1017 = vmatpush2.bf16.msra.mxu0 0
    %1018 = vmatprep.subr.bf16.mxu0 0
    %1019 = vmatpush2.bf16.msra.mxu0 0
    %1020 = vmatprep.subr.bf16.mxu0 0
    %1021 = vmatpush2.bf16.msra.mxu0 0
    %1022 = vmatprep.subr.bf16.mxu0 0
    %1023 = vmatpush2.bf16.msra.mxu0 0
    %1024 = vmatprep.subr.bf16.mxu0 0
    %1025 = vmatpush2.bf16.msra.mxu0 0
    %1026 = vmatprep.subr.bf16.mxu0 0
    %1027 = vmatpush2.bf16.msra.mxu0 0
    %1028 = vmatprep.subr.bf16.mxu0 0
    %1029 = vmatpush2.bf16.msra.mxu0 0
    %1030 = vmatprep.mubr.bf16.mxu0 0
    %1031 = vmatmul.mubr.bf16.gmra.mxu0 %v996
    %v1032 = vpop.f32.mrf.mxu0
    %v1033 = vadd.f32 %v993, %v1032
    %v1034 = vpop.f32.mrf.mxu0
    %v1035 = vpop.f32.mrf.mxu0
    %v1036 = vadd.f32 %v993, %v1035
    %v1037 = vpop.f32.mrf.mxu0
    %1038 = vdwg.mxu0
    %v1039 = vadd.f32 %v1033, %v206
    %v1040 = vadd.f32 %v1036, %v207
    %v1041 = vld [vmem:[%s11] sm:$0x1]
    %v1042 = vld [vmem:[%s12] sm:$0x1]
    %v1043 = vsel %vm164, %v1039, 0.0
    %1044 = vadd.xlane.f32.xlu0 %v1043
    %v1045 = vpop.xlane.xlu0 %1044
    %v1046 = vsel %vm164, %v1040, 0.0
    %1047 = vadd.xlane.f32.xlu0 %v1046
    %v1048 = vpop.xlane.xlu0 %1047
    %v1049 = vmul.f32 %v1045, %v171
    %v1050 = vmul.f32 %v1048, %v171
    %v1051 = vsub.f32 %v1039, %v1049
    %v1052 = vsub.f32 %v1040, %v1050
    %v1053 = vmul.f32 %v1051, %v1051
    %v1054 = vmul.f32 %v1052, %v1052
    %v1055 = vsel %vm164, %v1053, 0.0
    %1056 = vadd.xlane.f32.xlu0 %v1055
    %v1057 = vpop.xlane.xlu0 %1056
    %v1058 = vsel %vm164, %v1054, 0.0
    %1059 = vadd.xlane.f32.xlu0 %v1058
    %v1060 = vpop.xlane.xlu0 %1059
    %v1061 = vmul.f32 %v1057, %v171
    %v1062 = vmul.f32 %v1060, %v171
    %v1063 = vadd.f32 %v1061, 1e-12
    %v1064 = vadd.f32 %v1062, 1e-12
    %v1065 = vrsqrt.pop %v1063
    %v1066 = vrsqrt.pop %v1064
    %v1067 = vmul.f32 %v1051, %v1065
    %v1068 = vmul.f32 %v1052, %v1066
    %v1070 = vlaneseq
    %v1071 = vshrl.u32 %v1070, 7
    %v1072 = vsub.s32 0, %v1071
    %v1073 = vrot.slane %v1041, %v1072
    %v1075 = vmul.f32 %v1067, %v1073
    %v1076 = vmul.f32 %v1068, %v1073
    %v1078 = vlaneseq
    %v1079 = vshrl.u32 %v1078, 7
    %v1080 = vsub.s32 0, %v1079
    %v1081 = vrot.slane %v1042, %v1080
    %v1083 = vadd.f32 %v1075, %v1081
    %v1084 = vadd.f32 %v1076, %v1081
    %v1085 = vld [vmem:[%s13] sm:$0xff]
    %v1086 = vld [vmem:[%s13 + $0x8] sm:$0xff]
    %v1087 = vld [vmem:[%s13 + $0x10] sm:$0xff]
    %v1088 = vld [vmem:[%s13 + $0x18] sm:$0xff]
    %v1089 = vpack.c.bf16 %v1084, %v1083
    %v1090 = vpack.c.bf16 %v1086, %v1085
    %v1091 = vpack.c.bf16 %v1088, %v1087
    %v1092 = vld [vmem:[%s14] sm:$0x1]
    %v1094 = vlaneseq
    %v1095 = vshrl.u32 %v1094, 7
    %v1096 = vsub.s32 0, %v1095
    %v1097 = vrot.slane %v1092, %v1096
    %v1100 = vsel %vm164, %v1089, 0
    %1102 = vmatprep.subr.bf16.mxu0 0
    %1103 = vmatpush1.bf16.msra.mxu0 0
    %1104 = vmatprep.subr.bf16.mxu0 0
    %1105 = vmatpush1.bf16.msra.mxu0 0
    %1106 = vmatprep.subr.bf16.mxu0 0
    %1107 = vmatpush1.bf16.msra.mxu0 0
    %1108 = vmatprep.subr.bf16.mxu0 0
    %1109 = vmatpush1.bf16.msra.mxu0 0
    %1110 = vmatprep.subr.bf16.mxu0 0
    %1111 = vmatpush1.bf16.msra.mxu0 0
    %1112 = vmatprep.subr.bf16.mxu0 0
    %1113 = vmatpush1.bf16.msra.mxu0 0
    %1114 = vmatprep.subr.bf16.mxu0 0
    %1115 = vmatpush1.bf16.msra.mxu0 %v1091
    %1116 = vmatprep.subr.bf16.mxu0 0
    %1117 = vmatpush1.bf16.msra.mxu0 %v1090
    %1118 = vmatprep.subr.bf16.mxu0 0
    %1119 = vmatpush2.bf16.msra.mxu0 0
    %1120 = vmatprep.subr.bf16.mxu0 0
    %1121 = vmatpush2.bf16.msra.mxu0 0
    %1122 = vmatprep.subr.bf16.mxu0 0
    %1123 = vmatpush2.bf16.msra.mxu0 0
    %1124 = vmatprep.subr.bf16.mxu0 0
    %1125 = vmatpush2.bf16.msra.mxu0 0
    %1126 = vmatprep.subr.bf16.mxu0 0
    %1127 = vmatpush2.bf16.msra.mxu0 0
    %1128 = vmatprep.subr.bf16.mxu0 0
    %1129 = vmatpush2.bf16.msra.mxu0 0
    %1130 = vmatprep.subr.bf16.mxu0 0
    %1131 = vmatpush2.bf16.msra.mxu0 0
    %1132 = vmatprep.subr.bf16.mxu0 0
    %1133 = vmatpush2.bf16.msra.mxu0 0
    %1134 = vmatprep.mubr.bf16.mxu0 0
    %1135 = vmatmul.mubr.bf16.gmra.mxu0 %v1100
    %v1136 = vpop.f32.mrf.mxu0
    %v1137 = vadd.f32 %v1097, %v1136
    %v1138 = vpop.f32.mrf.mxu0
    %v1139 = vpop.f32.mrf.mxu0
    %v1140 = vadd.f32 %v1097, %v1139
    %v1141 = vpop.f32.mrf.mxu0
    %1142 = vdwg.mxu0
    %v1143 = vmul.f32 %v1137, 0.5
    %v1144 = vmul.f32 %v1140, 0.5
    %v1145 = vmul.f32 %v1137, 0.044715
    %v1146 = vmul.f32 %v1140, 0.044715
    %v1147 = vmul.f32 %v1145, %v1137
    %v1148 = vmul.f32 %v1146, %v1140
    %v1149 = vmul.f32 %v1147, %v1137
    %v1150 = vmul.f32 %v1148, %v1140
    %v1151 = vadd.f32 %v1137, %v1149
    %v1152 = vadd.f32 %v1140, %v1150
    %v1153 = vmul.f32 %v1151, 0.7978846
    %v1154 = vmul.f32 %v1152, 0.7978846
    %v1155 = vtanh.pop %v1153
    %v1156 = vtanh.pop %v1154
    %v1157 = vadd.f32 %v1155, 1.0
    %v1158 = vadd.f32 %v1156, 1.0
    %v1159 = vmul.f32 %v1143, %v1157
    %v1160 = vmul.f32 %v1144, %v1158
    %v1161 = vld [vmem:[%s15] sm:$0xff]
    %v1162 = vld [vmem:[%s15 + $0x8] sm:$0xff]
    %v1163 = vld [vmem:[%s15 + $0x10] sm:$0xff]
    %v1164 = vld [vmem:[%s15 + $0x18] sm:$0xff]
    %v1165 = vld [vmem:[%s15 + $0x20] sm:$0xff]
    %v1166 = vld [vmem:[%s15 + $0x28] sm:$0xff]
    %v1167 = vld [vmem:[%s15 + $0x30] sm:$0xff]
    %v1168 = vld [vmem:[%s15 + $0x38] sm:$0xff]
    %v1169 = vpack.c.bf16 %v1160, %v1159
    %v1170 = vpack.c.bf16 %v1162, %v1161
    %v1171 = vpack.c.bf16 %v1164, %v1163
    %v1172 = vpack.c.bf16 %v1166, %v1165
    %v1173 = vpack.c.bf16 %v1168, %v1167
    %v1174 = vld [vmem:[%s16] sm:$0x1]
    %v1176 = vlaneseq
    %v1177 = vshrl.u32 %v1176, 7
    %v1178 = vsub.s32 0, %v1177
    %v1179 = vrot.slane %v1174, %v1178
    %vm1181 = vcmask 523264
    %v1183 = vsel %vm1181, %v1169, 0
    %1185 = vmatprep.subr.bf16.mxu0 0
    %1186 = vmatpush1.bf16.msra.mxu0 0
    %1187 = vmatprep.subr.bf16.mxu0 0
    %1188 = vmatpush1.bf16.msra.mxu0 0
    %1189 = vmatprep.subr.bf16.mxu0 0
    %1190 = vmatpush1.bf16.msra.mxu0 0
    %1191 = vmatprep.subr.bf16.mxu0 0
    %1192 = vmatpush1.bf16.msra.mxu0 0
    %1193 = vmatprep.subr.bf16.mxu0 0
    %1194 = vmatpush1.bf16.msra.mxu0 %v1173
    %1195 = vmatprep.subr.bf16.mxu0 0
    %1196 = vmatpush1.bf16.msra.mxu0 %v1172
    %1197 = vmatprep.subr.bf16.mxu0 0
    %1198 = vmatpush1.bf16.msra.mxu0 %v1171
    %1199 = vmatprep.subr.bf16.mxu0 0
    %1200 = vmatpush1.bf16.msra.mxu0 %v1170
    %1201 = vmatprep.subr.bf16.mxu0 0
    %1202 = vmatpush2.bf16.msra.mxu0 0
    %1203 = vmatprep.subr.bf16.mxu0 0
    %1204 = vmatpush2.bf16.msra.mxu0 0
    %1205 = vmatprep.subr.bf16.mxu0 0
    %1206 = vmatpush2.bf16.msra.mxu0 0
    %1207 = vmatprep.subr.bf16.mxu0 0
    %1208 = vmatpush2.bf16.msra.mxu0 0
    %1209 = vmatprep.subr.bf16.mxu0 0
    %1210 = vmatpush2.bf16.msra.mxu0 0
    %1211 = vmatprep.subr.bf16.mxu0 0
    %1212 = vmatpush2.bf16.msra.mxu0 0
    %1213 = vmatprep.subr.bf16.mxu0 0
    %1214 = vmatpush2.bf16.msra.mxu0 0
    %1215 = vmatprep.subr.bf16.mxu0 0
    %1216 = vmatpush2.bf16.msra.mxu0 0
    %1217 = vmatprep.mubr.bf16.mxu0 0
    %1218 = vmatmul.mubr.bf16.gmra.mxu0 %v1183
    %v1219 = vpop.f32.mrf.mxu0
    %v1220 = vadd.f32 %v1179, %v1219
    %v1221 = vpop.f32.mrf.mxu0
    %v1222 = vpop.f32.mrf.mxu0
    %v1223 = vadd.f32 %v1179, %v1222
    %v1224 = vpop.f32.mrf.mxu0
    %1225 = vdwg.mxu0
    %v1226 = vadd.f32 %v1220, %v1083
    %v1227 = vadd.f32 %v1223, %v1084
    %v1228 = vld [vmem:[%s17] sm:$0x1]
    %v1229 = vld [vmem:[%s18] sm:$0x1]
    %v1230 = vsel %vm164, %v1226, 0.0
    %1231 = vadd.xlane.f32.xlu0 %v1230
    %v1232 = vpop.xlane.xlu0 %1231
    %v1233 = vsel %vm164, %v1227, 0.0
    %1234 = vadd.xlane.f32.xlu0 %v1233
    %v1235 = vpop.xlane.xlu0 %1234
    %v1236 = vmul.f32 %v1232, %v171
    %v1237 = vmul.f32 %v1235, %v171
    %v1238 = vsub.f32 %v1226, %v1236
    %v1239 = vsub.f32 %v1227, %v1237
    %v1240 = vmul.f32 %v1238, %v1238
    %v1241 = vmul.f32 %v1239, %v1239
    %v1242 = vsel %vm164, %v1240, 0.0
    %1243 = vadd.xlane.f32.xlu0 %v1242
    %v1244 = vpop.xlane.xlu0 %1243
    %v1245 = vsel %vm164, %v1241, 0.0
    %1246 = vadd.xlane.f32.xlu0 %v1245
    %v1247 = vpop.xlane.xlu0 %1246
    %v1248 = vmul.f32 %v1244, %v171
    %v1249 = vmul.f32 %v1247, %v171
    %v1250 = vadd.f32 %v1248, 1e-12
    %v1251 = vadd.f32 %v1249, 1e-12
    %v1252 = vrsqrt.pop %v1250
    %v1253 = vrsqrt.pop %v1251
    %v1254 = vmul.f32 %v1238, %v1252
    %v1255 = vmul.f32 %v1239, %v1253
    %v1257 = vlaneseq
    %v1258 = vshrl.u32 %v1257, 7
    %v1259 = vsub.s32 0, %v1258
    %v1260 = vrot.slane %v1228, %v1259
    %v1262 = vmul.f32 %v1254, %v1260
    %v1263 = vmul.f32 %v1255, %v1260
    %v1265 = vlaneseq
    %v1266 = vshrl.u32 %v1265, 7
    %v1267 = vsub.s32 0, %v1266
    %v1268 = vrot.slane %v1229, %v1267
    %v1270 = vadd.f32 %v1262, %v1268
    %v1271 = vadd.f32 %v1263, %v1268
    %s1272 = scalar_lea.vmem %s7, 32
    %v1273 = vld [vmem:[%s1272] sm:$0xff]
    %v1274 = vld [vmem:[%s1272 + $0x8] sm:$0xff]
    %v1275 = vld [vmem:[%s1272 + $0x10] sm:$0xff]
    %v1276 = vld [vmem:[%s1272 + $0x18] sm:$0xff]
    %v1277 = vpack.c.bf16 %v1271, %v1270
    %v1278 = vpack.c.bf16 %v1274, %v1273
    %v1279 = vpack.c.bf16 %v1276, %v1275
    %s1280 = scalar_lea.vmem %s8, 1
    %v1281 = vld [vmem:[%s1280] sm:$0x1]
    %v1283 = vlaneseq
    %v1284 = vshrl.u32 %v1283, 7
    %v1285 = vsub.s32 0, %v1284
    %v1286 = vrot.slane %v1281, %v1285
    %v1289 = vsel %vm164, %v1277, 0
    %1291 = vmatprep.subr.bf16.mxu0 0
    %1292 = vmatpush1.bf16.msra.mxu0 0
    %1293 = vmatprep.subr.bf16.mxu0 0
    %1294 = vmatpush1.bf16.msra.mxu0 0
    %1295 = vmatprep.subr.bf16.mxu0 0
    %1296 = vmatpush1.bf16.msra.mxu0 0
    %1297 = vmatprep.subr.bf16.mxu0 0
    %1298 = vmatpush1.bf16.msra.mxu0 0
    %1299 = vmatprep.subr.bf16.mxu0 0
    %1300 = vmatpush1.bf16.msra.mxu0 0
    %1301 = vmatprep.subr.bf16.mxu0 0
    %1302 = vmatpush1.bf16.msra.mxu0 0
    %1303 = vmatprep.subr.bf16.mxu0 0
    %1304 = vmatpush1.bf16.msra.mxu0 %v1279
    %1305 = vmatprep.subr.bf16.mxu0 0
    %1306 = vmatpush1.bf16.msra.mxu0 %v1278
    %1307 = vmatprep.subr.bf16.mxu0 0
    %1308 = vmatpush2.bf16.msra.mxu0 0
    %1309 = vmatprep.subr.bf16.mxu0 0
    %1310 = vmatpush2.bf16.msra.mxu0 0
    %1311 = vmatprep.subr.bf16.mxu0 0
    %1312 = vmatpush2.bf16.msra.mxu0 0
    %1313 = vmatprep.subr.bf16.mxu0 0
    %1314 = vmatpush2.bf16.msra.mxu0 0
    %1315 = vmatprep.subr.bf16.mxu0 0
    %1316 = vmatpush2.bf16.msra.mxu0 0
    %1317 = vmatprep.subr.bf16.mxu0 0
    %1318 = vmatpush2.bf16.msra.mxu0 0
    %1319 = vmatprep.subr.bf16.mxu0 0
    %1320 = vmatpush2.bf16.msra.mxu0 0
    %1321 = vmatprep.subr.bf16.mxu0 0
    %1322 = vmatpush2.bf16.msra.mxu0 0
    %1323 = vmatprep.mubr.bf16.mxu0 0
    %1324 = vmatmul.mubr.bf16.gmra.mxu0 %v1289
    %v1325 = vpop.f32.mrf.mxu0
    %v1326 = vadd.f32 %v1286, %v1325
    %v1327 = vpop.f32.mrf.mxu0
    %v1328 = vpop.f32.mrf.mxu0
    %v1329 = vadd.f32 %v1286, %v1328
    %v1330 = vpop.f32.mrf.mxu0
    %1331 = vdwg.mxu0
    %1333 = vrot.lane.b32.xlu0 %v1326, 96
    %v1334 = vpop.permute.xlu0 %1333
    %v1335 = vsel %vm273, %v1326, 0
    %v1337 = vsel %vm273, %v1334, 0
    %1339 = vmatprep.subr.mxu0 0.0
    %1340 = vmatpush1.xpose.msra.mxu0 0.0
    %1341 = vmatprep.subr.mxu0 0.0
    %1342 = vmatpush1.xpose.msra.mxu0 0.0
    %1343 = vmatprep.subr.mxu0 0.0
    %1344 = vmatpush1.xpose.msra.mxu0 0.0
    %1345 = vmatprep.subr.mxu0 0.0
    %1346 = vmatpush1.xpose.msra.mxu0 0.0
    %1347 = vmatprep.subr.mxu0 0.0
    %1348 = vmatpush1.xpose.msra.mxu0 0.0
    %1349 = vmatprep.subr.mxu0 0.0
    %1350 = vmatpush1.xpose.msra.mxu0 0.0
    %1351 = vmatprep.subr.mxu0 0.0
    %1352 = vmatpush1.xpose.msra.mxu0 0.0
    %1353 = vmatprep.subr.mxu0 0.0
    %1354 = vmatpush1.xpose.msra.mxu0 0.0
    %1355 = vmatprep.subr.mxu0 0.0
    %1356 = vmatpush1.xpose.msra.mxu0 0.0
    %1357 = vmatprep.subr.mxu0 0.0
    %1358 = vmatpush1.xpose.msra.mxu0 0.0
    %1359 = vmatprep.subr.mxu0 0.0
    %1360 = vmatpush1.xpose.msra.mxu0 0.0
    %1361 = vmatprep.subr.mxu0 0.0
    %1362 = vmatpush1.xpose.msra.mxu0 0.0
    %1363 = vmatprep.subr.mxu0 0.0
    %1364 = vmatpush1.xpose.msra.mxu0 0.0
    %1365 = vmatprep.subr.mxu0 0.0
    %1366 = vmatpush1.xpose.msra.mxu0 0.0
    %1367 = vmatprep.subr.mxu0 0.0
    %1368 = vmatpush1.xpose.msra.mxu0 0.0
    %1369 = vmatprep.subr.mxu0 0.0
    %1370 = vmatpush1.xpose.msra.mxu0 %v1337
    %1371 = vmatprep.subr.mxu0 0.0
    %1372 = vmatpush2.xpose.msra.mxu0 0.0
    %1373 = vmatprep.subr.mxu0 0.0
    %1374 = vmatpush2.xpose.msra.mxu0 0.0
    %1375 = vmatprep.subr.mxu0 0.0
    %1376 = vmatpush2.xpose.msra.mxu0 0.0
    %1377 = vmatprep.subr.mxu0 0.0
    %1378 = vmatpush2.xpose.msra.mxu0 0.0
    %1379 = vmatprep.subr.mxu0 0.0
    %1380 = vmatpush2.xpose.msra.mxu0 0.0
    %1381 = vmatprep.subr.mxu0 0.0
    %1382 = vmatpush2.xpose.msra.mxu0 0.0
    %1383 = vmatprep.subr.mxu0 0.0
    %1384 = vmatpush2.xpose.msra.mxu0 0.0
    %1385 = vmatprep.subr.mxu0 0.0
    %1386 = vmatpush2.xpose.msra.mxu0 0.0
    %1387 = vmatprep.subr.mxu0 0.0
    %1388 = vmatpush2.xpose.msra.mxu0 0.0
    %1389 = vmatprep.subr.mxu0 0.0
    %1390 = vmatpush2.xpose.msra.mxu0 0.0
    %1391 = vmatprep.subr.mxu0 0.0
    %1392 = vmatpush2.xpose.msra.mxu0 0.0
    %1393 = vmatprep.subr.mxu0 0.0
    %1394 = vmatpush2.xpose.msra.mxu0 0.0
    %1395 = vmatprep.subr.mxu0 0.0
    %1396 = vmatpush2.xpose.msra.mxu0 0.0
    %1397 = vmatprep.subr.mxu0 0.0
    %1398 = vmatpush2.xpose.msra.mxu0 0.0
    %1399 = vmatprep.subr.mxu0 0.0
    %1400 = vmatpush2.xpose.msra.mxu0 0.0
    %1401 = vmatprep.subr.mxu0 0.0
    %1402 = vmatpush2.xpose.msra.mxu0 0.0
    %1403 = vmatprep.mubr.f32.mxu0 0.0
    %1404 = vmatmul.mubr.f32.gmra.mxu0 %v1335
    %v1405 = vpop.f32.mrf.mxu0
    %v1406 = vadd.f32 0.0, %v1405
    %v1407 = vpop.f32.mrf.mxu0
    %1408 = vdwg.mxu0
    %1410 = vrot.lane.b32.xlu0 %v1329, 96
    %v1411 = vpop.permute.xlu0 %1410
    %v1412 = vsel %vm273, %v1329, 0
    %v1414 = vsel %vm273, %v1411, 0
    %1416 = vmatprep.subr.mxu0 0.0
    %1417 = vmatpush1.xpose.msra.mxu0 0.0
    %1418 = vmatprep.subr.mxu0 0.0
    %1419 = vmatpush1.xpose.msra.mxu0 0.0
    %1420 = vmatprep.subr.mxu0 0.0
    %1421 = vmatpush1.xpose.msra.mxu0 0.0
    %1422 = vmatprep.subr.mxu0 0.0
    %1423 = vmatpush1.xpose.msra.mxu0 0.0
    %1424 = vmatprep.subr.mxu0 0.0
    %1425 = vmatpush1.xpose.msra.mxu0 0.0
    %1426 = vmatprep.subr.mxu0 0.0
    %1427 = vmatpush1.xpose.msra.mxu0 0.0
    %1428 = vmatprep.subr.mxu0 0.0
    %1429 = vmatpush1.xpose.msra.mxu0 0.0
    %1430 = vmatprep.subr.mxu0 0.0
    %1431 = vmatpush1.xpose.msra.mxu0 0.0
    %1432 = vmatprep.subr.mxu0 0.0
    %1433 = vmatpush1.xpose.msra.mxu0 0.0
    %1434 = vmatprep.subr.mxu0 0.0
    %1435 = vmatpush1.xpose.msra.mxu0 0.0
    %1436 = vmatprep.subr.mxu0 0.0
    %1437 = vmatpush1.xpose.msra.mxu0 0.0
    %1438 = vmatprep.subr.mxu0 0.0
    %1439 = vmatpush1.xpose.msra.mxu0 0.0
    %1440 = vmatprep.subr.mxu0 0.0
    %1441 = vmatpush1.xpose.msra.mxu0 0.0
    %1442 = vmatprep.subr.mxu0 0.0
    %1443 = vmatpush1.xpose.msra.mxu0 0.0
    %1444 = vmatprep.subr.mxu0 0.0
    %1445 = vmatpush1.xpose.msra.mxu0 0.0
    %1446 = vmatprep.subr.mxu0 0.0
    %1447 = vmatpush1.xpose.msra.mxu0 %v1414
    %1448 = vmatprep.subr.mxu0 0.0
    %1449 = vmatpush2.xpose.msra.mxu0 0.0
    %1450 = vmatprep.subr.mxu0 0.0
    %1451 = vmatpush2.xpose.msra.mxu0 0.0
    %1452 = vmatprep.subr.mxu0 0.0
    %1453 = vmatpush2.xpose.msra.mxu0 0.0
    %1454 = vmatprep.subr.mxu0 0.0
    %1455 = vmatpush2.xpose.msra.mxu0 0.0
    %1456 = vmatprep.subr.mxu0 0.0
    %1457 = vmatpush2.xpose.msra.mxu0 0.0
    %1458 = vmatprep.subr.mxu0 0.0
    %1459 = vmatpush2.xpose.msra.mxu0 0.0
    %1460 = vmatprep.subr.mxu0 0.0
    %1461 = vmatpush2.xpose.msra.mxu0 0.0
    %1462 = vmatprep.subr.mxu0 0.0
    %1463 = vmatpush2.xpose.msra.mxu0 0.0
    %1464 = vmatprep.subr.mxu0 0.0
    %1465 = vmatpush2.xpose.msra.mxu0 0.0
    %1466 = vmatprep.subr.mxu0 0.0
    %1467 = vmatpush2.xpose.msra.mxu0 0.0
    %1468 = vmatprep.subr.mxu0 0.0
    %1469 = vmatpush2.xpose.msra.mxu0 0.0
    %1470 = vmatprep.subr.mxu0 0.0
    %1471 = vmatpush2.xpose.msra.mxu0 0.0
    %1472 = vmatprep.subr.mxu0 0.0
    %1473 = vmatpush2.xpose.msra.mxu0 0.0
    %1474 = vmatprep.subr.mxu0 0.0
    %1475 = vmatpush2.xpose.msra.mxu0 0.0
    %1476 = vmatprep.subr.mxu0 0.0
    %1477 = vmatpush2.xpose.msra.mxu0 0.0
    %1478 = vmatprep.subr.mxu0 0.0
    %1479 = vmatpush2.xpose.msra.mxu0 0.0
    %1480 = vmatprep.mubr.f32.mxu0 0.0
    %1481 = vmatmul.mubr.f32.gmra.mxu0 %v1412
    %v1482 = vpop.f32.mrf.mxu0
    %v1483 = vadd.f32 0.0, %v1482
    %v1484 = vpop.f32.mrf.mxu0
    %1485 = vdwg.mxu0
    %v1486 = vmul.f32 %v1406, 0.25
    %v1487 = vmul.f32 %v1483, 0.25
    %v1488 = vadd.f32 %v1486, %v453
    %v1489 = vadd.f32 %v1487, %v457
    %v1490 = vsel %vm462, %v1488, -inf
    %1491 = vmax.xlane.f32.xlu0 %v1490
    %v1492 = vpop.xlane.xlu0 %1491
    %v1493 = vsel %vm462, %v1489, -inf
    %1494 = vmax.xlane.f32.xlu0 %v1493
    %v1495 = vpop.xlane.xlu0 %1494
    %v1496 = vsub.f32 %v1488, %v1492
    %v1497 = vsub.f32 %v1489, %v1495
    %v1498 = vmul.f32 %v1496, 1.442695
    %v1499 = vpow.pop %v1498
    %v1500 = vmul.f32 %v1497, 1.442695
    %v1501 = vpow.pop %v1500
    %v1502 = vsel %vm462, %v1499, 0.0
    %1503 = vadd.xlane.f32.xlu0 %v1502
    %v1504 = vpop.xlane.xlu0 %1503
    %v1505 = vsel %vm462, %v1501, 0.0
    %1506 = vadd.xlane.f32.xlu0 %v1505
    %v1507 = vpop.xlane.xlu0 %1506
    %v1508 = vrcp.pop %v1504
    %v1509 = vmul.f32 %v1499, %v1508
    %v1510 = vrcp.pop %v1507
    %v1511 = vmul.f32 %v1501, %v1510
    %1512 = vrot.lane.b32.xlu0 %v1326, 64
    %v1513 = vpop.permute.xlu0 %1512
    %v1516 = vsel %vm462, %v1509, 0
    %1518 = vmatprep.subr.mxu0 0.0
    %1519 = vmatpush1.msra.mxu0 0.0
    %1520 = vmatprep.subr.mxu0 0.0
    %1521 = vmatpush1.msra.mxu0 0.0
    %1522 = vmatprep.subr.mxu0 0.0
    %1523 = vmatpush1.msra.mxu0 0.0
    %1524 = vmatprep.subr.mxu0 0.0
    %1525 = vmatpush1.msra.mxu0 0.0
    %1526 = vmatprep.subr.mxu0 0.0
    %1527 = vmatpush1.msra.mxu0 0.0
    %1528 = vmatprep.subr.mxu0 0.0
    %1529 = vmatpush1.msra.mxu0 0.0
    %1530 = vmatprep.subr.mxu0 0.0
    %1531 = vmatpush1.msra.mxu0 0.0
    %1532 = vmatprep.subr.mxu0 0.0
    %1533 = vmatpush1.msra.mxu0 0.0
    %1534 = vmatprep.subr.mxu0 0.0
    %1535 = vmatpush1.msra.mxu0 0.0
    %1536 = vmatprep.subr.mxu0 0.0
    %1537 = vmatpush1.msra.mxu0 0.0
    %1538 = vmatprep.subr.mxu0 0.0
    %1539 = vmatpush1.msra.mxu0 0.0
    %1540 = vmatprep.subr.mxu0 0.0
    %1541 = vmatpush1.msra.mxu0 0.0
    %1542 = vmatprep.subr.mxu0 0.0
    %1543 = vmatpush1.msra.mxu0 0.0
    %1544 = vmatprep.subr.mxu0 0.0
    %1545 = vmatpush1.msra.mxu0 0.0
    %1546 = vmatprep.subr.mxu0 0.0
    %1547 = vmatpush1.msra.mxu0 0.0
    %1548 = vmatprep.subr.mxu0 0.0
    %1549 = vmatpush1.msra.mxu0 %v1513
    %1550 = vmatprep.subr.mxu0 0.0
    %1551 = vmatpush2.msra.mxu0 0.0
    %1552 = vmatprep.subr.mxu0 0.0
    %1553 = vmatpush2.msra.mxu0 0.0
    %1554 = vmatprep.subr.mxu0 0.0
    %1555 = vmatpush2.msra.mxu0 0.0
    %1556 = vmatprep.subr.mxu0 0.0
    %1557 = vmatpush2.msra.mxu0 0.0
    %1558 = vmatprep.subr.mxu0 0.0
    %1559 = vmatpush2.msra.mxu0 0.0
    %1560 = vmatprep.subr.mxu0 0.0
    %1561 = vmatpush2.msra.mxu0 0.0
    %1562 = vmatprep.subr.mxu0 0.0
    %1563 = vmatpush2.msra.mxu0 0.0
    %1564 = vmatprep.subr.mxu0 0.0
    %1565 = vmatpush2.msra.mxu0 0.0
    %1566 = vmatprep.subr.mxu0 0.0
    %1567 = vmatpush2.msra.mxu0 0.0
    %1568 = vmatprep.subr.mxu0 0.0
    %1569 = vmatpush2.msra.mxu0 0.0
    %1570 = vmatprep.subr.mxu0 0.0
    %1571 = vmatpush2.msra.mxu0 0.0
    %1572 = vmatprep.subr.mxu0 0.0
    %1573 = vmatpush2.msra.mxu0 0.0
    %1574 = vmatprep.subr.mxu0 0.0
    %1575 = vmatpush2.msra.mxu0 0.0
    %1576 = vmatprep.subr.mxu0 0.0
    %1577 = vmatpush2.msra.mxu0 0.0
    %1578 = vmatprep.subr.mxu0 0.0
    %1579 = vmatpush2.msra.mxu0 0.0
    %1580 = vmatprep.subr.mxu0 0.0
    %1581 = vmatpush2.msra.mxu0 0.0
    %1582 = vmatprep.mubr.f32.mxu0 0.0
    %1583 = vmatmul.mubr.f32.gmra.mxu0 %v1516
    %v1584 = vpop.f32.mrf.mxu0
    %v1585 = vadd.f32 0.0, %v1584
    %v1586 = vpop.f32.mrf.mxu0
    %1587 = vdwg.mxu0
    %1588 = vrot.lane.b32.xlu0 %v1329, 64
    %v1589 = vpop.permute.xlu0 %1588
    %v1592 = vsel %vm462, %v1511, 0
    %1594 = vmatprep.subr.mxu0 0.0
    %1595 = vmatpush1.msra.mxu0 0.0
    %1596 = vmatprep.subr.mxu0 0.0
    %1597 = vmatpush1.msra.mxu0 0.0
    %1598 = vmatprep.subr.mxu0 0.0
    %1599 = vmatpush1.msra.mxu0 0.0
    %1600 = vmatprep.subr.mxu0 0.0
    %1601 = vmatpush1.msra.mxu0 0.0
    %1602 = vmatprep.subr.mxu0 0.0
    %1603 = vmatpush1.msra.mxu0 0.0
    %1604 = vmatprep.subr.mxu0 0.0
    %1605 = vmatpush1.msra.mxu0 0.0
    %1606 = vmatprep.subr.mxu0 0.0
    %1607 = vmatpush1.msra.mxu0 0.0
    %1608 = vmatprep.subr.mxu0 0.0
    %1609 = vmatpush1.msra.mxu0 0.0
    %1610 = vmatprep.subr.mxu0 0.0
    %1611 = vmatpush1.msra.mxu0 0.0
    %1612 = vmatprep.subr.mxu0 0.0
    %1613 = vmatpush1.msra.mxu0 0.0
    %1614 = vmatprep.subr.mxu0 0.0
    %1615 = vmatpush1.msra.mxu0 0.0
    %1616 = vmatprep.subr.mxu0 0.0
    %1617 = vmatpush1.msra.mxu0 0.0
    %1618 = vmatprep.subr.mxu0 0.0
    %1619 = vmatpush1.msra.mxu0 0.0
    %1620 = vmatprep.subr.mxu0 0.0
    %1621 = vmatpush1.msra.mxu0 0.0
    %1622 = vmatprep.subr.mxu0 0.0
    %1623 = vmatpush1.msra.mxu0 0.0
    %1624 = vmatprep.subr.mxu0 0.0
    %1625 = vmatpush1.msra.mxu0 %v1589
    %1626 = vmatprep.subr.mxu0 0.0
    %1627 = vmatpush2.msra.mxu0 0.0
    %1628 = vmatprep.subr.mxu0 0.0
    %1629 = vmatpush2.msra.mxu0 0.0
    %1630 = vmatprep.subr.mxu0 0.0
    %1631 = vmatpush2.msra.mxu0 0.0
    %1632 = vmatprep.subr.mxu0 0.0
    %1633 = vmatpush2.msra.mxu0 0.0
    %1634 = vmatprep.subr.mxu0 0.0
    %1635 = vmatpush2.msra.mxu0 0.0
    %1636 = vmatprep.subr.mxu0 0.0
    %1637 = vmatpush2.msra.mxu0 0.0
    %1638 = vmatprep.subr.mxu0 0.0
    %1639 = vmatpush2.msra.mxu0 0.0
    %1640 = vmatprep.subr.mxu0 0.0
    %1641 = vmatpush2.msra.mxu0 0.0
    %1642 = vmatprep.subr.mxu0 0.0
    %1643 = vmatpush2.msra.mxu0 0.0
    %1644 = vmatprep.subr.mxu0 0.0
    %1645 = vmatpush2.msra.mxu0 0.0
    %1646 = vmatprep.subr.mxu0 0.0
    %1647 = vmatpush2.msra.mxu0 0.0
    %1648 = vmatprep.subr.mxu0 0.0
    %1649 = vmatpush2.msra.mxu0 0.0
    %1650 = vmatprep.subr.mxu0 0.0
    %1651 = vmatpush2.msra.mxu0 0.0
    %1652 = vmatprep.subr.mxu0 0.0
    %1653 = vmatpush2.msra.mxu0 0.0
    %1654 = vmatprep.subr.mxu0 0.0
    %1655 = vmatpush2.msra.mxu0 0.0
    %1656 = vmatprep.subr.mxu0 0.0
    %1657 = vmatpush2.msra.mxu0 0.0
    %1658 = vmatprep.mubr.f32.mxu0 0.0
    %1659 = vmatmul.mubr.f32.gmra.mxu0 %v1592
    %v1660 = vpop.f32.mrf.mxu0
    %v1661 = vadd.f32 0.0, %v1660
    %v1662 = vpop.f32.mrf.mxu0
    %1663 = vdwg.mxu0
    %1664 = vrot.lane.b32.xlu0 %v1326, 112
    %v1665 = vpop.permute.xlu0 %1664
    %1666 = vrot.lane.b32.xlu0 %v1326, 80
    %v1667 = vpop.permute.xlu0 %1666
    %v1668 = vsel %vm273, %v1665, 0
    %v1670 = vsel %vm273, %v1667, 0
    %1672 = vmatprep.subr.mxu0 0.0
    %1673 = vmatpush1.xpose.msra.mxu0 0.0
    %1674 = vmatprep.subr.mxu0 0.0
    %1675 = vmatpush1.xpose.msra.mxu0 0.0
    %1676 = vmatprep.subr.mxu0 0.0
    %1677 = vmatpush1.xpose.msra.mxu0 0.0
    %1678 = vmatprep.subr.mxu0 0.0
    %1679 = vmatpush1.xpose.msra.mxu0 0.0
    %1680 = vmatprep.subr.mxu0 0.0
    %1681 = vmatpush1.xpose.msra.mxu0 0.0
    %1682 = vmatprep.subr.mxu0 0.0
    %1683 = vmatpush1.xpose.msra.mxu0 0.0
    %1684 = vmatprep.subr.mxu0 0.0
    %1685 = vmatpush1.xpose.msra.mxu0 0.0
    %1686 = vmatprep.subr.mxu0 0.0
    %1687 = vmatpush1.xpose.msra.mxu0 0.0
    %1688 = vmatprep.subr.mxu0 0.0
    %1689 = vmatpush1.xpose.msra.mxu0 0.0
    %1690 = vmatprep.subr.mxu0 0.0
    %1691 = vmatpush1.xpose.msra.mxu0 0.0
    %1692 = vmatprep.subr.mxu0 0.0
    %1693 = vmatpush1.xpose.msra.mxu0 0.0
    %1694 = vmatprep.subr.mxu0 0.0
    %1695 = vmatpush1.xpose.msra.mxu0 0.0
    %1696 = vmatprep.subr.mxu0 0.0
    %1697 = vmatpush1.xpose.msra.mxu0 0.0
    %1698 = vmatprep.subr.mxu0 0.0
    %1699 = vmatpush1.xpose.msra.mxu0 0.0
    %1700 = vmatprep.subr.mxu0 0.0
    %1701 = vmatpush1.xpose.msra.mxu0 0.0
    %1702 = vmatprep.subr.mxu0 0.0
    %1703 = vmatpush1.xpose.msra.mxu0 %v1670
    %1704 = vmatprep.subr.mxu0 0.0
    %1705 = vmatpush2.xpose.msra.mxu0 0.0
    %1706 = vmatprep.subr.mxu0 0.0
    %1707 = vmatpush2.xpose.msra.mxu0 0.0
    %1708 = vmatprep.subr.mxu0 0.0
    %1709 = vmatpush2.xpose.msra.mxu0 0.0
    %1710 = vmatprep.subr.mxu0 0.0
    %1711 = vmatpush2.xpose.msra.mxu0 0.0
    %1712 = vmatprep.subr.mxu0 0.0
    %1713 = vmatpush2.xpose.msra.mxu0 0.0
    %1714 = vmatprep.subr.mxu0 0.0
    %1715 = vmatpush2.xpose.msra.mxu0 0.0
    %1716 = vmatprep.subr.mxu0 0.0
    %1717 = vmatpush2.xpose.msra.mxu0 0.0
    %1718 = vmatprep.subr.mxu0 0.0
    %1719 = vmatpush2.xpose.msra.mxu0 0.0
    %1720 = vmatprep.subr.mxu0 0.0
    %1721 = vmatpush2.xpose.msra.mxu0 0.0
    %1722 = vmatprep.subr.mxu0 0.0
    %1723 = vmatpush2.xpose.msra.mxu0 0.0
    %1724 = vmatprep.subr.mxu0 0.0
    %1725 = vmatpush2.xpose.msra.mxu0 0.0
    %1726 = vmatprep.subr.mxu0 0.0
    %1727 = vmatpush2.xpose.msra.mxu0 0.0
    %1728 = vmatprep.subr.mxu0 0.0
    %1729 = vmatpush2.xpose.msra.mxu0 0.0
    %1730 = vmatprep.subr.mxu0 0.0
    %1731 = vmatpush2.xpose.msra.mxu0 0.0
    %1732 = vmatprep.subr.mxu0 0.0
    %1733 = vmatpush2.xpose.msra.mxu0 0.0
    %1734 = vmatprep.subr.mxu0 0.0
    %1735 = vmatpush2.xpose.msra.mxu0 0.0
    %1736 = vmatprep.mubr.f32.mxu0 0.0
    %1737 = vmatmul.mubr.f32.gmra.mxu0 %v1668
    %v1738 = vpop.f32.mrf.mxu0
    %v1739 = vadd.f32 0.0, %v1738
    %v1740 = vpop.f32.mrf.mxu0
    %1741 = vdwg.mxu0
    %1742 = vrot.lane.b32.xlu0 %v1329, 112
    %v1743 = vpop.permute.xlu0 %1742
    %1744 = vrot.lane.b32.xlu0 %v1329, 80
    %v1745 = vpop.permute.xlu0 %1744
    %v1746 = vsel %vm273, %v1743, 0
    %v1748 = vsel %vm273, %v1745, 0
    %1750 = vmatprep.subr.mxu0 0.0
    %1751 = vmatpush1.xpose.msra.mxu0 0.0
    %1752 = vmatprep.subr.mxu0 0.0
    %1753 = vmatpush1.xpose.msra.mxu0 0.0
    %1754 = vmatprep.subr.mxu0 0.0
    %1755 = vmatpush1.xpose.msra.mxu0 0.0
    %1756 = vmatprep.subr.mxu0 0.0
    %1757 = vmatpush1.xpose.msra.mxu0 0.0
    %1758 = vmatprep.subr.mxu0 0.0
    %1759 = vmatpush1.xpose.msra.mxu0 0.0
    %1760 = vmatprep.subr.mxu0 0.0
    %1761 = vmatpush1.xpose.msra.mxu0 0.0
    %1762 = vmatprep.subr.mxu0 0.0
    %1763 = vmatpush1.xpose.msra.mxu0 0.0
    %1764 = vmatprep.subr.mxu0 0.0
    %1765 = vmatpush1.xpose.msra.mxu0 0.0
    %1766 = vmatprep.subr.mxu0 0.0
    %1767 = vmatpush1.xpose.msra.mxu0 0.0
    %1768 = vmatprep.subr.mxu0 0.0
    %1769 = vmatpush1.xpose.msra.mxu0 0.0
    %1770 = vmatprep.subr.mxu0 0.0
    %1771 = vmatpush1.xpose.msra.mxu0 0.0
    %1772 = vmatprep.subr.mxu0 0.0
    %1773 = vmatpush1.xpose.msra.mxu0 0.0
    %1774 = vmatprep.subr.mxu0 0.0
    %1775 = vmatpush1.xpose.msra.mxu0 0.0
    %1776 = vmatprep.subr.mxu0 0.0
    %1777 = vmatpush1.xpose.msra.mxu0 0.0
    %1778 = vmatprep.subr.mxu0 0.0
    %1779 = vmatpush1.xpose.msra.mxu0 0.0
    %1780 = vmatprep.subr.mxu0 0.0
    %1781 = vmatpush1.xpose.msra.mxu0 %v1748
    %1782 = vmatprep.subr.mxu0 0.0
    %1783 = vmatpush2.xpose.msra.mxu0 0.0
    %1784 = vmatprep.subr.mxu0 0.0
    %1785 = vmatpush2.xpose.msra.mxu0 0.0
    %1786 = vmatprep.subr.mxu0 0.0
    %1787 = vmatpush2.xpose.msra.mxu0 0.0
    %1788 = vmatprep.subr.mxu0 0.0
    %1789 = vmatpush2.xpose.msra.mxu0 0.0
    %1790 = vmatprep.subr.mxu0 0.0
    %1791 = vmatpush2.xpose.msra.mxu0 0.0
    %1792 = vmatprep.subr.mxu0 0.0
    %1793 = vmatpush2.xpose.msra.mxu0 0.0
    %1794 = vmatprep.subr.mxu0 0.0
    %1795 = vmatpush2.xpose.msra.mxu0 0.0
    %1796 = vmatprep.subr.mxu0 0.0
    %1797 = vmatpush2.xpose.msra.mxu0 0.0
    %1798 = vmatprep.subr.mxu0 0.0
    %1799 = vmatpush2.xpose.msra.mxu0 0.0
    %1800 = vmatprep.subr.mxu0 0.0
    %1801 = vmatpush2.xpose.msra.mxu0 0.0
    %1802 = vmatprep.subr.mxu0 0.0
    %1803 = vmatpush2.xpose.msra.mxu0 0.0
    %1804 = vmatprep.subr.mxu0 0.0
    %1805 = vmatpush2.xpose.msra.mxu0 0.0
    %1806 = vmatprep.subr.mxu0 0.0
    %1807 = vmatpush2.xpose.msra.mxu0 0.0
    %1808 = vmatprep.subr.mxu0 0.0
    %1809 = vmatpush2.xpose.msra.mxu0 0.0
    %1810 = vmatprep.subr.mxu0 0.0
    %1811 = vmatpush2.xpose.msra.mxu0 0.0
    %1812 = vmatprep.subr.mxu0 0.0
    %1813 = vmatpush2.xpose.msra.mxu0 0.0
    %1814 = vmatprep.mubr.f32.mxu0 0.0
    %1815 = vmatmul.mubr.f32.gmra.mxu0 %v1746
    %v1816 = vpop.f32.mrf.mxu0
    %v1817 = vadd.f32 0.0, %v1816
    %v1818 = vpop.f32.mrf.mxu0
    %1819 = vdwg.mxu0
    %v1820 = vmul.f32 %v1739, 0.25
    %v1821 = vmul.f32 %v1817, 0.25
    %v1822 = vadd.f32 %v1820, %v453
    %v1823 = vadd.f32 %v1821, %v457
    %v1824 = vsel %vm462, %v1822, -inf
    %1825 = vmax.xlane.f32.xlu0 %v1824
    %v1826 = vpop.xlane.xlu0 %1825
    %v1827 = vsel %vm462, %v1823, -inf
    %1828 = vmax.xlane.f32.xlu0 %v1827
    %v1829 = vpop.xlane.xlu0 %1828
    %v1830 = vsub.f32 %v1822, %v1826
    %v1831 = vsub.f32 %v1823, %v1829
    %v1832 = vmul.f32 %v1830, 1.442695
    %v1833 = vpow.pop %v1832
    %v1834 = vmul.f32 %v1831, 1.442695
    %v1835 = vpow.pop %v1834
    %v1836 = vsel %vm462, %v1833, 0.0
    %1837 = vadd.xlane.f32.xlu0 %v1836
    %v1838 = vpop.xlane.xlu0 %1837
    %v1839 = vsel %vm462, %v1835, 0.0
    %1840 = vadd.xlane.f32.xlu0 %v1839
    %v1841 = vpop.xlane.xlu0 %1840
    %v1842 = vrcp.pop %v1838
    %v1843 = vmul.f32 %v1833, %v1842
    %v1844 = vrcp.pop %v1841
    %v1845 = vmul.f32 %v1835, %v1844
    %1846 = vrot.lane.b32.xlu0 %v1326, 48
    %v1847 = vpop.permute.xlu0 %1846
    %v1850 = vsel %vm462, %v1843, 0
    %1852 = vmatprep.subr.mxu0 0.0
    %1853 = vmatpush1.msra.mxu0 0.0
    %1854 = vmatprep.subr.mxu0 0.0
    %1855 = vmatpush1.msra.mxu0 0.0
    %1856 = vmatprep.subr.mxu0 0.0
    %1857 = vmatpush1.msra.mxu0 0.0
    %1858 = vmatprep.subr.mxu0 0.0
    %1859 = vmatpush1.msra.mxu0 0.0
    %1860 = vmatprep.subr.mxu0 0.0
    %1861 = vmatpush1.msra.mxu0 0.0
    %1862 = vmatprep.subr.mxu0 0.0
    %1863 = vmatpush1.msra.mxu0 0.0
    %1864 = vmatprep.subr.mxu0 0.0
    %1865 = vmatpush1.msra.mxu0 0.0
    %1866 = vmatprep.subr.mxu0 0.0
    %1867 = vmatpush1.msra.mxu0 0.0
    %1868 = vmatprep.subr.mxu0 0.0
    %1869 = vmatpush1.msra.mxu0 0.0
    %1870 = vmatprep.subr.mxu0 0.0
    %1871 = vmatpush1.msra.mxu0 0.0
    %1872 = vmatprep.subr.mxu0 0.0
    %1873 = vmatpush1.msra.mxu0 0.0
    %1874 = vmatprep.subr.mxu0 0.0
    %1875 = vmatpush1.msra.mxu0 0.0
    %1876 = vmatprep.subr.mxu0 0.0
    %1877 = vmatpush1.msra.mxu0 0.0
    %1878 = vmatprep.subr.mxu0 0.0
    %1879 = vmatpush1.msra.mxu0 0.0
    %1880 = vmatprep.subr.mxu0 0.0
    %1881 = vmatpush1.msra.mxu0 0.0
    %1882 = vmatprep.subr.mxu0 0.0
    %1883 = vmatpush1.msra.mxu0 %v1847
    %1884 = vmatprep.subr.mxu0 0.0
    %1885 = vmatpush2.msra.mxu0 0.0
    %1886 = vmatprep.subr.mxu0 0.0
    %1887 = vmatpush2.msra.mxu0 0.0
    %1888 = vmatprep.subr.mxu0 0.0
    %1889 = vmatpush2.msra.mxu0 0.0
    %1890 = vmatprep.subr.mxu0 0.0
    %1891 = vmatpush2.msra.mxu0 0.0
    %1892 = vmatprep.subr.mxu0 0.0
    %1893 = vmatpush2.msra.mxu0 0.0
    %1894 = vmatprep.subr.mxu0 0.0
    %1895 = vmatpush2.msra.mxu0 0.0
    %1896 = vmatprep.subr.mxu0 0.0
    %1897 = vmatpush2.msra.mxu0 0.0
    %1898 = vmatprep.subr.mxu0 0.0
    %1899 = vmatpush2.msra.mxu0 0.0
    %1900 = vmatprep.subr.mxu0 0.0
    %1901 = vmatpush2.msra.mxu0 0.0
    %1902 = vmatprep.subr.mxu0 0.0
    %1903 = vmatpush2.msra.mxu0 0.0
    %1904 = vmatprep.subr.mxu0 0.0
    %1905 = vmatpush2.msra.mxu0 0.0
    %1906 = vmatprep.subr.mxu0 0.0
    %1907 = vmatpush2.msra.mxu0 0.0
    %1908 = vmatprep.subr.mxu0 0.0
    %1909 = vmatpush2.msra.mxu0 0.0
    %1910 = vmatprep.subr.mxu0 0.0
    %1911 = vmatpush2.msra.mxu0 0.0
    %1912 = vmatprep.subr.mxu0 0.0
    %1913 = vmatpush2.msra.mxu0 0.0
    %1914 = vmatprep.subr.mxu0 0.0
    %1915 = vmatpush2.msra.mxu0 0.0
    %1916 = vmatprep.mubr.f32.mxu0 0.0
    %1917 = vmatmul.mubr.f32.gmra.mxu0 %v1850
    %v1918 = vpop.f32.mrf.mxu0
    %v1919 = vadd.f32 0.0, %v1918
    %v1920 = vpop.f32.mrf.mxu0
    %1921 = vdwg.mxu0
    %1922 = vrot.lane.b32.xlu0 %v1329, 48
    %v1923 = vpop.permute.xlu0 %1922
    %v1926 = vsel %vm462, %v1845, 0
    %1928 = vmatprep.subr.mxu0 0.0
    %1929 = vmatpush1.msra.mxu0 0.0
    %1930 = vmatprep.subr.mxu0 0.0
    %1931 = vmatpush1.msra.mxu0 0.0
    %1932 = vmatprep.subr.mxu0 0.0
    %1933 = vmatpush1.msra.mxu0 0.0
    %1934 = vmatprep.subr.mxu0 0.0
    %1935 = vmatpush1.msra.mxu0 0.0
    %1936 = vmatprep.subr.mxu0 0.0
    %1937 = vmatpush1.msra.mxu0 0.0
    %1938 = vmatprep.subr.mxu0 0.0
    %1939 = vmatpush1.msra.mxu0 0.0
    %1940 = vmatprep.subr.mxu0 0.0
    %1941 = vmatpush1.msra.mxu0 0.0
    %1942 = vmatprep.subr.mxu0 0.0
    %1943 = vmatpush1.msra.mxu0 0.0
    %1944 = vmatprep.subr.mxu0 0.0
    %1945 = vmatpush1.msra.mxu0 0.0
    %1946 = vmatprep.subr.mxu0 0.0
    %1947 = vmatpush1.msra.mxu0 0.0
    %1948 = vmatprep.subr.mxu0 0.0
    %1949 = vmatpush1.msra.mxu0 0.0
    %1950 = vmatprep.subr.mxu0 0.0
    %1951 = vmatpush1.msra.mxu0 0.0
    %1952 = vmatprep.subr.mxu0 0.0
    %1953 = vmatpush1.msra.mxu0 0.0
    %1954 = vmatprep.subr.mxu0 0.0
    %1955 = vmatpush1.msra.mxu0 0.0
    %1956 = vmatprep.subr.mxu0 0.0
    %1957 = vmatpush1.msra.mxu0 0.0
    %1958 = vmatprep.subr.mxu0 0.0
    %1959 = vmatpush1.msra.mxu0 %v1923
    %1960 = vmatprep.subr.mxu0 0.0
    %1961 = vmatpush2.msra.mxu0 0.0
    %1962 = vmatprep.subr.mxu0 0.0
    %1963 = vmatpush2.msra.mxu0 0.0
    %1964 = vmatprep.subr.mxu0 0.0
    %1965 = vmatpush2.msra.mxu0 0.0
    %1966 = vmatprep.subr.mxu0 0.0
    %1967 = vmatpush2.msra.mxu0 0.0
    %1968 = vmatprep.subr.mxu0 0.0
    %1969 = vmatpush2.msra.mxu0 0.0
    %1970 = vmatprep.subr.mxu0 0.0
    %1971 = vmatpush2.msra.mxu0 0.0
    %1972 = vmatprep.subr.mxu0 0.0
    %1973 = vmatpush2.msra.mxu0 0.0
    %1974 = vmatprep.subr.mxu0 0.0
    %1975 = vmatpush2.msra.mxu0 0.0
    %1976 = vmatprep.subr.mxu0 0.0
    %1977 = vmatpush2.msra.mxu0 0.0
    %1978 = vmatprep.subr.mxu0 0.0
    %1979 = vmatpush2.msra.mxu0 0.0
    %1980 = vmatprep.subr.mxu0 0.0
    %1981 = vmatpush2.msra.mxu0 0.0
    %1982 = vmatprep.subr.mxu0 0.0
    %1983 = vmatpush2.msra.mxu0 0.0
    %1984 = vmatprep.subr.mxu0 0.0
    %1985 = vmatpush2.msra.mxu0 0.0
    %1986 = vmatprep.subr.mxu0 0.0
    %1987 = vmatpush2.msra.mxu0 0.0
    %1988 = vmatprep.subr.mxu0 0.0
    %1989 = vmatpush2.msra.mxu0 0.0
    %1990 = vmatprep.subr.mxu0 0.0
    %1991 = vmatpush2.msra.mxu0 0.0
    %1992 = vmatprep.mubr.f32.mxu0 0.0
    %1993 = vmatmul.mubr.f32.gmra.mxu0 %v1926
    %v1994 = vpop.f32.mrf.mxu0
    %v1995 = vadd.f32 0.0, %v1994
    %v1996 = vpop.f32.mrf.mxu0
    %1997 = vdwg.mxu0
    %2000 = vrot.lane.b32.xlu0 %v1919, 16
    %v2001 = vpop.permute.xlu0 %2000
    %2002 = vrot.lane.b32.xlu0 %v1995, 16
    %v2003 = vpop.permute.xlu0 %2002
    %v2006 = vsel %vm273, %v1585, %v2001
    %v2007 = vsel %vm273, %v1661, %v2003
    %s2008 = scalar_lea.vmem %s9, 32
    %v2009 = vld [vmem:[%s2008] sm:$0xff]
    %v2010 = vld [vmem:[%s2008 + $0x8] sm:$0xff]
    %v2011 = vld [vmem:[%s2008 + $0x10] sm:$0xff]
    %v2012 = vld [vmem:[%s2008 + $0x18] sm:$0xff]
    %v2013 = vpack.c.bf16 %v2007, %v2006
    %v2014 = vpack.c.bf16 %v2010, %v2009
    %v2015 = vpack.c.bf16 %v2012, %v2011
    %s2016 = scalar_lea.vmem %s10, 1
    %v2017 = vld [vmem:[%s2016] sm:$0x1]
    %v2019 = vlaneseq
    %v2020 = vshrl.u32 %v2019, 7
    %v2021 = vsub.s32 0, %v2020
    %v2022 = vrot.slane %v2017, %v2021
    %v2025 = vsel %vm164, %v2013, 0
    %2027 = vmatprep.subr.bf16.mxu0 0
    %2028 = vmatpush1.bf16.msra.mxu0 0
    %2029 = vmatprep.subr.bf16.mxu0 0
    %2030 = vmatpush1.bf16.msra.mxu0 0
    %2031 = vmatprep.subr.bf16.mxu0 0
    %2032 = vmatpush1.bf16.msra.mxu0 0
    %2033 = vmatprep.subr.bf16.mxu0 0
    %2034 = vmatpush1.bf16.msra.mxu0 0
    %2035 = vmatprep.subr.bf16.mxu0 0
    %2036 = vmatpush1.bf16.msra.mxu0 0
    %2037 = vmatprep.subr.bf16.mxu0 0
    %2038 = vmatpush1.bf16.msra.mxu0 0
    %2039 = vmatprep.subr.bf16.mxu0 0
    %2040 = vmatpush1.bf16.msra.mxu0 %v2015
    %2041 = vmatprep.subr.bf16.mxu0 0
    %2042 = vmatpush1.bf16.msra.mxu0 %v2014
    %2043 = vmatprep.subr.bf16.mxu0 0
    %2044 = vmatpush2.bf16.msra.mxu0 0
    %2045 = vmatprep.subr.bf16.mxu0 0
    %2046 = vmatpush2.bf16.msra.mxu0 0
    %2047 = vmatprep.subr.bf16.mxu0 0
    %2048 = vmatpush2.bf16.msra.mxu0 0
    %2049 = vmatprep.subr.bf16.mxu0 0
    %2050 = vmatpush2.bf16.msra.mxu0 0
    %2051 = vmatprep.subr.bf16.mxu0 0
    %2052 = vmatpush2.bf16.msra.mxu0 0
    %2053 = vmatprep.subr.bf16.mxu0 0
    %2054 = vmatpush2.bf16.msra.mxu0 0
    %2055 = vmatprep.subr.bf16.mxu0 0
    %2056 = vmatpush2.bf16.msra.mxu0 0
    %2057 = vmatprep.subr.bf16.mxu0 0
    %2058 = vmatpush2.bf16.msra.mxu0 0
    %2059 = vmatprep.mubr.bf16.mxu0 0
    %2060 = vmatmul.mubr.bf16.gmra.mxu0 %v2025
    %v2061 = vpop.f32.mrf.mxu0
    %v2062 = vadd.f32 %v2022, %v2061
    %v2063 = vpop.f32.mrf.mxu0
    %v2064 = vpop.f32.mrf.mxu0
    %v2065 = vadd.f32 %v2022, %v2064
    %v2066 = vpop.f32.mrf.mxu0
    %2067 = vdwg.mxu0
    %v2068 = vadd.f32 %v2062, %v1270
    %v2069 = vadd.f32 %v2065, %v1271
    %s2070 = scalar_lea.vmem %s11, 1
    %v2071 = vld [vmem:[%s2070] sm:$0x1]
    %s2072 = scalar_lea.vmem %s12, 1
    %v2073 = vld [vmem:[%s2072] sm:$0x1]
    %v2074 = vsel %vm164, %v2068, 0.0
    %2075 = vadd.xlane.f32.xlu0 %v2074
    %v2076 = vpop.xlane.xlu0 %2075
    %v2077 = vsel %vm164, %v2069, 0.0
    %2078 = vadd.xlane.f32.xlu0 %v2077
    %v2079 = vpop.xlane.xlu0 %2078
    %v2080 = vmul.f32 %v2076, %v171
    %v2081 = vmul.f32 %v2079, %v171
    %v2082 = vsub.f32 %v2068, %v2080
    %v2083 = vsub.f32 %v2069, %v2081
    %v2084 = vmul.f32 %v2082, %v2082
    %v2085 = vmul.f32 %v2083, %v2083
    %v2086 = vsel %vm164, %v2084, 0.0
    %2087 = vadd.xlane.f32.xlu0 %v2086
    %v2088 = vpop.xlane.xlu0 %2087
    %v2089 = vsel %vm164, %v2085, 0.0
    %2090 = vadd.xlane.f32.xlu0 %v2089
    %v2091 = vpop.xlane.xlu0 %2090
    %v2092 = vmul.f32 %v2088, %v171
    %v2093 = vmul.f32 %v2091, %v171
    %v2094 = vadd.f32 %v2092, 1e-12
    %v2095 = vadd.f32 %v2093, 1e-12
    %v2096 = vrsqrt.pop %v2094
    %v2097 = vrsqrt.pop %v2095
    %v2098 = vmul.f32 %v2082, %v2096
    %v2099 = vmul.f32 %v2083, %v2097
    %v2101 = vlaneseq
    %v2102 = vshrl.u32 %v2101, 7
    %v2103 = vsub.s32 0, %v2102
    %v2104 = vrot.slane %v2071, %v2103
    %v2106 = vmul.f32 %v2098, %v2104
    %v2107 = vmul.f32 %v2099, %v2104
    %v2109 = vlaneseq
    %v2110 = vshrl.u32 %v2109, 7
    %v2111 = vsub.s32 0, %v2110
    %v2112 = vrot.slane %v2073, %v2111
    %v2114 = vadd.f32 %v2106, %v2112
    %v2115 = vadd.f32 %v2107, %v2112
    %s2116 = scalar_lea.vmem %s13, 32
    %v2117 = vld [vmem:[%s2116] sm:$0xff]
    %v2118 = vld [vmem:[%s2116 + $0x8] sm:$0xff]
    %v2119 = vld [vmem:[%s2116 + $0x10] sm:$0xff]
    %v2120 = vld [vmem:[%s2116 + $0x18] sm:$0xff]
    %v2121 = vpack.c.bf16 %v2115, %v2114
    %v2122 = vpack.c.bf16 %v2118, %v2117
    %v2123 = vpack.c.bf16 %v2120, %v2119
    %s2124 = scalar_lea.vmem %s14, 1
    %v2125 = vld [vmem:[%s2124] sm:$0x1]
    %v2127 = vlaneseq
    %v2128 = vshrl.u32 %v2127, 7
    %v2129 = vsub.s32 0, %v2128
    %v2130 = vrot.slane %v2125, %v2129
    %v2133 = vsel %vm164, %v2121, 0
    %2135 = vmatprep.subr.bf16.mxu0 0
    %2136 = vmatpush1.bf16.msra.mxu0 0
    %2137 = vmatprep.subr.bf16.mxu0 0
    %2138 = vmatpush1.bf16.msra.mxu0 0
    %2139 = vmatprep.subr.bf16.mxu0 0
    %2140 = vmatpush1.bf16.msra.mxu0 0
    %2141 = vmatprep.subr.bf16.mxu0 0
    %2142 = vmatpush1.bf16.msra.mxu0 0
    %2143 = vmatprep.subr.bf16.mxu0 0
    %2144 = vmatpush1.bf16.msra.mxu0 0
    %2145 = vmatprep.subr.bf16.mxu0 0
    %2146 = vmatpush1.bf16.msra.mxu0 0
    %2147 = vmatprep.subr.bf16.mxu0 0
    %2148 = vmatpush1.bf16.msra.mxu0 %v2123
    %2149 = vmatprep.subr.bf16.mxu0 0
    %2150 = vmatpush1.bf16.msra.mxu0 %v2122
    %2151 = vmatprep.subr.bf16.mxu0 0
    %2152 = vmatpush2.bf16.msra.mxu0 0
    %2153 = vmatprep.subr.bf16.mxu0 0
    %2154 = vmatpush2.bf16.msra.mxu0 0
    %2155 = vmatprep.subr.bf16.mxu0 0
    %2156 = vmatpush2.bf16.msra.mxu0 0
    %2157 = vmatprep.subr.bf16.mxu0 0
    %2158 = vmatpush2.bf16.msra.mxu0 0
    %2159 = vmatprep.subr.bf16.mxu0 0
    %2160 = vmatpush2.bf16.msra.mxu0 0
    %2161 = vmatprep.subr.bf16.mxu0 0
    %2162 = vmatpush2.bf16.msra.mxu0 0
    %2163 = vmatprep.subr.bf16.mxu0 0
    %2164 = vmatpush2.bf16.msra.mxu0 0
    %2165 = vmatprep.subr.bf16.mxu0 0
    %2166 = vmatpush2.bf16.msra.mxu0 0
    %2167 = vmatprep.mubr.bf16.mxu0 0
    %2168 = vmatmul.mubr.bf16.gmra.mxu0 %v2133
    %v2169 = vpop.f32.mrf.mxu0
    %v2170 = vadd.f32 %v2130, %v2169
    %v2171 = vpop.f32.mrf.mxu0
    %v2172 = vpop.f32.mrf.mxu0
    %v2173 = vadd.f32 %v2130, %v2172
    %v2174 = vpop.f32.mrf.mxu0
    %2175 = vdwg.mxu0
    %v2176 = vmul.f32 %v2170, 0.5
    %v2177 = vmul.f32 %v2173, 0.5
    %v2178 = vmul.f32 %v2170, 0.044715
    %v2179 = vmul.f32 %v2173, 0.044715
    %v2180 = vmul.f32 %v2178, %v2170
    %v2181 = vmul.f32 %v2179, %v2173
    %v2182 = vmul.f32 %v2180, %v2170
    %v2183 = vmul.f32 %v2181, %v2173
    %v2184 = vadd.f32 %v2170, %v2182
    %v2185 = vadd.f32 %v2173, %v2183
    %v2186 = vmul.f32 %v2184, 0.7978846
    %v2187 = vmul.f32 %v2185, 0.7978846
    %v2188 = vtanh.pop %v2186
    %v2189 = vtanh.pop %v2187
    %v2190 = vadd.f32 %v2188, 1.0
    %v2191 = vadd.f32 %v2189, 1.0
    %v2192 = vmul.f32 %v2176, %v2190
    %v2193 = vmul.f32 %v2177, %v2191
    %s2194 = scalar_lea.vmem %s15, 64
    %v2195 = vld [vmem:[%s2194] sm:$0xff]
    %v2196 = vld [vmem:[%s2194 + $0x8] sm:$0xff]
    %v2197 = vld [vmem:[%s2194 + $0x10] sm:$0xff]
    %v2198 = vld [vmem:[%s2194 + $0x18] sm:$0xff]
    %v2199 = vld [vmem:[%s2194 + $0x20] sm:$0xff]
    %v2200 = vld [vmem:[%s2194 + $0x28] sm:$0xff]
    %v2201 = vld [vmem:[%s2194 + $0x30] sm:$0xff]
    %v2202 = vld [vmem:[%s2194 + $0x38] sm:$0xff]
    %v2203 = vpack.c.bf16 %v2193, %v2192
    %v2204 = vpack.c.bf16 %v2196, %v2195
    %v2205 = vpack.c.bf16 %v2198, %v2197
    %v2206 = vpack.c.bf16 %v2200, %v2199
    %v2207 = vpack.c.bf16 %v2202, %v2201
    %s2208 = scalar_lea.vmem %s16, 1
    %v2209 = vld [vmem:[%s2208] sm:$0x1]
    %v2211 = vlaneseq
    %v2212 = vshrl.u32 %v2211, 7
    %v2213 = vsub.s32 0, %v2212
    %v2214 = vrot.slane %v2209, %v2213
    %v2217 = vsel %vm1181, %v2203, 0
    %2219 = vmatprep.subr.bf16.mxu0 0
    %2220 = vmatpush1.bf16.msra.mxu0 0
    %2221 = vmatprep.subr.bf16.mxu0 0
    %2222 = vmatpush1.bf16.msra.mxu0 0
    %2223 = vmatprep.subr.bf16.mxu0 0
    %2224 = vmatpush1.bf16.msra.mxu0 0
    %2225 = vmatprep.subr.bf16.mxu0 0
    %2226 = vmatpush1.bf16.msra.mxu0 0
    %2227 = vmatprep.subr.bf16.mxu0 0
    %2228 = vmatpush1.bf16.msra.mxu0 %v2207
    %2229 = vmatprep.subr.bf16.mxu0 0
    %2230 = vmatpush1.bf16.msra.mxu0 %v2206
    %2231 = vmatprep.subr.bf16.mxu0 0
    %2232 = vmatpush1.bf16.msra.mxu0 %v2205
    %2233 = vmatprep.subr.bf16.mxu0 0
    %2234 = vmatpush1.bf16.msra.mxu0 %v2204
    %2235 = vmatprep.subr.bf16.mxu0 0
    %2236 = vmatpush2.bf16.msra.mxu0 0
    %2237 = vmatprep.subr.bf16.mxu0 0
    %2238 = vmatpush2.bf16.msra.mxu0 0
    %2239 = vmatprep.subr.bf16.mxu0 0
    %2240 = vmatpush2.bf16.msra.mxu0 0
    %2241 = vmatprep.subr.bf16.mxu0 0
    %2242 = vmatpush2.bf16.msra.mxu0 0
    %2243 = vmatprep.subr.bf16.mxu0 0
    %2244 = vmatpush2.bf16.msra.mxu0 0
    %2245 = vmatprep.subr.bf16.mxu0 0
    %2246 = vmatpush2.bf16.msra.mxu0 0
    %2247 = vmatprep.subr.bf16.mxu0 0
    %2248 = vmatpush2.bf16.msra.mxu0 0
    %2249 = vmatprep.subr.bf16.mxu0 0
    %2250 = vmatpush2.bf16.msra.mxu0 0
    %2251 = vmatprep.mubr.bf16.mxu0 0
    %2252 = vmatmul.mubr.bf16.gmra.mxu0 %v2217
    %v2253 = vpop.f32.mrf.mxu0
    %v2254 = vadd.f32 %v2214, %v2253
    %v2255 = vpop.f32.mrf.mxu0
    %v2256 = vpop.f32.mrf.mxu0
    %v2257 = vpop.f32.mrf.mxu0
    %2258 = vdwg.mxu0
    %v2259 = vadd.f32 %v2254, %v2114
    %s2260 = scalar_lea.vmem %s17, 1
    %v2261 = vld [vmem:[%s2260] sm:$0x1]
    %s2262 = scalar_lea.vmem %s18, 1
    %v2263 = vld [vmem:[%s2262] sm:$0x1]
    %v2264 = vsel %vm164, %v2259, 0.0
    %2265 = vadd.xlane.f32.xlu0 %v2264
    %v2266 = vpop.xlane.xlu0 %2265
    %v2267 = vmul.f32 %v2266, %v171
    %v2268 = vsub.f32 %v2259, %v2267
    %v2269 = vmul.f32 %v2268, %v2268
    %v2270 = vsel %vm164, %v2269, 0.0
    %2271 = vadd.xlane.f32.xlu0 %v2270
    %v2272 = vpop.xlane.xlu0 %2271
    %v2273 = vmul.f32 %v2272, %v171
    %v2274 = vadd.f32 %v2273, 1e-12
    %v2275 = vrsqrt.pop %v2274
    %v2276 = vmul.f32 %v2268, %v2275
    %v2278 = vlaneseq
    %v2279 = vshrl.u32 %v2278, 7
    %v2280 = vsub.s32 0, %v2279
    %v2281 = vrot.slane %v2261, %v2280
    %v2283 = vmul.f32 %v2276, %v2281
    %v2285 = vlaneseq
    %v2286 = vshrl.u32 %v2285, 7
    %v2287 = vsub.s32 0, %v2286
    %v2288 = vrot.slane %v2263, %v2287
    %v2290 = vadd.f32 %v2283, %v2288
    %v2291 = vld [vmem:[%s19] sm:$0xff]
    %v2292 = vld [vmem:[%s19 + $0x8] sm:$0xff]
    %v2293 = vld [vmem:[%s19 + $0x10] sm:$0xff]
    %v2294 = vld [vmem:[%s19 + $0x18] sm:$0xff]
    %v2295 = vpack.c.bf16 %v2290, %v2290
    %v2296 = vpack.c.bf16 %v2292, %v2291
    %v2297 = vpack.c.bf16 %v2294, %v2293
    %v2298 = vld [vmem:[%s20] sm:$0x1]
    %v2300 = vshrl.u32 %v2295, 16
    %v2302 = vrot.slane %v2300, 3
    %v2304 = vsel %vm164, %v2302, 0
    %2306 = vmatprep.subr.bf16.mxu0 0
    %2307 = vmatpush1.bf16.msra.mxu0 0
    %2308 = vmatprep.subr.bf16.mxu0 0
    %2309 = vmatpush1.bf16.msra.mxu0 0
    %2310 = vmatprep.subr.bf16.mxu0 0
    %2311 = vmatpush1.bf16.msra.mxu0 0
    %2312 = vmatprep.subr.bf16.mxu0 0
    %2313 = vmatpush1.bf16.msra.mxu0 0
    %2314 = vmatprep.subr.bf16.mxu0 0
    %2315 = vmatpush1.bf16.msra.mxu0 0
    %2316 = vmatprep.subr.bf16.mxu0 0
    %2317 = vmatpush1.bf16.msra.mxu0 0
    %2318 = vmatprep.subr.bf16.mxu0 0
    %2319 = vmatpush1.bf16.msra.mxu0 %v2297
    %2320 = vmatprep.subr.bf16.mxu0 0
    %2321 = vmatpush1.bf16.msra.mxu0 %v2296
    %2322 = vmatprep.subr.bf16.mxu0 0
    %2323 = vmatpush2.bf16.msra.mxu0 0
    %2324 = vmatprep.subr.bf16.mxu0 0
    %2325 = vmatpush2.bf16.msra.mxu0 0
    %2326 = vmatprep.subr.bf16.mxu0 0
    %2327 = vmatpush2.bf16.msra.mxu0 0
    %2328 = vmatprep.subr.bf16.mxu0 0
    %2329 = vmatpush2.bf16.msra.mxu0 0
    %2330 = vmatprep.subr.bf16.mxu0 0
    %2331 = vmatpush2.bf16.msra.mxu0 0
    %2332 = vmatprep.subr.bf16.mxu0 0
    %2333 = vmatpush2.bf16.msra.mxu0 0
    %2334 = vmatprep.subr.bf16.mxu0 0
    %2335 = vmatpush2.bf16.msra.mxu0 0
    %2336 = vmatprep.subr.bf16.mxu0 0
    %2337 = vmatpush2.bf16.msra.mxu0 0
    %2338 = vmatprep.mubr.bf16.mxu0 0
    %2339 = vmatmul.mubr.bf16.gmra.mxu0 %v2304
    %v2340 = vpop.f32.mrf.mxu0
    %v2341 = vadd.f32 %v2298, %v2340
    %v2342 = vpop.f32.mrf.mxu0
    %v2343 = vpop.f32.mrf.mxu0
    %v2344 = vpop.f32.mrf.mxu0
    %2345 = vdwg.mxu0
    %vm2346 = vcmask 1040384
    %v2347 = vsel %vm2346, %v2341, -inf
    %2348 = vmax.xlane.f32.xlu0 %v2347
    %v2349 = vpop.xlane.xlu0 %2348
    %v2350 = vsub.f32 %v2341, %v2349
    %v2351 = vmul.f32 %v2350, 1.442695
    %v2352 = vpow.pop %v2351
    %v2353 = vsel %vm2346, %v2352, 0.0
    %2354 = vadd.xlane.f32.xlu0 %v2353
    %v2355 = vpop.xlane.xlu0 %2354
    %v2356 = vrcp.pop %v2355
    %v2357 = vmul.f32 %v2352, %v2356
    %2358 = vst [vmem:[#allocation2] sm:$0x1] %v2357
    // Predicated region
    $region86: #{tpu_custom_call.1} parent=1 // pred_check
      _
    $region87: #{tpu_custom_call.1} parent=1 // pred_check_branch
      %2360 = sbr.rel (0) target = $region89
    $region88: #{tpu_custom_call.1} parent=1 // pred_region
      %s2362 = ssub.s32 16, 16
      %2363 = vsyncadd [#allocation3], %s2362
      %s2365 = sshll.u32 [#allocation2], 4
      %s2366 = int_to_ptr.vmem [resolvable:$true] %s2365
      %2368 = dma.vmem_to_hbm [thread:$0]  %s2366, 16, %s21, [#allocation3]
    $region89: #{tpu_custom_call.1} parent=1 // pred_fallthru
      _
    // Predicated region
    $region90: #{tpu_custom_call.1} parent=1 // pred_check
      _
    $region91: #{tpu_custom_call.1} parent=1 // pred_check_branch
      %2370 = sbr.rel (0) target = $region93
    $region92: #{tpu_custom_call.1} parent=1 // pred_region
      %2371 = dma.done [#allocation3], 16
    $region93: #{tpu_custom_call.1} parent=1 // pred_fallthru
      _
    %2372 = vsyncpa [#allocation3], 1

</llo_original>
